<compile_context>
chip_gen: v6e
topology: v6e:2x2x1
jax: 0.10.0
libtpu: 0.0.40
codegen_flags: <defaults>
</compile_context>

<pallas_src>
import jax
import jax.numpy as jnp
from jax import lax
from jax.experimental import pallas as pl
from jax.experimental.pallas import tpu as pltpu

_LANES = 128
_OFFSETS = tuple((dy, dx) for dy in range(3) for dx in range(3))


def _round_up(x, m):
    return ((x + m - 1) // m) * m


def _tiled_bytes(shape, itemsize=4):
    """Approximate VMEM footprint after (8, 128) tiling of the last two dims."""
    if len(shape) == 1:
        return _round_up(shape[0], _LANES) * itemsize
    lead = 1
    for d in shape[:-2]:
        lead *= d
    return lead * _round_up(shape[-2], 8) * _round_up(shape[-1], _LANES) * itemsize


def _build_kernel(H, W, in_ch, mid_ch, out_ch, pack1, pack2, kp1, kp2,
                  compute_dtype):
    """Specialize the fused conv3x3+BN+ReLU x2 kernel for static shapes."""

    def conv3x3(src_ref, w_ref, c_real, k_pad, pack):
        """SAME 3x3 conv of padded VMEM activation -> (H*W, n_pad) f32."""
        if pack:
            # Tiny channel count: pack the 9 taps' real channels contiguously
            # along K and run a single lane-dense MXU matmul (K = k_pad).
            pieces = [src_ref[dy:dy + H, dx:dx + W, :]
                      .reshape(H * W, c_real).astype(compute_dtype)
                      for dy, dx in _OFFSETS]
            tail = k_pad - 9 * c_real
            if tail:
                pieces.append(jnp.zeros((H * W, tail), compute_dtype))
            patch = jnp.concatenate(pieces, axis=-1)           # (H*W, k_pad)
            return jnp.dot(patch, w_ref[...],
                           preferred_element_type=jnp.float32)
        # Wide channels: nine accumulating micro-matmuls (K = stored C per
        # tap).  No im2col buffer is ever materialized.
        cpad = src_ref.shape[2]
        acc = None
        for k, (dy, dx) in enumerate(_OFFSETS):
            lhs = (src_ref[dy:dy + H, dx:dx + W, :]
                   .reshape(H * W, cpad).astype(compute_dtype))
            contrib = jnp.dot(lhs, w_ref[k * cpad:(k + 1) * cpad, :],
                              preferred_element_type=jnp.float32)
            acc = contrib if acc is None else acc + contrib
        return acc

    def zero_border(ref):
        """Zero only the 1-pixel halo ring (not the whole padded buffer)."""
        c = ref.shape[2]
        zrow = jnp.zeros((1, W + 2, c), jnp.float32)
        zcol = jnp.zeros((H, 1, c), jnp.float32)
        ref[0:1, :, :] = zrow
        ref[H + 1:H + 2, :, :] = zrow
        ref[1:H + 1, 0:1, :] = zcol
        ref[1:H + 1, W + 1:W + 2, :] = zcol

    def kernel(x_ref, w1_ref, b1_ref, w2_ref, b2_ref, o_ref,
               xpad_ref, mid_ref):
        # ---- stage 1: halo built entirely in VMEM -------------------------
        xin = x_ref[0].astype(jnp.float32)                     # (H, W, in_ch)
        if xpad_ref.shape[2] == in_ch:
            xpad_ref[1:H + 1, 1:W + 1, :] = xin
        else:
            # Lane-padded storage: write real channels and explicitly zero
            # the pad lanes (stale VMEM NaN/Inf would poison the matmul even
            # against zero weight rows).
            xpad_ref[1:H + 1, 1:W + 1, 0:in_ch] = xin
            xpad_ref[1:H + 1, 1:W + 1, in_ch:] = jnp.zeros(
                (H, W, xpad_ref.shape[2] - in_ch), jnp.float32)
        zero_border(xpad_ref)

        y1 = conv3x3(xpad_ref, w1_ref, in_ch, kp1, pack1)      # (H*W, MP)
        y1 = jnp.maximum(y1 + b1_ref[...], 0.0)                # BN folded

        # ---- stage 2: intermediate never leaves VMEM ----------------------
        m_store = mid_ref.shape[2]
        mid_ref[1:H + 1, 1:W + 1, :] = y1[:, :m_store].reshape(H, W, m_store)
        zero_border(mid_ref)

        y2 = conv3x3(mid_ref, w2_ref, mid_ch, kp2, pack2)      # (H*W, OP)
        y2 = jnp.maximum(y2 + b2_ref[...], 0.0)

        # Store exactly out_ch channels: no padded-channel HBM writeback and
        # no wrapper-side slice pass afterwards.
        o_ref[0] = y2[:, :out_ch].reshape(H, W, out_ch).astype(o_ref.dtype)

    return kernel


def _fold_bn_into_conv(w_hwio, b, gamma, beta, mean, var, eps):
    """Exact inference-BN fold: conv(x, w') + b' == BN(conv(x, w) + b)."""
    scale = gamma / jnp.sqrt(var + eps)
    return w_hwio * scale, b * scale + (beta - mean * scale)


def conv_block_nested_nhwc(x_nhwc, params, *, eps=1e-5,
                           compute_dtype=jnp.float32):
    """Fused UNet++ conv block.  Input/output NHWC (primary entry point)."""
    N, H, W, in_ch = x_nhwc.shape
    mid_ch = params["w1"].shape[-1]
    out_ch = params["w2"].shape[-1]

    mp = _round_up(mid_ch, _LANES)           # matmul output width, conv1
    op = _round_up(out_ch, _LANES)           # matmul output width, conv2

    pack1 = in_ch < _LANES                   # pack taps' real channels along K
    pack2 = mid_ch < _LANES
    cp = in_ch if pack1 else _round_up(in_ch, _LANES)     # stored channels
    mcp = mid_ch if pack2 else mp
    kp1 = _round_up(9 * in_ch, _LANES) if pack1 else 9 * cp
    kp2 = _round_up(9 * mid_ch, _LANES) if pack2 else 9 * mcp

    # Fold BN (eval semantics) into the convs; recomputed every call so
    # updated running stats are always honored.
    w1f, b1f = _fold_bn_into_conv(params["w1"], params["b1"], params["gamma1"],
                                  params["beta1"], params["mean1"],
                                  params["var1"], eps)
    w2f, b2f = _fold_bn_into_conv(params["w2"], params["b2"], params["gamma2"],
                                  params["beta2"], params["mean2"],
                                  params["var2"], eps)

    def _flatten_w(w, c_real, c_store, k_pad, n_real, n_pad, pack):
        # Row index must match the kernel's patch/K order:
        #   packed:   (dy*3+dx)*c_real + c   (rows >= 9*c_real are zero)
        #   unpacked: (dy*3+dx)*c_store + c  (channel-pad rows are zero)
        if pack:
            wm = w.reshape(9 * c_real, n_real)
            wm = jnp.pad(wm, ((0, k_pad - 9 * c_real), (0, n_pad - n_real)))
        else:
            wm = jnp.pad(w, ((0, 0), (0, 0), (0, c_store - c_real),
                             (0, n_pad - n_real))).reshape(k_pad, n_pad)
        return wm.astype(compute_dtype)

    w1m = _flatten_w(w1f, in_ch, cp, kp1, mid_ch, mp, pack1)
    w2m = _flatten_w(w2f, mid_ch, mcp, kp2, out_ch, op, pack2)
    b1v = jnp.pad(b1f, (0, mp - mid_ch)).reshape(1, mp).astype(jnp.float32)
    b2v = jnp.pad(b2f, (0, op - out_ch)).reshape(1, op).astype(jnp.float32)

    kernel = _build_kernel(H, W, in_ch, mid_ch, out_ch, pack1, pack2,
                           kp1, kp2, compute_dtype)

    # ---- VMEM budget: real tile-padded footprint vs. this chip's capacity --
    need = (_tiled_bytes((H + 2, W + 2, cp)) + _tiled_bytes((H + 2, W + 2, mcp))
            + 2 * (_tiled_bytes((1, H, W, in_ch)) + _tiled_bytes((1, H, W, out_ch))
                   + _tiled_bytes((kp1, mp)) + _tiled_bytes((kp2, op))
                   + _tiled_bytes((1, mp)) + _tiled_bytes((1, op)))
            # live-value allowance (packed patches / matmul accumulators)
            + _tiled_bytes((H * W, kp1)) + _tiled_bytes((H * W, kp2))
            + 2 * _tiled_bytes((H * W, mp)) + _tiled_bytes((H * W, op)))
    try:
        cap = int(getattr(pltpu.get_tpu_info(), "vmem_capacity_bytes",
                          64 * 2**20))
    except Exception:
        cap = 64 * 2**20                     # conservative (v7x-sized) fallback
    vmem_limit = max(32 * 2**20, (need * 5) // 4 + (4 * 2**20))
    vmem_limit = int(min(vmem_limit, cap - (8 * 2**20)))

    est_flops = 2 * N * H * W * (kp1 * mp + kp2 * op)
    est_bytes = int(4 * N * H * W * (in_ch + out_ch)
                    + w1m.size * w1m.dtype.itemsize
                    + w2m.size * w2m.dtype.itemsize
                    + 4 * (mp + op))

    out = pl.pallas_call(
        kernel,
        out_shape=jax.ShapeDtypeStruct((N, H, W, out_ch), x_nhwc.dtype),
        grid=(N,),
        in_specs=[
            pl.BlockSpec((1, H, W, in_ch), lambda n: (n, 0, 0, 0)),
            pl.BlockSpec((kp1, mp), lambda n: (0, 0)),
            pl.BlockSpec((1, mp), lambda n: (0, 0)),
            pl.BlockSpec((kp2, op), lambda n: (0, 0)),
            pl.BlockSpec((1, op), lambda n: (0, 0)),
        ],
        out_specs=pl.BlockSpec((1, H, W, out_ch), lambda n: (n, 0, 0, 0)),
        scratch_shapes=[
            pltpu.VMEM((H + 2, W + 2, cp), jnp.float32),
            pltpu.VMEM((H + 2, W + 2, mcp), jnp.float32),
        ],
        compiler_params=pltpu.CompilerParams(
            dimension_semantics=("parallel",),
            vmem_limit_bytes=vmem_limit),
        cost_estimate=pl.CostEstimate(
            flops=est_flops, transcendentals=0, bytes_accessed=est_bytes),
    )(x_nhwc, w1m, b1v, w2m, b2v)
    return out


def conv_block_nested_forward(x_nchw, params):
    """PyTorch NCHW convention at the boundary.  If the surrounding model is
    already channels-last, call conv_block_nested_nhwc directly and skip both
    HBM transpose passes."""
    x = jnp.transpose(x_nchw, (0, 2, 3, 1))          # NCHW -> NHWC
    y = conv_block_nested_nhwc(x, params)
    return jnp.transpose(y, (0, 3, 1, 2))            # NHWC -> NCHW


# ---------------- pure-JAX reference (for correctness check) ----------------
def _ref_conv_bn_relu(x_nhwc, w_hwio, b, gamma, beta, mean, var, eps=1e-5):
    y = lax.conv_general_dilated(
        x_nhwc, w_hwio, window_strides=(1, 1), padding="SAME",
        dimension_numbers=("NHWC", "HWIO", "NHWC"))
    y = y + b
    scale = gamma / jnp.sqrt(var + eps)
    y = y * scale + (beta - mean * scale)
    return jnp.maximum(y, 0.0)


def _ref_forward(x_nchw, params):
    x = jnp.transpose(x_nchw, (0, 2, 3, 1))
    y = _ref_conv_bn_relu(x, params["w1"], params["b1"], params["gamma1"],
                          params["beta1"], params["mean1"], params["var1"])
    y = _ref_conv_bn_relu(y, params["w2"], params["b2"], params["gamma2"],
                          params["beta2"], params["mean2"], params["var2"])
    return jnp.transpose(y, (0, 3, 1, 2))


if __name__ == "__main__":
    # Small shapes consistent with the module: N=2, in_ch=4, H=W=16.
    N, in_ch, mid_ch, out_ch, H, W = 2, 4, 8, 8, 16, 16

    key = jax.random.PRNGKey(0)
    ks = jax.random.split(key, 11)

    params = {
        # Conv weights in HWIO (= PyTorch OIHW weights, transposed).
        "w1": 0.1 * jax.random.normal(ks[0], (3, 3, in_ch, mid_ch), jnp.float32),
        "b1": 0.1 * jax.random.normal(ks[1], (mid_ch,), jnp.float32),
        "gamma1": 1.0 + 0.1 * jax.random.normal(ks[2], (mid_ch,), jnp.float32),
        "beta1": 0.1 * jax.random.normal(ks[3], (mid_ch,), jnp.float32),
        "mean1": 0.1 * jax.random.normal(ks[4], (mid_ch,), jnp.float32),
        "var1": 0.5 + jnp.abs(jax.random.normal(ks[5], (mid_ch,), jnp.float32)),

        "w2": 0.1 * jax.random.normal(ks[6], (3, 3, mid_ch, out_ch), jnp.float32),
        "b2": 0.1 * jax.random.normal(ks[7], (out_ch,), jnp.float32),
        "gamma2": 1.0 + 0.1 * jax.random.normal(ks[8], (out_ch,), jnp.float32),
        "beta2": 0.1 * jax.random.normal(ks[9], (out_ch,), jnp.float32),
        "mean2": 0.1 * jax.random.normal(ks[10], (out_ch,), jnp.float32),
        "var2": 0.5 + jnp.abs(jax.random.normal(
            jax.random.fold_in(key, 42), (out_ch,), jnp.float32)),
    }

    x = jax.random.normal(jax.random.fold_in(key, 7), (N, in_ch, H, W),
                          jnp.float32)  # NCHW, like the PyTorch module input

    out = conv_block_nested_forward(x, params)
    out = jax.block_until_ready(out)

    ref = jax.block_until_ready(_ref_forward(x, params))
    assert out.shape == (N, out_ch, H, W)
    assert jnp.allclose(out, ref, atol=1e-4, rtol=1e-4), (
        float(jnp.max(jnp.abs(out - ref))))

    print("KERNEL_OK")
</pallas_src>

<mosaic_0001>
module attributes {stable_mosaic.version = 11 : i64} {
  func.func @kernel(%arg0: i32, %arg1: memref<1x16x16x4xf32, #tpu.memory_space<vmem>>, %arg2: memref<128x128xf32, #tpu.memory_space<vmem>>, %arg3: memref<1x128xf32, #tpu.memory_space<vmem>>, %arg4: memref<128x128xf32, #tpu.memory_space<vmem>>, %arg5: memref<1x128xf32, #tpu.memory_space<vmem>>, %arg6: memref<1x16x16x8xf32, #tpu.memory_space<vmem>>, %arg7: memref<18x18x4xf32, #tpu.memory_space<vmem>>, %arg8: memref<18x18x8xf32, #tpu.memory_space<vmem>>) attributes {dimension_semantics = [#tpu.dimension_semantics<parallel>], iteration_bounds = array<i64: 2>, scalar_prefetch = 0 : i64, scratch_operands = 2 : i64, tpu.core_type = #tpu.core_type<tc>, window_params = [{transform_indices = @transform_0, window_bounds = array<i64: 1, 16, 16, 4>}, {pipeline_mode = #tpu.pipeline_mode<synchronous>, transform_indices = @transform_1, window_bounds = array<i64: 128, 128>}, {pipeline_mode = #tpu.pipeline_mode<synchronous>, transform_indices = @transform_2, window_bounds = array<i64: 1, 128>}, {pipeline_mode = #tpu.pipeline_mode<synchronous>, transform_indices = @transform_3, window_bounds = array<i64: 128, 128>}, {pipeline_mode = #tpu.pipeline_mode<synchronous>, transform_indices = @transform_4, window_bounds = array<i64: 1, 128>}, {transform_indices = @transform_5, window_bounds = array<i64: 1, 16, 16, 8>}]} {
    %c0 = arith.constant 0 : index
    %c0_0 = arith.constant 0 : index
    %c0_1 = arith.constant 0 : index
    %c0_2 = arith.constant 0 : index
    %0 = vector.load %arg1[%c0, %c0_0, %c0_1, %c0_2] : memref<1x16x16x4xf32, #tpu.memory_space<vmem>>, vector<1x16x16x4xf32>
    %1 = vector.shape_cast %0 : vector<1x16x16x4xf32> to vector<16x16x4xf32>
    %c1 = arith.constant 1 : index
    %c1_3 = arith.constant 1 : index
    %c0_4 = arith.constant 0 : index
    %2 = vector.load %arg7[%c1, %c1_3, %c0_4] : memref<18x18x4xf32, #tpu.memory_space<vmem>>, vector<16x16x4xf32>
    tpu.vector_store %arg7[%c1, %c1_3, %c0_4], %1 {strides = array<i32>} : memref<18x18x4xf32, #tpu.memory_space<vmem>>, vector<16x16x4xf32>,
    %cst = arith.constant 0.000000e+00 : f32
    %3 = vector.broadcast %cst : f32 to vector<1x18x4xf32>
    %cst_5 = arith.constant 0.000000e+00 : f32
    %4 = vector.broadcast %cst_5 : f32 to vector<16x1x4xf32>
    %c0_6 = arith.constant 0 : index
    %c0_7 = arith.constant 0 : index
    %c0_8 = arith.constant 0 : index
    %5 = vector.load %arg7[%c0_6, %c0_7, %c0_8] : memref<18x18x4xf32, #tpu.memory_space<vmem>>, vector<1x18x4xf32>
    tpu.vector_store %arg7[%c0_6, %c0_7, %c0_8], %3 {strides = array<i32>} : memref<18x18x4xf32, #tpu.memory_space<vmem>>, vector<1x18x4xf32>,
    %c17 = arith.constant 17 : index
    %c0_9 = arith.constant 0 : index
    %c0_10 = arith.constant 0 : index
    %6 = vector.load %arg7[%c17, %c0_9, %c0_10] : memref<18x18x4xf32, #tpu.memory_space<vmem>>, vector<1x18x4xf32>
    tpu.vector_store %arg7[%c17, %c0_9, %c0_10], %3 {strides = array<i32>} : memref<18x18x4xf32, #tpu.memory_space<vmem>>, vector<1x18x4xf32>,
    %c1_11 = arith.constant 1 : index
    %c0_12 = arith.constant 0 : index
    %c0_13 = arith.constant 0 : index
    %7 = vector.load %arg7[%c1_11, %c0_12, %c0_13] : memref<18x18x4xf32, #tpu.memory_space<vmem>>, vector<16x1x4xf32>
    tpu.vector_store %arg7[%c1_11, %c0_12, %c0_13], %4 {strides = array<i32>} : memref<18x18x4xf32, #tpu.memory_space<vmem>>, vector<16x1x4xf32>,
    %c1_14 = arith.constant 1 : index
    %c17_15 = arith.constant 17 : index
    %c0_16 = arith.constant 0 : index
    %8 = vector.load %arg7[%c1_14, %c17_15, %c0_16] : memref<18x18x4xf32, #tpu.memory_space<vmem>>, vector<16x1x4xf32>
    tpu.vector_store %arg7[%c1_14, %c17_15, %c0_16], %4 {strides = array<i32>} : memref<18x18x4xf32, #tpu.memory_space<vmem>>, vector<16x1x4xf32>,
    %c0_17 = arith.constant 0 : index
    %c0_18 = arith.constant 0 : index
    %c0_19 = arith.constant 0 : index
    %9 = vector.load %arg7[%c0_17, %c0_18, %c0_19] : memref<18x18x4xf32, #tpu.memory_space<vmem>>, vector<16x16x4xf32>
    %10 = vector.shape_cast %9 : vector<16x16x4xf32> to vector<256x4xf32>
    %c0_20 = arith.constant 0 : index
    %c1_21 = arith.constant 1 : index
    %c0_22 = arith.constant 0 : index
    %11 = vector.load %arg7[%c0_20, %c1_21, %c0_22] : memref<18x18x4xf32, #tpu.memory_space<vmem>>, vector<16x16x4xf32>
    %12 = vector.shape_cast %11 : vector<16x16x4xf32> to vector<256x4xf32>
    %c0_23 = arith.constant 0 : index
    %c2 = arith.constant 2 : index
    %c0_24 = arith.constant 0 : index
    %13 = vector.load %arg7[%c0_23, %c2, %c0_24] : memref<18x18x4xf32, #tpu.memory_space<vmem>>, vector<16x16x4xf32>
    %14 = vector.shape_cast %13 : vector<16x16x4xf32> to vector<256x4xf32>
    %c1_25 = arith.constant 1 : index
    %c0_26 = arith.constant 0 : index
    %c0_27 = arith.constant 0 : index
    %15 = vector.load %arg7[%c1_25, %c0_26, %c0_27] : memref<18x18x4xf32, #tpu.memory_space<vmem>>, vector<16x16x4xf32>
    %16 = vector.shape_cast %15 : vector<16x16x4xf32> to vector<256x4xf32>
    %c1_28 = arith.constant 1 : index
    %c1_29 = arith.constant 1 : index
    %c0_30 = arith.constant 0 : index
    %17 = vector.load %arg7[%c1_28, %c1_29, %c0_30] : memref<18x18x4xf32, #tpu.memory_space<vmem>>, vector<16x16x4xf32>
    %18 = vector.shape_cast %17 : vector<16x16x4xf32> to vector<256x4xf32>
    %c1_31 = arith.constant 1 : index
    %c2_32 = arith.constant 2 : index
    %c0_33 = arith.constant 0 : index
    %19 = vector.load %arg7[%c1_31, %c2_32, %c0_33] : memref<18x18x4xf32, #tpu.memory_space<vmem>>, vector<16x16x4xf32>
    %20 = vector.shape_cast %19 : vector<16x16x4xf32> to vector<256x4xf32>
    %c2_34 = arith.constant 2 : index
    %c0_35 = arith.constant 0 : index
    %c0_36 = arith.constant 0 : index
    %21 = vector.load %arg7[%c2_34, %c0_35, %c0_36] : memref<18x18x4xf32, #tpu.memory_space<vmem>>, vector<16x16x4xf32>
    %22 = vector.shape_cast %21 : vector<16x16x4xf32> to vector<256x4xf32>
    %c2_37 = arith.constant 2 : index
    %c1_38 = arith.constant 1 : index
    %c0_39 = arith.constant 0 : index
    %23 = vector.load %arg7[%c2_37, %c1_38, %c0_39] : memref<18x18x4xf32, #tpu.memory_space<vmem>>, vector<16x16x4xf32>
    %24 = vector.shape_cast %23 : vector<16x16x4xf32> to vector<256x4xf32>
    %c2_40 = arith.constant 2 : index
    %c2_41 = arith.constant 2 : index
    %c0_42 = arith.constant 0 : index
    %25 = vector.load %arg7[%c2_40, %c2_41, %c0_42] : memref<18x18x4xf32, #tpu.memory_space<vmem>>, vector<16x16x4xf32>
    %26 = vector.shape_cast %25 : vector<16x16x4xf32> to vector<256x4xf32>
    %cst_43 = arith.constant 0.000000e+00 : f32
    %27 = vector.broadcast %cst_43 : f32 to vector<256x92xf32>
    %28 = tpu.concatenate %10, %12, %14, %16, %18, %20, %22, %24, %26, %27 in 1 : vector<256x4xf32>, vector<256x4xf32>, vector<256x4xf32>, vector<256x4xf32>, vector<256x4xf32>, vector<256x4xf32>, vector<256x4xf32>, vector<256x4xf32>, vector<256x4xf32>, vector<256x92xf32> -> vector<256x128xf32>
    %c0_44 = arith.constant 0 : index
    %c0_45 = arith.constant 0 : index
    %29 = vector.load %arg2[%c0_44, %c0_45] : memref<128x128xf32, #tpu.memory_space<vmem>>, vector<128x128xf32>
    %cst_46 = arith.constant dense<0.000000e+00> : vector<256x128xf32>
    %30 = tpu.matmul %28, %29, %cst_46 {dimension_numbers = #tpu.dot_dimension_numbers<[1], [0], [0], [1], [0, 0, 1, 1], [], []>} : vector<256x128xf32>, vector<128x128xf32>, vector<256x128xf32> -> vector<256x128xf32>
    %c0_47 = arith.constant 0 : index
    %c0_48 = arith.constant 0 : index
    %31 = vector.load %arg3[%c0_47, %c0_48] : memref<1x128xf32, #tpu.memory_space<vmem>>, vector<1x128xf32>
    %32 = vector.broadcast %31 : vector<1x128xf32> to vector<256x128xf32>
    %33 = arith.addf %30, %32 : vector<256x128xf32>
    %cst_49 = arith.constant 0.000000e+00 : f32
    %34 = vector.broadcast %cst_49 : f32 to vector<256x128xf32>
    %35 = arith.maximumf %33, %34 : vector<256x128xf32>
    %36 = vector.extract_strided_slice %35 {offsets = [0, 0], sizes = [256, 8], strides = [1, 1]} : vector<256x128xf32> to vector<256x8xf32>
    %37 = vector.shape_cast %36 : vector<256x8xf32> to vector<16x16x8xf32>
    %c1_50 = arith.constant 1 : index
    %c1_51 = arith.constant 1 : index
    %c0_52 = arith.constant 0 : index
    %38 = vector.load %arg8[%c1_50, %c1_51, %c0_52] : memref<18x18x8xf32, #tpu.memory_space<vmem>>, vector<16x16x8xf32>
    tpu.vector_store %arg8[%c1_50, %c1_51, %c0_52], %37 {strides = array<i32>} : memref<18x18x8xf32, #tpu.memory_space<vmem>>, vector<16x16x8xf32>,
    %cst_53 = arith.constant 0.000000e+00 : f32
    %39 = vector.broadcast %cst_53 : f32 to vector<1x18x8xf32>
    %cst_54 = arith.constant 0.000000e+00 : f32
    %40 = vector.broadcast %cst_54 : f32 to vector<16x1x8xf32>
    %c0_55 = arith.constant 0 : index
    %c0_56 = arith.constant 0 : index
    %c0_57 = arith.constant 0 : index
    %41 = vector.load %arg8[%c0_55, %c0_56, %c0_57] : memref<18x18x8xf32, #tpu.memory_space<vmem>>, vector<1x18x8xf32>
    tpu.vector_store %arg8[%c0_55, %c0_56, %c0_57], %39 {strides = array<i32>} : memref<18x18x8xf32, #tpu.memory_space<vmem>>, vector<1x18x8xf32>,
    %c17_58 = arith.constant 17 : index
    %c0_59 = arith.constant 0 : index
    %c0_60 = arith.constant 0 : index
    %42 = vector.load %arg8[%c17_58, %c0_59, %c0_60] : memref<18x18x8xf32, #tpu.memory_space<vmem>>, vector<1x18x8xf32>
    tpu.vector_store %arg8[%c17_58, %c0_59, %c0_60], %39 {strides = array<i32>} : memref<18x18x8xf32, #tpu.memory_space<vmem>>, vector<1x18x8xf32>,
    %c1_61 = arith.constant 1 : index
    %c0_62 = arith.constant 0 : index
    %c0_63 = arith.constant 0 : index
    %43 = vector.load %arg8[%c1_61, %c0_62, %c0_63] : memref<18x18x8xf32, #tpu.memory_space<vmem>>, vector<16x1x8xf32>
    tpu.vector_store %arg8[%c1_61, %c0_62, %c0_63], %40 {strides = array<i32>} : memref<18x18x8xf32, #tpu.memory_space<vmem>>, vector<16x1x8xf32>,
    %c1_64 = arith.constant 1 : index
    %c17_65 = arith.constant 17 : index
    %c0_66 = arith.constant 0 : index
    %44 = vector.load %arg8[%c1_64, %c17_65, %c0_66] : memref<18x18x8xf32, #tpu.memory_space<vmem>>, vector<16x1x8xf32>
    tpu.vector_store %arg8[%c1_64, %c17_65, %c0_66], %40 {strides = array<i32>} : memref<18x18x8xf32, #tpu.memory_space<vmem>>, vector<16x1x8xf32>,
    %c0_67 = arith.constant 0 : index
    %c0_68 = arith.constant 0 : index
    %c0_69 = arith.constant 0 : index
    %45 = vector.load %arg8[%c0_67, %c0_68, %c0_69] : memref<18x18x8xf32, #tpu.memory_space<vmem>>, vector<16x16x8xf32>
    %46 = vector.shape_cast %45 : vector<16x16x8xf32> to vector<256x8xf32>
    %c0_70 = arith.constant 0 : index
    %c1_71 = arith.constant 1 : index
    %c0_72 = arith.constant 0 : index
    %47 = vector.load %arg8[%c0_70, %c1_71, %c0_72] : memref<18x18x8xf32, #tpu.memory_space<vmem>>, vector<16x16x8xf32>
    %48 = vector.shape_cast %47 : vector<16x16x8xf32> to vector<256x8xf32>
    %c0_73 = arith.constant 0 : index
    %c2_74 = arith.constant 2 : index
    %c0_75 = arith.constant 0 : index
    %49 = vector.load %arg8[%c0_73, %c2_74, %c0_75] : memref<18x18x8xf32, #tpu.memory_space<vmem>>, vector<16x16x8xf32>
    %50 = vector.shape_cast %49 : vector<16x16x8xf32> to vector<256x8xf32>
    %c1_76 = arith.constant 1 : index
    %c0_77 = arith.constant 0 : index
    %c0_78 = arith.constant 0 : index
    %51 = vector.load %arg8[%c1_76, %c0_77, %c0_78] : memref<18x18x8xf32, #tpu.memory_space<vmem>>, vector<16x16x8xf32>
    %52 = vector.shape_cast %51 : vector<16x16x8xf32> to vector<256x8xf32>
    %c1_79 = arith.constant 1 : index
    %c1_80 = arith.constant 1 : index
    %c0_81 = arith.constant 0 : index
    %53 = vector.load %arg8[%c1_79, %c1_80, %c0_81] : memref<18x18x8xf32, #tpu.memory_space<vmem>>, vector<16x16x8xf32>
    %54 = vector.shape_cast %53 : vector<16x16x8xf32> to vector<256x8xf32>
    %c1_82 = arith.constant 1 : index
    %c2_83 = arith.constant 2 : index
    %c0_84 = arith.constant 0 : index
    %55 = vector.load %arg8[%c1_82, %c2_83, %c0_84] : memref<18x18x8xf32, #tpu.memory_space<vmem>>, vector<16x16x8xf32>
    %56 = vector.shape_cast %55 : vector<16x16x8xf32> to vector<256x8xf32>
    %c2_85 = arith.constant 2 : index
    %c0_86 = arith.constant 0 : index
    %c0_87 = arith.constant 0 : index
    %57 = vector.load %arg8[%c2_85, %c0_86, %c0_87] : memref<18x18x8xf32, #tpu.memory_space<vmem>>, vector<16x16x8xf32>
    %58 = vector.shape_cast %57 : vector<16x16x8xf32> to vector<256x8xf32>
    %c2_88 = arith.constant 2 : index
    %c1_89 = arith.constant 1 : index
    %c0_90 = arith.constant 0 : index
    %59 = vector.load %arg8[%c2_88, %c1_89, %c0_90] : memref<18x18x8xf32, #tpu.memory_space<vmem>>, vector<16x16x8xf32>
    %60 = vector.shape_cast %59 : vector<16x16x8xf32> to vector<256x8xf32>
    %c2_91 = arith.constant 2 : index
    %c2_92 = arith.constant 2 : index
    %c0_93 = arith.constant 0 : index
    %61 = vector.load %arg8[%c2_91, %c2_92, %c0_93] : memref<18x18x8xf32, #tpu.memory_space<vmem>>, vector<16x16x8xf32>
    %62 = vector.shape_cast %61 : vector<16x16x8xf32> to vector<256x8xf32>
    %cst_94 = arith.constant 0.000000e+00 : f32
    %63 = vector.broadcast %cst_94 : f32 to vector<256x56xf32>
    %64 = tpu.concatenate %46, %48, %50, %52, %54, %56, %58, %60, %62, %63 in 1 : vector<256x8xf32>, vector<256x8xf32>, vector<256x8xf32>, vector<256x8xf32>, vector<256x8xf32>, vector<256x8xf32>, vector<256x8xf32>, vector<256x8xf32>, vector<256x8xf32>, vector<256x56xf32> -> vector<256x128xf32>
    %c0_95 = arith.constant 0 : index
    %c0_96 = arith.constant 0 : index
    %65 = vector.load %arg4[%c0_95, %c0_96] : memref<128x128xf32, #tpu.memory_space<vmem>>, vector<128x128xf32>
    %cst_97 = arith.constant dense<0.000000e+00> : vector<256x128xf32>
    %66 = tpu.matmul %64, %65, %cst_97 {dimension_numbers = #tpu.dot_dimension_numbers<[1], [0], [0], [1], [0, 0, 1, 1], [], []>} : vector<256x128xf32>, vector<128x128xf32>, vector<256x128xf32> -> vector<256x128xf32>
    %c0_98 = arith.constant 0 : index
    %c0_99 = arith.constant 0 : index
    %67 = vector.load %arg5[%c0_98, %c0_99] : memref<1x128xf32, #tpu.memory_space<vmem>>, vector<1x128xf32>
    %68 = vector.broadcast %67 : vector<1x128xf32> to vector<256x128xf32>
    %69 = arith.addf %66, %68 : vector<256x128xf32>
    %cst_100 = arith.constant 0.000000e+00 : f32
    %70 = vector.broadcast %cst_100 : f32 to vector<256x128xf32>
    %71 = arith.maximumf %69, %70 : vector<256x128xf32>
    %72 = vector.extract_strided_slice %71 {offsets = [0, 0], sizes = [256, 8], strides = [1, 1]} : vector<256x128xf32> to vector<256x8xf32>
    %73 = vector.shape_cast %72 : vector<256x8xf32> to vector<16x16x8xf32>
    %c0_101 = arith.constant 0 : index
    %c0_102 = arith.constant 0 : index
    %c0_103 = arith.constant 0 : index
    %c0_104 = arith.constant 0 : index
    %74 = vector.load %arg6[%c0_101, %c0_102, %c0_103, %c0_104] : memref<1x16x16x8xf32, #tpu.memory_space<vmem>>, vector<1x16x16x8xf32>
    %75 = vector.shape_cast %74 : vector<1x16x16x8xf32> to vector<16x16x8xf32>
    %76 = vector.shape_cast %73 : vector<16x16x8xf32> to vector<1x16x16x8xf32>
    tpu.vector_store %arg6[%c0_101, %c0_102, %c0_103, %c0_104], %76 {strides = array<i32>} : memref<1x16x16x8xf32, #tpu.memory_space<vmem>>, vector<1x16x16x8xf32>,
    return
  }
  func.func @transform_0(%arg0: i32) -> (i32, i32, i32, i32) {
    %c0_i32 = arith.constant 0 : i32
    %c0_i32_0 = arith.constant 0 : i32
    %c0_i32_1 = arith.constant 0 : i32
    %c0_i32_2 = arith.constant 0 : i32
    return %arg0, %c0_i32, %c0_i32_0, %c0_i32_1 : i32, i32, i32, i32
  }
  func.func @transform_1(%arg0: i32) -> (i32, i32) {
    %c0_i32 = arith.constant 0 : i32
    %c0_i32_0 = arith.constant 0 : i32
    %c0_i32_1 = arith.constant 0 : i32
    return %c0_i32, %c0_i32_0 : i32, i32
  }
  func.func @transform_2(%arg0: i32) -> (i32, i32) {
    %c0_i32 = arith.constant 0 : i32
    %c0_i32_0 = arith.constant 0 : i32
    %c0_i32_1 = arith.constant 0 : i32
    return %c0_i32, %c0_i32_0 : i32, i32
  }
  func.func @transform_3(%arg0: i32) -> (i32, i32) {
    %c0_i32 = arith.constant 0 : i32
    %c0_i32_0 = arith.constant 0 : i32
    %c0_i32_1 = arith.constant 0 : i32
    return %c0_i32, %c0_i32_0 : i32, i32
  }
  func.func @transform_4(%arg0: i32) -> (i32, i32) {
    %c0_i32 = arith.constant 0 : i32
    %c0_i32_0 = arith.constant 0 : i32
    %c0_i32_1 = arith.constant 0 : i32
    return %c0_i32, %c0_i32_0 : i32, i32
  }
  func.func @transform_5(%arg0: i32) -> (i32, i32, i32, i32) {
    %c0_i32 = arith.constant 0 : i32
    %c0_i32_0 = arith.constant 0 : i32
    %c0_i32_1 = arith.constant 0 : i32
    %c0_i32_2 = arith.constant 0 : i32
    return %arg0, %c0_i32, %c0_i32_0, %c0_i32_1 : i32, i32, i32, i32
  }
}

</mosaic_0001>

<llo_original>
// kernel: tpu_custom_call.1
$region0: #{tpu_custom_call.1}
  #allocation0 [shape = 'u32[]', space=smem, size = 0x4, offset = 0x4, fixed_abs, tag = 'smem constant byte address 0x4 - core index']
  #allocation1 [shape = 'u32[144,128]{1,0:T(1,128)}', space=vmem, size = 0x12000, scoped, tag = 'internal scratch']
  #allocation2 [shape = 'f32[18,18,4]{2,1,0:T(8,128)}', space=vmem, size = 0x36000, scoped, tag = 'scratch operand']
  #allocation3 [shape = 'f32[18,18,8]{2,1,0:T(8,128)}', space=vmem, size = 0x36000, scoped, tag = 'scratch operand']
  %s0 = inlined_call_operand.vmem [shape: f32[2,16,16,4], index: 0, kind: input, shape index: {}]
  %s1 = inlined_call_operand.vmem [shape: f32[128,128], index: 1, kind: input, shape index: {}]
  %s2 = inlined_call_operand.vmem [shape: f32[1,128], index: 2, kind: input, shape index: {}]
  %s3 = inlined_call_operand.vmem [shape: f32[128,128], index: 3, kind: input, shape index: {}]
  %s4 = inlined_call_operand.vmem [shape: f32[1,128], index: 4, kind: input, shape index: {}]
  %s5 = inlined_call_operand.vmem [shape: f32[2,16,16,8], index: 5, kind: output, shape index: {}]
  %s6 = sld [smem:[#allocation0]]
  $region53: #{tpu_custom_call.1} parent=0
    _
  %s8 = ssub.s32 1, %s6
  %s9 = scalar_select 0, %s8, %s6
  loop: start=0, step=1, limit=4
  $region2: #{tpu_custom_call.1} parent=0 // loop_pre_header
    _
  $region3: #{tpu_custom_call.1} parent=0 // loop_header
    %s11 = sphi 0, %s15
    %p12 = scmp.ge.s32.totalorder %s11, 4
    %s21 = sphi 0, %s23
    %s24 = sphi 0, %s21
    %s25 = sphi 0, %s24
    %s41 = sphi 0, %s25
    %s45 = sphi 0, %s45
    %s47 = sphi 0, %s45
    %s48 = sphi 0, %s47
    %s62 = sphi 0, %s48
    %s66 = sphi 0, %s66
    %s68 = sphi 0, %s66
    %s69 = sphi 0, %s68
    %s83 = sphi 0, %s69
    %s87 = sphi 0, %s87
    %s89 = sphi 0, %s87
    %s90 = sphi 0, %s89
    %s104 = sphi 0, %s90
    %s108 = sphi 0, %s108
    %s110 = sphi 0, %s108
    %s111 = sphi 0, %s110
    %s125 = sphi 0, %s111
    %s131 = sphi 0, %s133
    %s134 = sphi 0, %s131
    %s135 = sphi 0, %s134
    %s151 = sphi 0, %s135
  $region4: #{tpu_custom_call.1} parent=0 // loop_header_branch
    %14 = sbr.rel (%p12) target = $region8
  $region5: #{tpu_custom_call.1} parent=0 // loop_body
    %s16 = ssub.s32 %s11, 1
    %s17 = ssub.s32 %s11, 2
    %s18 = sadd.s32 %s11, 1
    %s19 = ssub.s32 %s11, %s18
    %p20 = scmp.eq.s32.totalorder %s19, 0
    %s22 = sadd.s32 %s21, 1
    %s23 = scalar_select %p20, %s21, %s22
    %p26 = pneg %p20
    %p27 = scmp.eq.s32.totalorder %s11, 1
    %p28 = por %p26, %p27
    %p29 = scmp.ne.s32.totalorder %s21, %s24
    %p30 = scmp.eq.s32.totalorder %s11, 0
    %p31 = por %p29, %p30
    %p32 = scmp.ne.s32.totalorder %s21, %s24
    %p33 = scmp.eq.s32.totalorder %s16, 1
    %p34 = por %p32, %p33
    %p35 = scmp.ne.s32.totalorder %s24, %s25
    %p36 = scmp.eq.s32.totalorder %s16, 0
    %p37 = por %p35, %p36
    %p38 = scmp.ne.s32.totalorder %s24, %s25
    %p39 = scmp.eq.s32.totalorder %s17, 1
    %p40 = por %p38, %p39
    %p42 = scmp.ne.s32.totalorder %s25, %s41
    %p43 = scmp.eq.s32.totalorder %s17, 0
    %p44 = por %p42, %p43
    %s46 = sadd.s32 %s45, 1
    %p49 = scmp.eq.s32.totalorder %s11, 1
    %p50 = scmp.ne.s32.totalorder %s45, %s47
    %p51 = scmp.eq.s32.totalorder %s11, 0
    %p52 = por %p50, %p51
    %p53 = scmp.ne.s32.totalorder %s45, %s47
    %p54 = scmp.eq.s32.totalorder %s16, 1
    %p55 = por %p53, %p54
    %p56 = scmp.ne.s32.totalorder %s47, %s48
    %p57 = scmp.eq.s32.totalorder %s16, 0
    %p58 = por %p56, %p57
    %p59 = scmp.ne.s32.totalorder %s47, %s48
    %p60 = scmp.eq.s32.totalorder %s17, 1
    %p61 = por %p59, %p60
    %p63 = scmp.ne.s32.totalorder %s48, %s62
    %p64 = scmp.eq.s32.totalorder %s17, 0
    %p65 = por %p63, %p64
    %s67 = sadd.s32 %s66, 1
    %p70 = scmp.eq.s32.totalorder %s11, 1
    %p71 = scmp.ne.s32.totalorder %s66, %s68
    %p72 = scmp.eq.s32.totalorder %s11, 0
    %p73 = por %p71, %p72
    %p74 = scmp.ne.s32.totalorder %s66, %s68
    %p75 = scmp.eq.s32.totalorder %s16, 1
    %p76 = por %p74, %p75
    %p77 = scmp.ne.s32.totalorder %s68, %s69
    %p78 = scmp.eq.s32.totalorder %s16, 0
    %p79 = por %p77, %p78
    %p80 = scmp.ne.s32.totalorder %s68, %s69
    %p81 = scmp.eq.s32.totalorder %s17, 1
    %p82 = por %p80, %p81
    %p84 = scmp.ne.s32.totalorder %s69, %s83
    %p85 = scmp.eq.s32.totalorder %s17, 0
    %p86 = por %p84, %p85
    %s88 = sadd.s32 %s87, 1
    %p91 = scmp.eq.s32.totalorder %s11, 1
    %p92 = scmp.ne.s32.totalorder %s87, %s89
    %p93 = scmp.eq.s32.totalorder %s11, 0
    %p94 = por %p92, %p93
    %p95 = scmp.ne.s32.totalorder %s87, %s89
    %p96 = scmp.eq.s32.totalorder %s16, 1
    %p97 = por %p95, %p96
    %p98 = scmp.ne.s32.totalorder %s89, %s90
    %p99 = scmp.eq.s32.totalorder %s16, 0
    %p100 = por %p98, %p99
    %p101 = scmp.ne.s32.totalorder %s89, %s90
    %p102 = scmp.eq.s32.totalorder %s17, 1
    %p103 = por %p101, %p102
    %p105 = scmp.ne.s32.totalorder %s90, %s104
    %p106 = scmp.eq.s32.totalorder %s17, 0
    %p107 = por %p105, %p106
    %s109 = sadd.s32 %s108, 1
    %p112 = scmp.eq.s32.totalorder %s11, 1
    %p113 = scmp.ne.s32.totalorder %s108, %s110
    %p114 = scmp.eq.s32.totalorder %s11, 0
    %p115 = por %p113, %p114
    %p116 = scmp.ne.s32.totalorder %s108, %s110
    %p117 = scmp.eq.s32.totalorder %s16, 1
    %p118 = por %p116, %p117
    %p119 = scmp.ne.s32.totalorder %s110, %s111
    %p120 = scmp.eq.s32.totalorder %s16, 0
    %p121 = por %p119, %p120
    %p122 = scmp.ne.s32.totalorder %s110, %s111
    %p123 = scmp.eq.s32.totalorder %s17, 1
    %p124 = por %p122, %p123
    %p126 = scmp.ne.s32.totalorder %s111, %s125
    %p127 = scmp.eq.s32.totalorder %s17, 0
    %p128 = por %p126, %p127
    %s129 = ssub.s32 %s11, %s18
    %p130 = scmp.eq.s32.totalorder %s129, 0
    %s132 = sadd.s32 %s131, 1
    %s133 = scalar_select %p130, %s131, %s132
    %p136 = pneg %p130
    %p137 = scmp.eq.s32.totalorder %s11, 1
    %p138 = por %p136, %p137
    %p139 = scmp.ne.s32.totalorder %s131, %s134
    %p140 = scmp.eq.s32.totalorder %s11, 0
    %p141 = por %p139, %p140
    %p142 = scmp.ne.s32.totalorder %s131, %s134
    %p143 = scmp.eq.s32.totalorder %s16, 1
    %p144 = por %p142, %p143
    %p145 = scmp.ne.s32.totalorder %s134, %s135
    %p146 = scmp.eq.s32.totalorder %s16, 0
    %p147 = por %p145, %p146
    %p148 = scmp.ne.s32.totalorder %s134, %s135
    %p149 = scmp.eq.s32.totalorder %s17, 1
    %p150 = por %p148, %p149
    %p152 = scmp.ne.s32.totalorder %s135, %s151
    %p153 = scmp.eq.s32.totalorder %s17, 0
    %p154 = por %p152, %p153
    %p155 = scmp.le.s32.totalorder 1, %s11
    %p156 = scmp.lt.s32.totalorder %s11, 3
    %p157 = pnand %p155, %p156
    %p158 = pneg %p157
    // Predicated region
    $region9: #{tpu_custom_call.1} parent=5 // pred_check
      _
    $region10: #{tpu_custom_call.1} parent=5 // pred_check_branch
      %160 = sbr.rel (%p157) target = $region12
    $region11: #{tpu_custom_call.1} parent=5 // pred_region
      %s161 = ssub.s32 %s11, 1
      // Predicated region
      $region13: #{tpu_custom_call.1} parent=11 // pred_check
        %p162 = pneg %p58
      $region14: #{tpu_custom_call.1} parent=11 // pred_check_branch
        %164 = sbr.rel (%p162) target = $region16
      $region15: #{tpu_custom_call.1} parent=11 // pred_region
        _
      $region16: #{tpu_custom_call.1} parent=11 // pred_fallthru
        _
      // Predicated region
      $region17: #{tpu_custom_call.1} parent=11 // pred_check
        %p165 = pneg %p79
      $region18: #{tpu_custom_call.1} parent=11 // pred_check_branch
        %167 = sbr.rel (%p165) target = $region20
      $region19: #{tpu_custom_call.1} parent=11 // pred_region
        _
      $region20: #{tpu_custom_call.1} parent=11 // pred_fallthru
        _
      // Predicated region
      $region21: #{tpu_custom_call.1} parent=11 // pred_check
        %p168 = pneg %p100
      $region22: #{tpu_custom_call.1} parent=11 // pred_check_branch
        %170 = sbr.rel (%p168) target = $region24
      $region23: #{tpu_custom_call.1} parent=11 // pred_region
        _
      $region24: #{tpu_custom_call.1} parent=11 // pred_fallthru
        _
      // Predicated region
      $region25: #{tpu_custom_call.1} parent=11 // pred_check
        %p171 = pneg %p121
      $region26: #{tpu_custom_call.1} parent=11 // pred_check_branch
        %173 = sbr.rel (%p171) target = $region28
      $region27: #{tpu_custom_call.1} parent=11 // pred_region
        _
      $region28: #{tpu_custom_call.1} parent=11 // pred_fallthru
        _
    $region12: #{tpu_custom_call.1} parent=5 // pred_fallthru
      _
    %p174 = scmp.lt.s32.totalorder %s11, 2
    // Predicated region
    $region29: #{tpu_custom_call.1} parent=5 // pred_check
      %p175 = pneg %p174
    $region30: #{tpu_custom_call.1} parent=5 // pred_check_branch
      %177 = sbr.rel (%p175) target = $region32
    $region31: #{tpu_custom_call.1} parent=5 // pred_region
      // Predicated region
      $region33: #{tpu_custom_call.1} parent=31 // pred_check
        %p178 = pneg %p31
      $region34: #{tpu_custom_call.1} parent=31 // pred_check_branch
        %180 = sbr.rel (%p178) target = $region36
      $region35: #{tpu_custom_call.1} parent=31 // pred_region
        %p181 = scmp.lt.s32.totalorder %s11, 1
        %s182 = scalar_select %p181, %s11, 1
        %s183 = smul.addr %s182, 32
        %s184 = smul.addr %s183, 8
        %s185 = scalar_lea.vmem %s0, %s184
      $region36: #{tpu_custom_call.1} parent=31 // pred_fallthru
        _
    $region32: #{tpu_custom_call.1} parent=5 // pred_fallthru
      _
    %p186 = scmp.le.s32.totalorder 1, %s11
    %p187 = scmp.lt.s32.totalorder %s11, 3
    %p188 = pnand %p186, %p187
    %p189 = pneg %p188
    // Predicated region
    $region37: #{tpu_custom_call.1} parent=5 // pred_check
      _
    $region38: #{tpu_custom_call.1} parent=5 // pred_check_branch
      %191 = sbr.rel (%p188) target = $region40
    $region39: #{tpu_custom_call.1} parent=5 // pred_region
      %s192 = ssub.s32 %s11, 1
      %p193 = scmp.lt.s32.totalorder %s16, 1
      %s194 = scalar_select %p193, %s16, 1
      %s195 = smul.addr %s194, 32
      %s196 = smul.addr %s195, 8
      %s197 = scalar_lea.vmem %s0, %s196
      %p198 = pneg %p37
      %p199 = pneg %p34
      %p200 = pneg %p58
      %p201 = pneg %p55
      %p202 = pneg %p79
      %p203 = pneg %p76
      %p204 = pneg %p100
      %p205 = pneg %p97
      %p206 = pneg %p121
      %p207 = pneg %p118
      %p208 = pneg %p147
      %p209 = pneg %p144
      %p210 = scmp.lt.s32.totalorder %s16, 1
      %s211 = scalar_select %p210, %s16, 1
      %s212 = smul.addr %s211, 32
      %s213 = smul.addr %s212, 8
      %s214 = scalar_lea.vmem %s5, %s213
      %p215 = scmp.lt.s32.totalorder %s16, 1
      %s216 = scalar_select %p215, %s16, 1
      %s217 = smul.addr %s216, 32
      %s218 = smul.addr %s217, 8
      %s219 = scalar_lea.vmem %s0, %s218
      %p220 = scmp.lt.s32.totalorder %s16, 1
      %s221 = scalar_select %p220, %s16, 1
      %s222 = smul.addr %s221, 32
      %s223 = smul.addr %s222, 8
      %s224 = scalar_lea.vmem %s5, %s223
      %v225 = vld [vmem:[%s219] sm:$0xff]
      %v226 = vld [vmem:[%s219 + $0x8] sm:$0xff]
      %v227 = vld [vmem:[%s219 + $0x10] sm:$0xff]
      %v228 = vld [vmem:[%s219 + $0x18] sm:$0xff]
      %v229 = vld [vmem:[%s219 + $0x20] sm:$0xff]
      %v230 = vld [vmem:[%s219 + $0x28] sm:$0xff]
      %v231 = vld [vmem:[%s219 + $0x30] sm:$0xff]
      %v232 = vld [vmem:[%s219 + $0x38] sm:$0xff]
      %v233 = vld [vmem:[%s219 + $0x40] sm:$0xff]
      %v234 = vld [vmem:[%s219 + $0x48] sm:$0xff]
      %v235 = vld [vmem:[%s219 + $0x50] sm:$0xff]
      %v236 = vld [vmem:[%s219 + $0x58] sm:$0xff]
      %v237 = vld [vmem:[%s219 + $0x60] sm:$0xff]
      %v238 = vld [vmem:[%s219 + $0x68] sm:$0xff]
      %v239 = vld [vmem:[%s219 + $0x70] sm:$0xff]
      %v240 = vld [vmem:[%s219 + $0x78] sm:$0xff]
      %v241 = vld [vmem:[%s219 + $0x80] sm:$0xff]
      %v242 = vld [vmem:[%s219 + $0x88] sm:$0xff]
      %v243 = vld [vmem:[%s219 + $0x90] sm:$0xff]
      %v244 = vld [vmem:[%s219 + $0x98] sm:$0xff]
      %v245 = vld [vmem:[%s219 + $0xa0] sm:$0xff]
      %v246 = vld [vmem:[%s219 + $0xa8] sm:$0xff]
      %v247 = vld [vmem:[%s219 + $0xb0] sm:$0xff]
      %v248 = vld [vmem:[%s219 + $0xb8] sm:$0xff]
      %v249 = vld [vmem:[%s219 + $0xc0] sm:$0xff]
      %v250 = vld [vmem:[%s219 + $0xc8] sm:$0xff]
      %v251 = vld [vmem:[%s219 + $0xd0] sm:$0xff]
      %v252 = vld [vmem:[%s219 + $0xd8] sm:$0xff]
      %v253 = vld [vmem:[%s219 + $0xe0] sm:$0xff]
      %v254 = vld [vmem:[%s219 + $0xe8] sm:$0xff]
      %v255 = vld [vmem:[%s219 + $0xf0] sm:$0xff]
      %v256 = vld [vmem:[%s219 + $0xf8] sm:$0xff]
      %s257 = scalar_lea.vmem [#allocation2], 24
      %vm258 = vcmask 31744
      %259 = vst.msk [vmem:[%s257 + $0x1] sm:$0xff] %vm258, %v225
      %260 = vst.msk [vmem:[%s257 + $0x9] sm:$0xff] %vm258, %v226
      %261 = vst.msk [vmem:[%s257 + $0x19] sm:$0xff] %vm258, %v227
      %262 = vst.msk [vmem:[%s257 + $0x21] sm:$0xff] %vm258, %v228
      %263 = vst.msk [vmem:[%s257 + $0x31] sm:$0xff] %vm258, %v229
      %264 = vst.msk [vmem:[%s257 + $0x39] sm:$0xff] %vm258, %v230
      %265 = vst.msk [vmem:[%s257 + $0x49] sm:$0xff] %vm258, %v231
      %266 = vst.msk [vmem:[%s257 + $0x51] sm:$0xff] %vm258, %v232
      %267 = vst.msk [vmem:[%s257 + $0x61] sm:$0xff] %vm258, %v233
      %268 = vst.msk [vmem:[%s257 + $0x69] sm:$0xff] %vm258, %v234
      %269 = vst.msk [vmem:[%s257 + $0x79] sm:$0xff] %vm258, %v235
      %270 = vst.msk [vmem:[%s257 + $0x81] sm:$0xff] %vm258, %v236
      %271 = vst.msk [vmem:[%s257 + $0x91] sm:$0xff] %vm258, %v237
      %272 = vst.msk [vmem:[%s257 + $0x99] sm:$0xff] %vm258, %v238
      %273 = vst.msk [vmem:[%s257 + $0xa9] sm:$0xff] %vm258, %v239
      %274 = vst.msk [vmem:[%s257 + $0xb1] sm:$0xff] %vm258, %v240
      %275 = vst.msk [vmem:[%s257 + $0xc1] sm:$0xff] %vm258, %v241
      %276 = vst.msk [vmem:[%s257 + $0xc9] sm:$0xff] %vm258, %v242
      %277 = vst.msk [vmem:[%s257 + $0xd9] sm:$0xff] %vm258, %v243
      %278 = vst.msk [vmem:[%s257 + $0xe1] sm:$0xff] %vm258, %v244
      %279 = vst.msk [vmem:[%s257 + $0xf1] sm:$0xff] %vm258, %v245
      %280 = vst.msk [vmem:[%s257 + $0xf9] sm:$0xff] %vm258, %v246
      %281 = vst.msk [vmem:[%s257 + $0x109] sm:$0xff] %vm258, %v247
      %282 = vst.msk [vmem:[%s257 + $0x111] sm:$0xff] %vm258, %v248
      %283 = vst.msk [vmem:[%s257 + $0x121] sm:$0xff] %vm258, %v249
      %284 = vst.msk [vmem:[%s257 + $0x129] sm:$0xff] %vm258, %v250
      %285 = vst.msk [vmem:[%s257 + $0x139] sm:$0xff] %vm258, %v251
      %286 = vst.msk [vmem:[%s257 + $0x141] sm:$0xff] %vm258, %v252
      %287 = vst.msk [vmem:[%s257 + $0x151] sm:$0xff] %vm258, %v253
      %288 = vst.msk [vmem:[%s257 + $0x159] sm:$0xff] %vm258, %v254
      %289 = vst.msk [vmem:[%s257 + $0x169] sm:$0xff] %vm258, %v255
      %290 = vst.msk [vmem:[%s257 + $0x171] sm:$0xff] %vm258, %v256
      %291 = vst.msk [vmem:[#allocation2] sm:$0xff] %vm258, 0.0
      %292 = vst.msk [vmem:[#allocation2 + $0x8] sm:$0xff] %vm258, 0.0
      %vm293 = vcmask 25600
      %294 = vst.msk [vmem:[#allocation2 + $0x10] sm:$0x3] %vm293, 0.0
      %s295 = scalar_lea.vmem [#allocation2], 408
      %296 = vst.msk [vmem:[%s295] sm:$0xff] %vm258, 0.0
      %297 = vst.msk [vmem:[%s295 + $0x8] sm:$0xff] %vm258, 0.0
      %298 = vst.msk [vmem:[%s295 + $0x10] sm:$0x3] %vm293, 0.0
      %vm299 = vcmask 24576
      %300 = vst.msk [vmem:[%s257] sm:$0x1] %vm299, 0.0
      %301 = vst.msk [vmem:[%s257 + $0x18] sm:$0x1] %vm299, 0.0
      %302 = vst.msk [vmem:[%s257 + $0x30] sm:$0x1] %vm299, 0.0
      %303 = vst.msk [vmem:[%s257 + $0x48] sm:$0x1] %vm299, 0.0
      %304 = vst.msk [vmem:[%s257 + $0x60] sm:$0x1] %vm299, 0.0
      %305 = vst.msk [vmem:[%s257 + $0x78] sm:$0x1] %vm299, 0.0
      %306 = vst.msk [vmem:[%s257 + $0x90] sm:$0x1] %vm299, 0.0
      %307 = vst.msk [vmem:[%s257 + $0xa8] sm:$0x1] %vm299, 0.0
      %308 = vst.msk [vmem:[%s257 + $0xc0] sm:$0x1] %vm299, 0.0
      %309 = vst.msk [vmem:[%s257 + $0xd8] sm:$0x1] %vm299, 0.0
      %310 = vst.msk [vmem:[%s257 + $0xf0] sm:$0x1] %vm299, 0.0
      %311 = vst.msk [vmem:[%s257 + $0x108] sm:$0x1] %vm299, 0.0
      %312 = vst.msk [vmem:[%s257 + $0x120] sm:$0x1] %vm299, 0.0
      %313 = vst.msk [vmem:[%s257 + $0x138] sm:$0x1] %vm299, 0.0
      %314 = vst.msk [vmem:[%s257 + $0x150] sm:$0x1] %vm299, 0.0
      %315 = vst.msk [vmem:[%s257 + $0x168] sm:$0x1] %vm299, 0.0
      %316 = vst.msk [vmem:[%s257 + $0x11] sm:$0x1] %vm299, 0.0
      %317 = vst.msk [vmem:[%s257 + $0x29] sm:$0x1] %vm299, 0.0
      %318 = vst.msk [vmem:[%s257 + $0x41] sm:$0x1] %vm299, 0.0
      %319 = vst.msk [vmem:[%s257 + $0x59] sm:$0x1] %vm299, 0.0
      %320 = vst.msk [vmem:[%s257 + $0x71] sm:$0x1] %vm299, 0.0
      %321 = vst.msk [vmem:[%s257 + $0x89] sm:$0x1] %vm299, 0.0
      %322 = vst.msk [vmem:[%s257 + $0xa1] sm:$0x1] %vm299, 0.0
      %323 = vst.msk [vmem:[%s257 + $0xb9] sm:$0x1] %vm299, 0.0
      %324 = vst.msk [vmem:[%s257 + $0xd1] sm:$0x1] %vm299, 0.0
      %325 = vst.msk [vmem:[%s257 + $0xe9] sm:$0x1] %vm299, 0.0
      %326 = vst.msk [vmem:[%s257 + $0x101] sm:$0x1] %vm299, 0.0
      %327 = vst.msk [vmem:[%s257 + $0x119] sm:$0x1] %vm299, 0.0
      %328 = vst.msk [vmem:[%s257 + $0x131] sm:$0x1] %vm299, 0.0
      %329 = vst.msk [vmem:[%s257 + $0x149] sm:$0x1] %vm299, 0.0
      %330 = vst.msk [vmem:[%s257 + $0x161] sm:$0x1] %vm299, 0.0
      %331 = vst.msk [vmem:[%s257 + $0x179] sm:$0x1] %vm299, 0.0
      %v332 = vld [vmem:[#allocation2] sm:$0xff]
      %v333 = vld [vmem:[#allocation2 + $0x8] sm:$0xff]
      %v334 = vld [vmem:[#allocation2 + $0x18] sm:$0xff]
      %v335 = vld [vmem:[#allocation2 + $0x20] sm:$0xff]
      %v336 = vld [vmem:[#allocation2 + $0x30] sm:$0xff]
      %v337 = vld [vmem:[#allocation2 + $0x38] sm:$0xff]
      %v338 = vld [vmem:[#allocation2 + $0x48] sm:$0xff]
      %v339 = vld [vmem:[#allocation2 + $0x50] sm:$0xff]
      %v340 = vld [vmem:[#allocation2 + $0x60] sm:$0xff]
      %v341 = vld [vmem:[#allocation2 + $0x68] sm:$0xff]
      %v342 = vld [vmem:[#allocation2 + $0x78] sm:$0xff]
      %v343 = vld [vmem:[#allocation2 + $0x80] sm:$0xff]
      %v344 = vld [vmem:[#allocation2 + $0x90] sm:$0xff]
      %v345 = vld [vmem:[#allocation2 + $0x98] sm:$0xff]
      %v346 = vld [vmem:[#allocation2 + $0xa8] sm:$0xff]
      %v347 = vld [vmem:[#allocation2 + $0xb0] sm:$0xff]
      %v348 = vld [vmem:[#allocation2 + $0xc0] sm:$0xff]
      %v349 = vld [vmem:[#allocation2 + $0xc8] sm:$0xff]
      %v350 = vld [vmem:[#allocation2 + $0xd8] sm:$0xff]
      %v351 = vld [vmem:[#allocation2 + $0xe0] sm:$0xff]
      %v352 = vld [vmem:[#allocation2 + $0xf0] sm:$0xff]
      %v353 = vld [vmem:[#allocation2 + $0xf8] sm:$0xff]
      %v354 = vld [vmem:[#allocation2 + $0x108] sm:$0xff]
      %v355 = vld [vmem:[#allocation2 + $0x110] sm:$0xff]
      %v356 = vld [vmem:[#allocation2 + $0x120] sm:$0xff]
      %v357 = vld [vmem:[#allocation2 + $0x128] sm:$0xff]
      %v358 = vld [vmem:[#allocation2 + $0x138] sm:$0xff]
      %v359 = vld [vmem:[#allocation2 + $0x140] sm:$0xff]
      %v360 = vld [vmem:[#allocation2 + $0x150] sm:$0xff]
      %v361 = vld [vmem:[#allocation2 + $0x158] sm:$0xff]
      %v362 = vld [vmem:[#allocation2 + $0x168] sm:$0xff]
      %v363 = vld [vmem:[#allocation2 + $0x170] sm:$0xff]
      %v364 = vld [vmem:[#allocation2 + $0x1] sm:$0xff]
      %v365 = vld [vmem:[#allocation2 + $0x9] sm:$0xff]
      %v366 = vld [vmem:[#allocation2 + $0x19] sm:$0xff]
      %v367 = vld [vmem:[#allocation2 + $0x21] sm:$0xff]
      %v368 = vld [vmem:[#allocation2 + $0x31] sm:$0xff]
      %v369 = vld [vmem:[#allocation2 + $0x39] sm:$0xff]
      %v370 = vld [vmem:[#allocation2 + $0x49] sm:$0xff]
      %v371 = vld [vmem:[#allocation2 + $0x51] sm:$0xff]
      %v372 = vld [vmem:[#allocation2 + $0x61] sm:$0xff]
      %v373 = vld [vmem:[#allocation2 + $0x69] sm:$0xff]
      %v374 = vld [vmem:[#allocation2 + $0x79] sm:$0xff]
      %v375 = vld [vmem:[#allocation2 + $0x81] sm:$0xff]
      %v376 = vld [vmem:[#allocation2 + $0x91] sm:$0xff]
      %v377 = vld [vmem:[#allocation2 + $0x99] sm:$0xff]
      %v378 = vld [vmem:[#allocation2 + $0xa9] sm:$0xff]
      %v379 = vld [vmem:[#allocation2 + $0xb1] sm:$0xff]
      %v380 = vld [vmem:[#allocation2 + $0xc1] sm:$0xff]
      %v381 = vld [vmem:[#allocation2 + $0xc9] sm:$0xff]
      %v382 = vld [vmem:[#allocation2 + $0xd9] sm:$0xff]
      %v383 = vld [vmem:[#allocation2 + $0xe1] sm:$0xff]
      %v384 = vld [vmem:[#allocation2 + $0xf1] sm:$0xff]
      %v385 = vld [vmem:[#allocation2 + $0xf9] sm:$0xff]
      %v386 = vld [vmem:[#allocation2 + $0x109] sm:$0xff]
      %v387 = vld [vmem:[#allocation2 + $0x111] sm:$0xff]
      %v388 = vld [vmem:[#allocation2 + $0x121] sm:$0xff]
      %v389 = vld [vmem:[#allocation2 + $0x129] sm:$0xff]
      %v390 = vld [vmem:[#allocation2 + $0x139] sm:$0xff]
      %v391 = vld [vmem:[#allocation2 + $0x141] sm:$0xff]
      %v392 = vld [vmem:[#allocation2 + $0x151] sm:$0xff]
      %v393 = vld [vmem:[#allocation2 + $0x159] sm:$0xff]
      %v394 = vld [vmem:[#allocation2 + $0x169] sm:$0xff]
      %v395 = vld [vmem:[#allocation2 + $0x171] sm:$0xff]
      %v396 = vld [vmem:[#allocation2 + $0x2] sm:$0xff]
      %v397 = vld [vmem:[#allocation2 + $0xa] sm:$0xff]
      %v398 = vld [vmem:[#allocation2 + $0x1a] sm:$0xff]
      %v399 = vld [vmem:[#allocation2 + $0x22] sm:$0xff]
      %v400 = vld [vmem:[#allocation2 + $0x32] sm:$0xff]
      %v401 = vld [vmem:[#allocation2 + $0x3a] sm:$0xff]
      %v402 = vld [vmem:[#allocation2 + $0x4a] sm:$0xff]
      %v403 = vld [vmem:[#allocation2 + $0x52] sm:$0xff]
      %v404 = vld [vmem:[#allocation2 + $0x62] sm:$0xff]
      %v405 = vld [vmem:[#allocation2 + $0x6a] sm:$0xff]
      %v406 = vld [vmem:[#allocation2 + $0x7a] sm:$0xff]
      %v407 = vld [vmem:[#allocation2 + $0x82] sm:$0xff]
      %v408 = vld [vmem:[#allocation2 + $0x92] sm:$0xff]
      %v409 = vld [vmem:[#allocation2 + $0x9a] sm:$0xff]
      %v410 = vld [vmem:[#allocation2 + $0xaa] sm:$0xff]
      %v411 = vld [vmem:[#allocation2 + $0xb2] sm:$0xff]
      %v412 = vld [vmem:[#allocation2 + $0xc2] sm:$0xff]
      %v413 = vld [vmem:[#allocation2 + $0xca] sm:$0xff]
      %v414 = vld [vmem:[#allocation2 + $0xda] sm:$0xff]
      %v415 = vld [vmem:[#allocation2 + $0xe2] sm:$0xff]
      %v416 = vld [vmem:[#allocation2 + $0xf2] sm:$0xff]
      %v417 = vld [vmem:[#allocation2 + $0xfa] sm:$0xff]
      %v418 = vld [vmem:[#allocation2 + $0x10a] sm:$0xff]
      %v419 = vld [vmem:[#allocation2 + $0x112] sm:$0xff]
      %v420 = vld [vmem:[#allocation2 + $0x122] sm:$0xff]
      %v421 = vld [vmem:[#allocation2 + $0x12a] sm:$0xff]
      %v422 = vld [vmem:[#allocation2 + $0x13a] sm:$0xff]
      %v423 = vld [vmem:[#allocation2 + $0x142] sm:$0xff]
      %v424 = vld [vmem:[#allocation2 + $0x152] sm:$0xff]
      %v425 = vld [vmem:[#allocation2 + $0x15a] sm:$0xff]
      %v426 = vld [vmem:[#allocation2 + $0x16a] sm:$0xff]
      %v427 = vld [vmem:[#allocation2 + $0x172] sm:$0xff]
      %v428 = vld [vmem:[%s257] sm:$0xff]
      %v429 = vld [vmem:[%s257 + $0x8] sm:$0xff]
      %v430 = vld [vmem:[%s257 + $0x18] sm:$0xff]
      %v431 = vld [vmem:[%s257 + $0x20] sm:$0xff]
      %v432 = vld [vmem:[%s257 + $0x30] sm:$0xff]
      %v433 = vld [vmem:[%s257 + $0x38] sm:$0xff]
      %v434 = vld [vmem:[%s257 + $0x48] sm:$0xff]
      %v435 = vld [vmem:[%s257 + $0x50] sm:$0xff]
      %v436 = vld [vmem:[%s257 + $0x60] sm:$0xff]
      %v437 = vld [vmem:[%s257 + $0x68] sm:$0xff]
      %v438 = vld [vmem:[%s257 + $0x78] sm:$0xff]
      %v439 = vld [vmem:[%s257 + $0x80] sm:$0xff]
      %v440 = vld [vmem:[%s257 + $0x90] sm:$0xff]
      %v441 = vld [vmem:[%s257 + $0x98] sm:$0xff]
      %v442 = vld [vmem:[%s257 + $0xa8] sm:$0xff]
      %v443 = vld [vmem:[%s257 + $0xb0] sm:$0xff]
      %v444 = vld [vmem:[%s257 + $0xc0] sm:$0xff]
      %v445 = vld [vmem:[%s257 + $0xc8] sm:$0xff]
      %v446 = vld [vmem:[%s257 + $0xd8] sm:$0xff]
      %v447 = vld [vmem:[%s257 + $0xe0] sm:$0xff]
      %v448 = vld [vmem:[%s257 + $0xf0] sm:$0xff]
      %v449 = vld [vmem:[%s257 + $0xf8] sm:$0xff]
      %v450 = vld [vmem:[%s257 + $0x108] sm:$0xff]
      %v451 = vld [vmem:[%s257 + $0x110] sm:$0xff]
      %v452 = vld [vmem:[%s257 + $0x120] sm:$0xff]
      %v453 = vld [vmem:[%s257 + $0x128] sm:$0xff]
      %v454 = vld [vmem:[%s257 + $0x138] sm:$0xff]
      %v455 = vld [vmem:[%s257 + $0x140] sm:$0xff]
      %v456 = vld [vmem:[%s257 + $0x150] sm:$0xff]
      %v457 = vld [vmem:[%s257 + $0x158] sm:$0xff]
      %v458 = vld [vmem:[%s257 + $0x168] sm:$0xff]
      %v459 = vld [vmem:[%s257 + $0x170] sm:$0xff]
      %v460 = vld [vmem:[%s257 + $0x1] sm:$0xff]
      %v461 = vld [vmem:[%s257 + $0x9] sm:$0xff]
      %v462 = vld [vmem:[%s257 + $0x19] sm:$0xff]
      %v463 = vld [vmem:[%s257 + $0x21] sm:$0xff]
      %v464 = vld [vmem:[%s257 + $0x31] sm:$0xff]
      %v465 = vld [vmem:[%s257 + $0x39] sm:$0xff]
      %v466 = vld [vmem:[%s257 + $0x49] sm:$0xff]
      %v467 = vld [vmem:[%s257 + $0x51] sm:$0xff]
      %v468 = vld [vmem:[%s257 + $0x61] sm:$0xff]
      %v469 = vld [vmem:[%s257 + $0x69] sm:$0xff]
      %v470 = vld [vmem:[%s257 + $0x79] sm:$0xff]
      %v471 = vld [vmem:[%s257 + $0x81] sm:$0xff]
      %v472 = vld [vmem:[%s257 + $0x91] sm:$0xff]
      %v473 = vld [vmem:[%s257 + $0x99] sm:$0xff]
      %v474 = vld [vmem:[%s257 + $0xa9] sm:$0xff]
      %v475 = vld [vmem:[%s257 + $0xb1] sm:$0xff]
      %v476 = vld [vmem:[%s257 + $0xc1] sm:$0xff]
      %v477 = vld [vmem:[%s257 + $0xc9] sm:$0xff]
      %v478 = vld [vmem:[%s257 + $0xd9] sm:$0xff]
      %v479 = vld [vmem:[%s257 + $0xe1] sm:$0xff]
      %v480 = vld [vmem:[%s257 + $0xf1] sm:$0xff]
      %v481 = vld [vmem:[%s257 + $0xf9] sm:$0xff]
      %v482 = vld [vmem:[%s257 + $0x109] sm:$0xff]
      %v483 = vld [vmem:[%s257 + $0x111] sm:$0xff]
      %v484 = vld [vmem:[%s257 + $0x121] sm:$0xff]
      %v485 = vld [vmem:[%s257 + $0x129] sm:$0xff]
      %v486 = vld [vmem:[%s257 + $0x139] sm:$0xff]
      %v487 = vld [vmem:[%s257 + $0x141] sm:$0xff]
      %v488 = vld [vmem:[%s257 + $0x151] sm:$0xff]
      %v489 = vld [vmem:[%s257 + $0x159] sm:$0xff]
      %v490 = vld [vmem:[%s257 + $0x169] sm:$0xff]
      %v491 = vld [vmem:[%s257 + $0x171] sm:$0xff]
      %v492 = vld [vmem:[%s257 + $0x2] sm:$0xff]
      %v493 = vld [vmem:[%s257 + $0xa] sm:$0xff]
      %v494 = vld [vmem:[%s257 + $0x1a] sm:$0xff]
      %v495 = vld [vmem:[%s257 + $0x22] sm:$0xff]
      %v496 = vld [vmem:[%s257 + $0x32] sm:$0xff]
      %v497 = vld [vmem:[%s257 + $0x3a] sm:$0xff]
      %v498 = vld [vmem:[%s257 + $0x4a] sm:$0xff]
      %v499 = vld [vmem:[%s257 + $0x52] sm:$0xff]
      %v500 = vld [vmem:[%s257 + $0x62] sm:$0xff]
      %v501 = vld [vmem:[%s257 + $0x6a] sm:$0xff]
      %v502 = vld [vmem:[%s257 + $0x7a] sm:$0xff]
      %v503 = vld [vmem:[%s257 + $0x82] sm:$0xff]
      %v504 = vld [vmem:[%s257 + $0x92] sm:$0xff]
      %v505 = vld [vmem:[%s257 + $0x9a] sm:$0xff]
      %v506 = vld [vmem:[%s257 + $0xaa] sm:$0xff]
      %v507 = vld [vmem:[%s257 + $0xb2] sm:$0xff]
      %v508 = vld [vmem:[%s257 + $0xc2] sm:$0xff]
      %v509 = vld [vmem:[%s257 + $0xca] sm:$0xff]
      %v510 = vld [vmem:[%s257 + $0xda] sm:$0xff]
      %v511 = vld [vmem:[%s257 + $0xe2] sm:$0xff]
      %v512 = vld [vmem:[%s257 + $0xf2] sm:$0xff]
      %v513 = vld [vmem:[%s257 + $0xfa] sm:$0xff]
      %v514 = vld [vmem:[%s257 + $0x10a] sm:$0xff]
      %v515 = vld [vmem:[%s257 + $0x112] sm:$0xff]
      %v516 = vld [vmem:[%s257 + $0x122] sm:$0xff]
      %v517 = vld [vmem:[%s257 + $0x12a] sm:$0xff]
      %v518 = vld [vmem:[%s257 + $0x13a] sm:$0xff]
      %v519 = vld [vmem:[%s257 + $0x142] sm:$0xff]
      %v520 = vld [vmem:[%s257 + $0x152] sm:$0xff]
      %v521 = vld [vmem:[%s257 + $0x15a] sm:$0xff]
      %v522 = vld [vmem:[%s257 + $0x16a] sm:$0xff]
      %v523 = vld [vmem:[%s257 + $0x172] sm:$0xff]
      %s524 = scalar_lea.vmem [#allocation2], 48
      %v525 = vld [vmem:[%s524] sm:$0xff]
      %v526 = vld [vmem:[%s524 + $0x8] sm:$0xff]
      %v527 = vld [vmem:[%s524 + $0x18] sm:$0xff]
      %v528 = vld [vmem:[%s524 + $0x20] sm:$0xff]
      %v529 = vld [vmem:[%s524 + $0x30] sm:$0xff]
      %v530 = vld [vmem:[%s524 + $0x38] sm:$0xff]
      %v531 = vld [vmem:[%s524 + $0x48] sm:$0xff]
      %v532 = vld [vmem:[%s524 + $0x50] sm:$0xff]
      %v533 = vld [vmem:[%s524 + $0x60] sm:$0xff]
      %v534 = vld [vmem:[%s524 + $0x68] sm:$0xff]
      %v535 = vld [vmem:[%s524 + $0x78] sm:$0xff]
      %v536 = vld [vmem:[%s524 + $0x80] sm:$0xff]
      %v537 = vld [vmem:[%s524 + $0x90] sm:$0xff]
      %v538 = vld [vmem:[%s524 + $0x98] sm:$0xff]
      %v539 = vld [vmem:[%s524 + $0xa8] sm:$0xff]
      %v540 = vld [vmem:[%s524 + $0xb0] sm:$0xff]
      %v541 = vld [vmem:[%s524 + $0xc0] sm:$0xff]
      %v542 = vld [vmem:[%s524 + $0xc8] sm:$0xff]
      %v543 = vld [vmem:[%s524 + $0xd8] sm:$0xff]
      %v544 = vld [vmem:[%s524 + $0xe0] sm:$0xff]
      %v545 = vld [vmem:[%s524 + $0xf0] sm:$0xff]
      %v546 = vld [vmem:[%s524 + $0xf8] sm:$0xff]
      %v547 = vld [vmem:[%s524 + $0x108] sm:$0xff]
      %v548 = vld [vmem:[%s524 + $0x110] sm:$0xff]
      %v549 = vld [vmem:[%s524 + $0x120] sm:$0xff]
      %v550 = vld [vmem:[%s524 + $0x128] sm:$0xff]
      %v551 = vld [vmem:[%s524 + $0x138] sm:$0xff]
      %v552 = vld [vmem:[%s524 + $0x140] sm:$0xff]
      %v553 = vld [vmem:[%s524 + $0x150] sm:$0xff]
      %v554 = vld [vmem:[%s524 + $0x158] sm:$0xff]
      %v555 = vld [vmem:[%s524 + $0x168] sm:$0xff]
      %v556 = vld [vmem:[%s524 + $0x170] sm:$0xff]
      %v557 = vld [vmem:[%s524 + $0x1] sm:$0xff]
      %v558 = vld [vmem:[%s524 + $0x9] sm:$0xff]
      %v559 = vld [vmem:[%s524 + $0x19] sm:$0xff]
      %v560 = vld [vmem:[%s524 + $0x21] sm:$0xff]
      %v561 = vld [vmem:[%s524 + $0x31] sm:$0xff]
      %v562 = vld [vmem:[%s524 + $0x39] sm:$0xff]
      %v563 = vld [vmem:[%s524 + $0x49] sm:$0xff]
      %v564 = vld [vmem:[%s524 + $0x51] sm:$0xff]
      %v565 = vld [vmem:[%s524 + $0x61] sm:$0xff]
      %v566 = vld [vmem:[%s524 + $0x69] sm:$0xff]
      %v567 = vld [vmem:[%s524 + $0x79] sm:$0xff]
      %v568 = vld [vmem:[%s524 + $0x81] sm:$0xff]
      %v569 = vld [vmem:[%s524 + $0x91] sm:$0xff]
      %v570 = vld [vmem:[%s524 + $0x99] sm:$0xff]
      %v571 = vld [vmem:[%s524 + $0xa9] sm:$0xff]
      %v572 = vld [vmem:[%s524 + $0xb1] sm:$0xff]
      %v573 = vld [vmem:[%s524 + $0xc1] sm:$0xff]
      %v574 = vld [vmem:[%s524 + $0xc9] sm:$0xff]
      %v575 = vld [vmem:[%s524 + $0xd9] sm:$0xff]
      %v576 = vld [vmem:[%s524 + $0xe1] sm:$0xff]
      %v577 = vld [vmem:[%s524 + $0xf1] sm:$0xff]
      %v578 = vld [vmem:[%s524 + $0xf9] sm:$0xff]
      %v579 = vld [vmem:[%s524 + $0x109] sm:$0xff]
      %v580 = vld [vmem:[%s524 + $0x111] sm:$0xff]
      %v581 = vld [vmem:[%s524 + $0x121] sm:$0xff]
      %v582 = vld [vmem:[%s524 + $0x129] sm:$0xff]
      %v583 = vld [vmem:[%s524 + $0x139] sm:$0xff]
      %v584 = vld [vmem:[%s524 + $0x141] sm:$0xff]
      %v585 = vld [vmem:[%s524 + $0x151] sm:$0xff]
      %v586 = vld [vmem:[%s524 + $0x159] sm:$0xff]
      %v587 = vld [vmem:[%s524 + $0x169] sm:$0xff]
      %v588 = vld [vmem:[%s524 + $0x171] sm:$0xff]
      %v589 = vld [vmem:[%s524 + $0x2] sm:$0xff]
      %v590 = vld [vmem:[%s524 + $0xa] sm:$0xff]
      %v591 = vld [vmem:[%s524 + $0x1a] sm:$0xff]
      %v592 = vld [vmem:[%s524 + $0x22] sm:$0xff]
      %v593 = vld [vmem:[%s524 + $0x32] sm:$0xff]
      %v594 = vld [vmem:[%s524 + $0x3a] sm:$0xff]
      %v595 = vld [vmem:[%s524 + $0x4a] sm:$0xff]
      %v596 = vld [vmem:[%s524 + $0x52] sm:$0xff]
      %v597 = vld [vmem:[%s524 + $0x62] sm:$0xff]
      %v598 = vld [vmem:[%s524 + $0x6a] sm:$0xff]
      %v599 = vld [vmem:[%s524 + $0x7a] sm:$0xff]
      %v600 = vld [vmem:[%s524 + $0x82] sm:$0xff]
      %v601 = vld [vmem:[%s524 + $0x92] sm:$0xff]
      %v602 = vld [vmem:[%s524 + $0x9a] sm:$0xff]
      %v603 = vld [vmem:[%s524 + $0xaa] sm:$0xff]
      %v604 = vld [vmem:[%s524 + $0xb2] sm:$0xff]
      %v605 = vld [vmem:[%s524 + $0xc2] sm:$0xff]
      %v606 = vld [vmem:[%s524 + $0xca] sm:$0xff]
      %v607 = vld [vmem:[%s524 + $0xda] sm:$0xff]
      %v608 = vld [vmem:[%s524 + $0xe2] sm:$0xff]
      %v609 = vld [vmem:[%s524 + $0xf2] sm:$0xff]
      %v610 = vld [vmem:[%s524 + $0xfa] sm:$0xff]
      %v611 = vld [vmem:[%s524 + $0x10a] sm:$0xff]
      %v612 = vld [vmem:[%s524 + $0x112] sm:$0xff]
      %v613 = vld [vmem:[%s524 + $0x122] sm:$0xff]
      %v614 = vld [vmem:[%s524 + $0x12a] sm:$0xff]
      %v615 = vld [vmem:[%s524 + $0x13a] sm:$0xff]
      %v616 = vld [vmem:[%s524 + $0x142] sm:$0xff]
      %v617 = vld [vmem:[%s524 + $0x152] sm:$0xff]
      %v618 = vld [vmem:[%s524 + $0x15a] sm:$0xff]
      %v619 = vld [vmem:[%s524 + $0x16a] sm:$0xff]
      %v620 = vld [vmem:[%s524 + $0x172] sm:$0xff]
      %653 = vrot.lane.b32.xlu0 %v364, 4
      %v654 = vpop.permute.xlu0 %653
      %655 = vrot.lane.b32.xlu0 %v365, 4
      %v656 = vpop.permute.xlu0 %655
      %657 = vrot.lane.b32.xlu0 %v366, 4
      %v658 = vpop.permute.xlu0 %657
      %659 = vrot.lane.b32.xlu0 %v367, 4
      %v660 = vpop.permute.xlu0 %659
      %661 = vrot.lane.b32.xlu0 %v368, 4
      %v662 = vpop.permute.xlu0 %661
      %663 = vrot.lane.b32.xlu0 %v369, 4
      %v664 = vpop.permute.xlu0 %663
      %665 = vrot.lane.b32.xlu0 %v370, 4
      %v666 = vpop.permute.xlu0 %665
      %667 = vrot.lane.b32.xlu0 %v371, 4
      %v668 = vpop.permute.xlu0 %667
      %669 = vrot.lane.b32.xlu0 %v372, 4
      %v670 = vpop.permute.xlu0 %669
      %671 = vrot.lane.b32.xlu0 %v373, 4
      %v672 = vpop.permute.xlu0 %671
      %673 = vrot.lane.b32.xlu0 %v374, 4
      %v674 = vpop.permute.xlu0 %673
      %675 = vrot.lane.b32.xlu0 %v375, 4
      %v676 = vpop.permute.xlu0 %675
      %677 = vrot.lane.b32.xlu0 %v376, 4
      %v678 = vpop.permute.xlu0 %677
      %679 = vrot.lane.b32.xlu0 %v377, 4
      %v680 = vpop.permute.xlu0 %679
      %681 = vrot.lane.b32.xlu0 %v378, 4
      %v682 = vpop.permute.xlu0 %681
      %683 = vrot.lane.b32.xlu0 %v379, 4
      %v684 = vpop.permute.xlu0 %683
      %685 = vrot.lane.b32.xlu0 %v380, 4
      %v686 = vpop.permute.xlu0 %685
      %687 = vrot.lane.b32.xlu0 %v381, 4
      %v688 = vpop.permute.xlu0 %687
      %689 = vrot.lane.b32.xlu0 %v382, 4
      %v690 = vpop.permute.xlu0 %689
      %691 = vrot.lane.b32.xlu0 %v383, 4
      %v692 = vpop.permute.xlu0 %691
      %693 = vrot.lane.b32.xlu0 %v384, 4
      %v694 = vpop.permute.xlu0 %693
      %695 = vrot.lane.b32.xlu0 %v385, 4
      %v696 = vpop.permute.xlu0 %695
      %697 = vrot.lane.b32.xlu0 %v386, 4
      %v698 = vpop.permute.xlu0 %697
      %699 = vrot.lane.b32.xlu0 %v387, 4
      %v700 = vpop.permute.xlu0 %699
      %701 = vrot.lane.b32.xlu0 %v388, 4
      %v702 = vpop.permute.xlu0 %701
      %703 = vrot.lane.b32.xlu0 %v389, 4
      %v704 = vpop.permute.xlu0 %703
      %705 = vrot.lane.b32.xlu0 %v390, 4
      %v706 = vpop.permute.xlu0 %705
      %707 = vrot.lane.b32.xlu0 %v391, 4
      %v708 = vpop.permute.xlu0 %707
      %709 = vrot.lane.b32.xlu0 %v392, 4
      %v710 = vpop.permute.xlu0 %709
      %711 = vrot.lane.b32.xlu0 %v393, 4
      %v712 = vpop.permute.xlu0 %711
      %713 = vrot.lane.b32.xlu0 %v394, 4
      %v714 = vpop.permute.xlu0 %713
      %715 = vrot.lane.b32.xlu0 %v395, 4
      %v716 = vpop.permute.xlu0 %715
      %781 = vrot.lane.b32.xlu0 %v396, 8
      %v782 = vpop.permute.xlu0 %781
      %783 = vrot.lane.b32.xlu0 %v397, 8
      %v784 = vpop.permute.xlu0 %783
      %785 = vrot.lane.b32.xlu0 %v398, 8
      %v786 = vpop.permute.xlu0 %785
      %787 = vrot.lane.b32.xlu0 %v399, 8
      %v788 = vpop.permute.xlu0 %787
      %789 = vrot.lane.b32.xlu0 %v400, 8
      %v790 = vpop.permute.xlu0 %789
      %791 = vrot.lane.b32.xlu0 %v401, 8
      %v792 = vpop.permute.xlu0 %791
      %793 = vrot.lane.b32.xlu0 %v402, 8
      %v794 = vpop.permute.xlu0 %793
      %795 = vrot.lane.b32.xlu0 %v403, 8
      %v796 = vpop.permute.xlu0 %795
      %797 = vrot.lane.b32.xlu0 %v404, 8
      %v798 = vpop.permute.xlu0 %797
      %799 = vrot.lane.b32.xlu0 %v405, 8
      %v800 = vpop.permute.xlu0 %799
      %801 = vrot.lane.b32.xlu0 %v406, 8
      %v802 = vpop.permute.xlu0 %801
      %803 = vrot.lane.b32.xlu0 %v407, 8
      %v804 = vpop.permute.xlu0 %803
      %805 = vrot.lane.b32.xlu0 %v408, 8
      %v806 = vpop.permute.xlu0 %805
      %807 = vrot.lane.b32.xlu0 %v409, 8
      %v808 = vpop.permute.xlu0 %807
      %809 = vrot.lane.b32.xlu0 %v410, 8
      %v810 = vpop.permute.xlu0 %809
      %811 = vrot.lane.b32.xlu0 %v411, 8
      %v812 = vpop.permute.xlu0 %811
      %813 = vrot.lane.b32.xlu0 %v412, 8
      %v814 = vpop.permute.xlu0 %813
      %815 = vrot.lane.b32.xlu0 %v413, 8
      %v816 = vpop.permute.xlu0 %815
      %817 = vrot.lane.b32.xlu0 %v414, 8
      %v818 = vpop.permute.xlu0 %817
      %819 = vrot.lane.b32.xlu0 %v415, 8
      %v820 = vpop.permute.xlu0 %819
      %821 = vrot.lane.b32.xlu0 %v416, 8
      %v822 = vpop.permute.xlu0 %821
      %823 = vrot.lane.b32.xlu0 %v417, 8
      %v824 = vpop.permute.xlu0 %823
      %825 = vrot.lane.b32.xlu0 %v418, 8
      %v826 = vpop.permute.xlu0 %825
      %827 = vrot.lane.b32.xlu0 %v419, 8
      %v828 = vpop.permute.xlu0 %827
      %829 = vrot.lane.b32.xlu0 %v420, 8
      %v830 = vpop.permute.xlu0 %829
      %831 = vrot.lane.b32.xlu0 %v421, 8
      %v832 = vpop.permute.xlu0 %831
      %833 = vrot.lane.b32.xlu0 %v422, 8
      %v834 = vpop.permute.xlu0 %833
      %835 = vrot.lane.b32.xlu0 %v423, 8
      %v836 = vpop.permute.xlu0 %835
      %837 = vrot.lane.b32.xlu0 %v424, 8
      %v838 = vpop.permute.xlu0 %837
      %839 = vrot.lane.b32.xlu0 %v425, 8
      %v840 = vpop.permute.xlu0 %839
      %841 = vrot.lane.b32.xlu0 %v426, 8
      %v842 = vpop.permute.xlu0 %841
      %843 = vrot.lane.b32.xlu0 %v427, 8
      %v844 = vpop.permute.xlu0 %843
      %909 = vrot.lane.b32.xlu0 %v428, 12
      %v910 = vpop.permute.xlu0 %909
      %911 = vrot.lane.b32.xlu0 %v429, 12
      %v912 = vpop.permute.xlu0 %911
      %913 = vrot.lane.b32.xlu0 %v430, 12
      %v914 = vpop.permute.xlu0 %913
      %915 = vrot.lane.b32.xlu0 %v431, 12
      %v916 = vpop.permute.xlu0 %915
      %917 = vrot.lane.b32.xlu0 %v432, 12
      %v918 = vpop.permute.xlu0 %917
      %919 = vrot.lane.b32.xlu0 %v433, 12
      %v920 = vpop.permute.xlu0 %919
      %921 = vrot.lane.b32.xlu0 %v434, 12
      %v922 = vpop.permute.xlu0 %921
      %923 = vrot.lane.b32.xlu0 %v435, 12
      %v924 = vpop.permute.xlu0 %923
      %925 = vrot.lane.b32.xlu0 %v436, 12
      %v926 = vpop.permute.xlu0 %925
      %927 = vrot.lane.b32.xlu0 %v437, 12
      %v928 = vpop.permute.xlu0 %927
      %929 = vrot.lane.b32.xlu0 %v438, 12
      %v930 = vpop.permute.xlu0 %929
      %931 = vrot.lane.b32.xlu0 %v439, 12
      %v932 = vpop.permute.xlu0 %931
      %933 = vrot.lane.b32.xlu0 %v440, 12
      %v934 = vpop.permute.xlu0 %933
      %935 = vrot.lane.b32.xlu0 %v441, 12
      %v936 = vpop.permute.xlu0 %935
      %937 = vrot.lane.b32.xlu0 %v442, 12
      %v938 = vpop.permute.xlu0 %937
      %939 = vrot.lane.b32.xlu0 %v443, 12
      %v940 = vpop.permute.xlu0 %939
      %941 = vrot.lane.b32.xlu0 %v444, 12
      %v942 = vpop.permute.xlu0 %941
      %943 = vrot.lane.b32.xlu0 %v445, 12
      %v944 = vpop.permute.xlu0 %943
      %945 = vrot.lane.b32.xlu0 %v446, 12
      %v946 = vpop.permute.xlu0 %945
      %947 = vrot.lane.b32.xlu0 %v447, 12
      %v948 = vpop.permute.xlu0 %947
      %949 = vrot.lane.b32.xlu0 %v448, 12
      %v950 = vpop.permute.xlu0 %949
      %951 = vrot.lane.b32.xlu0 %v449, 12
      %v952 = vpop.permute.xlu0 %951
      %953 = vrot.lane.b32.xlu0 %v450, 12
      %v954 = vpop.permute.xlu0 %953
      %955 = vrot.lane.b32.xlu0 %v451, 12
      %v956 = vpop.permute.xlu0 %955
      %957 = vrot.lane.b32.xlu0 %v452, 12
      %v958 = vpop.permute.xlu0 %957
      %959 = vrot.lane.b32.xlu0 %v453, 12
      %v960 = vpop.permute.xlu0 %959
      %961 = vrot.lane.b32.xlu0 %v454, 12
      %v962 = vpop.permute.xlu0 %961
      %963 = vrot.lane.b32.xlu0 %v455, 12
      %v964 = vpop.permute.xlu0 %963
      %965 = vrot.lane.b32.xlu0 %v456, 12
      %v966 = vpop.permute.xlu0 %965
      %967 = vrot.lane.b32.xlu0 %v457, 12
      %v968 = vpop.permute.xlu0 %967
      %969 = vrot.lane.b32.xlu0 %v458, 12
      %v970 = vpop.permute.xlu0 %969
      %971 = vrot.lane.b32.xlu0 %v459, 12
      %v972 = vpop.permute.xlu0 %971
      %1037 = vrot.lane.b32.xlu0 %v460, 16
      %v1038 = vpop.permute.xlu0 %1037
      %1039 = vrot.lane.b32.xlu0 %v461, 16
      %v1040 = vpop.permute.xlu0 %1039
      %1041 = vrot.lane.b32.xlu0 %v462, 16
      %v1042 = vpop.permute.xlu0 %1041
      %1043 = vrot.lane.b32.xlu0 %v463, 16
      %v1044 = vpop.permute.xlu0 %1043
      %1045 = vrot.lane.b32.xlu0 %v464, 16
      %v1046 = vpop.permute.xlu0 %1045
      %1047 = vrot.lane.b32.xlu0 %v465, 16
      %v1048 = vpop.permute.xlu0 %1047
      %1049 = vrot.lane.b32.xlu0 %v466, 16
      %v1050 = vpop.permute.xlu0 %1049
      %1051 = vrot.lane.b32.xlu0 %v467, 16
      %v1052 = vpop.permute.xlu0 %1051
      %1053 = vrot.lane.b32.xlu0 %v468, 16
      %v1054 = vpop.permute.xlu0 %1053
      %1055 = vrot.lane.b32.xlu0 %v469, 16
      %v1056 = vpop.permute.xlu0 %1055
      %1057 = vrot.lane.b32.xlu0 %v470, 16
      %v1058 = vpop.permute.xlu0 %1057
      %1059 = vrot.lane.b32.xlu0 %v471, 16
      %v1060 = vpop.permute.xlu0 %1059
      %1061 = vrot.lane.b32.xlu0 %v472, 16
      %v1062 = vpop.permute.xlu0 %1061
      %1063 = vrot.lane.b32.xlu0 %v473, 16
      %v1064 = vpop.permute.xlu0 %1063
      %1065 = vrot.lane.b32.xlu0 %v474, 16
      %v1066 = vpop.permute.xlu0 %1065
      %1067 = vrot.lane.b32.xlu0 %v475, 16
      %v1068 = vpop.permute.xlu0 %1067
      %1069 = vrot.lane.b32.xlu0 %v476, 16
      %v1070 = vpop.permute.xlu0 %1069
      %1071 = vrot.lane.b32.xlu0 %v477, 16
      %v1072 = vpop.permute.xlu0 %1071
      %1073 = vrot.lane.b32.xlu0 %v478, 16
      %v1074 = vpop.permute.xlu0 %1073
      %1075 = vrot.lane.b32.xlu0 %v479, 16
      %v1076 = vpop.permute.xlu0 %1075
      %1077 = vrot.lane.b32.xlu0 %v480, 16
      %v1078 = vpop.permute.xlu0 %1077
      %1079 = vrot.lane.b32.xlu0 %v481, 16
      %v1080 = vpop.permute.xlu0 %1079
      %1081 = vrot.lane.b32.xlu0 %v482, 16
      %v1082 = vpop.permute.xlu0 %1081
      %1083 = vrot.lane.b32.xlu0 %v483, 16
      %v1084 = vpop.permute.xlu0 %1083
      %1085 = vrot.lane.b32.xlu0 %v484, 16
      %v1086 = vpop.permute.xlu0 %1085
      %1087 = vrot.lane.b32.xlu0 %v485, 16
      %v1088 = vpop.permute.xlu0 %1087
      %1089 = vrot.lane.b32.xlu0 %v486, 16
      %v1090 = vpop.permute.xlu0 %1089
      %1091 = vrot.lane.b32.xlu0 %v487, 16
      %v1092 = vpop.permute.xlu0 %1091
      %1093 = vrot.lane.b32.xlu0 %v488, 16
      %v1094 = vpop.permute.xlu0 %1093
      %1095 = vrot.lane.b32.xlu0 %v489, 16
      %v1096 = vpop.permute.xlu0 %1095
      %1097 = vrot.lane.b32.xlu0 %v490, 16
      %v1098 = vpop.permute.xlu0 %1097
      %1099 = vrot.lane.b32.xlu0 %v491, 16
      %v1100 = vpop.permute.xlu0 %1099
      %1165 = vrot.lane.b32.xlu0 %v492, 20
      %v1166 = vpop.permute.xlu0 %1165
      %1167 = vrot.lane.b32.xlu0 %v493, 20
      %v1168 = vpop.permute.xlu0 %1167
      %1169 = vrot.lane.b32.xlu0 %v494, 20
      %v1170 = vpop.permute.xlu0 %1169
      %1171 = vrot.lane.b32.xlu0 %v495, 20
      %v1172 = vpop.permute.xlu0 %1171
      %1173 = vrot.lane.b32.xlu0 %v496, 20
      %v1174 = vpop.permute.xlu0 %1173
      %1175 = vrot.lane.b32.xlu0 %v497, 20
      %v1176 = vpop.permute.xlu0 %1175
      %1177 = vrot.lane.b32.xlu0 %v498, 20
      %v1178 = vpop.permute.xlu0 %1177
      %1179 = vrot.lane.b32.xlu0 %v499, 20
      %v1180 = vpop.permute.xlu0 %1179
      %1181 = vrot.lane.b32.xlu0 %v500, 20
      %v1182 = vpop.permute.xlu0 %1181
      %1183 = vrot.lane.b32.xlu0 %v501, 20
      %v1184 = vpop.permute.xlu0 %1183
      %1185 = vrot.lane.b32.xlu0 %v502, 20
      %v1186 = vpop.permute.xlu0 %1185
      %1187 = vrot.lane.b32.xlu0 %v503, 20
      %v1188 = vpop.permute.xlu0 %1187
      %1189 = vrot.lane.b32.xlu0 %v504, 20
      %v1190 = vpop.permute.xlu0 %1189
      %1191 = vrot.lane.b32.xlu0 %v505, 20
      %v1192 = vpop.permute.xlu0 %1191
      %1193 = vrot.lane.b32.xlu0 %v506, 20
      %v1194 = vpop.permute.xlu0 %1193
      %1195 = vrot.lane.b32.xlu0 %v507, 20
      %v1196 = vpop.permute.xlu0 %1195
      %1197 = vrot.lane.b32.xlu0 %v508, 20
      %v1198 = vpop.permute.xlu0 %1197
      %1199 = vrot.lane.b32.xlu0 %v509, 20
      %v1200 = vpop.permute.xlu0 %1199
      %1201 = vrot.lane.b32.xlu0 %v510, 20
      %v1202 = vpop.permute.xlu0 %1201
      %1203 = vrot.lane.b32.xlu0 %v511, 20
      %v1204 = vpop.permute.xlu0 %1203
      %1205 = vrot.lane.b32.xlu0 %v512, 20
      %v1206 = vpop.permute.xlu0 %1205
      %1207 = vrot.lane.b32.xlu0 %v513, 20
      %v1208 = vpop.permute.xlu0 %1207
      %1209 = vrot.lane.b32.xlu0 %v514, 20
      %v1210 = vpop.permute.xlu0 %1209
      %1211 = vrot.lane.b32.xlu0 %v515, 20
      %v1212 = vpop.permute.xlu0 %1211
      %1213 = vrot.lane.b32.xlu0 %v516, 20
      %v1214 = vpop.permute.xlu0 %1213
      %1215 = vrot.lane.b32.xlu0 %v517, 20
      %v1216 = vpop.permute.xlu0 %1215
      %1217 = vrot.lane.b32.xlu0 %v518, 20
      %v1218 = vpop.permute.xlu0 %1217
      %1219 = vrot.lane.b32.xlu0 %v519, 20
      %v1220 = vpop.permute.xlu0 %1219
      %1221 = vrot.lane.b32.xlu0 %v520, 20
      %v1222 = vpop.permute.xlu0 %1221
      %1223 = vrot.lane.b32.xlu0 %v521, 20
      %v1224 = vpop.permute.xlu0 %1223
      %1225 = vrot.lane.b32.xlu0 %v522, 20
      %v1226 = vpop.permute.xlu0 %1225
      %1227 = vrot.lane.b32.xlu0 %v523, 20
      %v1228 = vpop.permute.xlu0 %1227
      %1293 = vrot.lane.b32.xlu0 %v525, 24
      %v1294 = vpop.permute.xlu0 %1293
      %1295 = vrot.lane.b32.xlu0 %v526, 24
      %v1296 = vpop.permute.xlu0 %1295
      %1297 = vrot.lane.b32.xlu0 %v527, 24
      %v1298 = vpop.permute.xlu0 %1297
      %1299 = vrot.lane.b32.xlu0 %v528, 24
      %v1300 = vpop.permute.xlu0 %1299
      %1301 = vrot.lane.b32.xlu0 %v529, 24
      %v1302 = vpop.permute.xlu0 %1301
      %1303 = vrot.lane.b32.xlu0 %v530, 24
      %v1304 = vpop.permute.xlu0 %1303
      %1305 = vrot.lane.b32.xlu0 %v531, 24
      %v1306 = vpop.permute.xlu0 %1305
      %1307 = vrot.lane.b32.xlu0 %v532, 24
      %v1308 = vpop.permute.xlu0 %1307
      %1309 = vrot.lane.b32.xlu0 %v533, 24
      %v1310 = vpop.permute.xlu0 %1309
      %1311 = vrot.lane.b32.xlu0 %v534, 24
      %v1312 = vpop.permute.xlu0 %1311
      %1313 = vrot.lane.b32.xlu0 %v535, 24
      %v1314 = vpop.permute.xlu0 %1313
      %1315 = vrot.lane.b32.xlu0 %v536, 24
      %v1316 = vpop.permute.xlu0 %1315
      %1317 = vrot.lane.b32.xlu0 %v537, 24
      %v1318 = vpop.permute.xlu0 %1317
      %1319 = vrot.lane.b32.xlu0 %v538, 24
      %v1320 = vpop.permute.xlu0 %1319
      %1321 = vrot.lane.b32.xlu0 %v539, 24
      %v1322 = vpop.permute.xlu0 %1321
      %1323 = vrot.lane.b32.xlu0 %v540, 24
      %v1324 = vpop.permute.xlu0 %1323
      %1325 = vrot.lane.b32.xlu0 %v541, 24
      %v1326 = vpop.permute.xlu0 %1325
      %1327 = vrot.lane.b32.xlu0 %v542, 24
      %v1328 = vpop.permute.xlu0 %1327
      %1329 = vrot.lane.b32.xlu0 %v543, 24
      %v1330 = vpop.permute.xlu0 %1329
      %1331 = vrot.lane.b32.xlu0 %v544, 24
      %v1332 = vpop.permute.xlu0 %1331
      %1333 = vrot.lane.b32.xlu0 %v545, 24
      %v1334 = vpop.permute.xlu0 %1333
      %1335 = vrot.lane.b32.xlu0 %v546, 24
      %v1336 = vpop.permute.xlu0 %1335
      %1337 = vrot.lane.b32.xlu0 %v547, 24
      %v1338 = vpop.permute.xlu0 %1337
      %1339 = vrot.lane.b32.xlu0 %v548, 24
      %v1340 = vpop.permute.xlu0 %1339
      %1341 = vrot.lane.b32.xlu0 %v549, 24
      %v1342 = vpop.permute.xlu0 %1341
      %1343 = vrot.lane.b32.xlu0 %v550, 24
      %v1344 = vpop.permute.xlu0 %1343
      %1345 = vrot.lane.b32.xlu0 %v551, 24
      %v1346 = vpop.permute.xlu0 %1345
      %1347 = vrot.lane.b32.xlu0 %v552, 24
      %v1348 = vpop.permute.xlu0 %1347
      %1349 = vrot.lane.b32.xlu0 %v553, 24
      %v1350 = vpop.permute.xlu0 %1349
      %1351 = vrot.lane.b32.xlu0 %v554, 24
      %v1352 = vpop.permute.xlu0 %1351
      %1353 = vrot.lane.b32.xlu0 %v555, 24
      %v1354 = vpop.permute.xlu0 %1353
      %1355 = vrot.lane.b32.xlu0 %v556, 24
      %v1356 = vpop.permute.xlu0 %1355
      %1421 = vrot.lane.b32.xlu0 %v557, 28
      %v1422 = vpop.permute.xlu0 %1421
      %1423 = vrot.lane.b32.xlu0 %v558, 28
      %v1424 = vpop.permute.xlu0 %1423
      %1425 = vrot.lane.b32.xlu0 %v559, 28
      %v1426 = vpop.permute.xlu0 %1425
      %1427 = vrot.lane.b32.xlu0 %v560, 28
      %v1428 = vpop.permute.xlu0 %1427
      %1429 = vrot.lane.b32.xlu0 %v561, 28
      %v1430 = vpop.permute.xlu0 %1429
      %1431 = vrot.lane.b32.xlu0 %v562, 28
      %v1432 = vpop.permute.xlu0 %1431
      %1433 = vrot.lane.b32.xlu0 %v563, 28
      %v1434 = vpop.permute.xlu0 %1433
      %1435 = vrot.lane.b32.xlu0 %v564, 28
      %v1436 = vpop.permute.xlu0 %1435
      %1437 = vrot.lane.b32.xlu0 %v565, 28
      %v1438 = vpop.permute.xlu0 %1437
      %1439 = vrot.lane.b32.xlu0 %v566, 28
      %v1440 = vpop.permute.xlu0 %1439
      %1441 = vrot.lane.b32.xlu0 %v567, 28
      %v1442 = vpop.permute.xlu0 %1441
      %1443 = vrot.lane.b32.xlu0 %v568, 28
      %v1444 = vpop.permute.xlu0 %1443
      %1445 = vrot.lane.b32.xlu0 %v569, 28
      %v1446 = vpop.permute.xlu0 %1445
      %1447 = vrot.lane.b32.xlu0 %v570, 28
      %v1448 = vpop.permute.xlu0 %1447
      %1449 = vrot.lane.b32.xlu0 %v571, 28
      %v1450 = vpop.permute.xlu0 %1449
      %1451 = vrot.lane.b32.xlu0 %v572, 28
      %v1452 = vpop.permute.xlu0 %1451
      %1453 = vrot.lane.b32.xlu0 %v573, 28
      %v1454 = vpop.permute.xlu0 %1453
      %1455 = vrot.lane.b32.xlu0 %v574, 28
      %v1456 = vpop.permute.xlu0 %1455
      %1457 = vrot.lane.b32.xlu0 %v575, 28
      %v1458 = vpop.permute.xlu0 %1457
      %1459 = vrot.lane.b32.xlu0 %v576, 28
      %v1460 = vpop.permute.xlu0 %1459
      %1461 = vrot.lane.b32.xlu0 %v577, 28
      %v1462 = vpop.permute.xlu0 %1461
      %1463 = vrot.lane.b32.xlu0 %v578, 28
      %v1464 = vpop.permute.xlu0 %1463
      %1465 = vrot.lane.b32.xlu0 %v579, 28
      %v1466 = vpop.permute.xlu0 %1465
      %1467 = vrot.lane.b32.xlu0 %v580, 28
      %v1468 = vpop.permute.xlu0 %1467
      %1469 = vrot.lane.b32.xlu0 %v581, 28
      %v1470 = vpop.permute.xlu0 %1469
      %1471 = vrot.lane.b32.xlu0 %v582, 28
      %v1472 = vpop.permute.xlu0 %1471
      %1473 = vrot.lane.b32.xlu0 %v583, 28
      %v1474 = vpop.permute.xlu0 %1473
      %1475 = vrot.lane.b32.xlu0 %v584, 28
      %v1476 = vpop.permute.xlu0 %1475
      %1477 = vrot.lane.b32.xlu0 %v585, 28
      %v1478 = vpop.permute.xlu0 %1477
      %1479 = vrot.lane.b32.xlu0 %v586, 28
      %v1480 = vpop.permute.xlu0 %1479
      %1481 = vrot.lane.b32.xlu0 %v587, 28
      %v1482 = vpop.permute.xlu0 %1481
      %1483 = vrot.lane.b32.xlu0 %v588, 28
      %v1484 = vpop.permute.xlu0 %1483
      %1549 = vrot.lane.b32.xlu0 %v589, 32
      %v1550 = vpop.permute.xlu0 %1549
      %1551 = vrot.lane.b32.xlu0 %v590, 32
      %v1552 = vpop.permute.xlu0 %1551
      %1553 = vrot.lane.b32.xlu0 %v591, 32
      %v1554 = vpop.permute.xlu0 %1553
      %1555 = vrot.lane.b32.xlu0 %v592, 32
      %v1556 = vpop.permute.xlu0 %1555
      %1557 = vrot.lane.b32.xlu0 %v593, 32
      %v1558 = vpop.permute.xlu0 %1557
      %1559 = vrot.lane.b32.xlu0 %v594, 32
      %v1560 = vpop.permute.xlu0 %1559
      %1561 = vrot.lane.b32.xlu0 %v595, 32
      %v1562 = vpop.permute.xlu0 %1561
      %1563 = vrot.lane.b32.xlu0 %v596, 32
      %v1564 = vpop.permute.xlu0 %1563
      %1565 = vrot.lane.b32.xlu0 %v597, 32
      %v1566 = vpop.permute.xlu0 %1565
      %1567 = vrot.lane.b32.xlu0 %v598, 32
      %v1568 = vpop.permute.xlu0 %1567
      %1569 = vrot.lane.b32.xlu0 %v599, 32
      %v1570 = vpop.permute.xlu0 %1569
      %1571 = vrot.lane.b32.xlu0 %v600, 32
      %v1572 = vpop.permute.xlu0 %1571
      %1573 = vrot.lane.b32.xlu0 %v601, 32
      %v1574 = vpop.permute.xlu0 %1573
      %1575 = vrot.lane.b32.xlu0 %v602, 32
      %v1576 = vpop.permute.xlu0 %1575
      %1577 = vrot.lane.b32.xlu0 %v603, 32
      %v1578 = vpop.permute.xlu0 %1577
      %1579 = vrot.lane.b32.xlu0 %v604, 32
      %v1580 = vpop.permute.xlu0 %1579
      %1581 = vrot.lane.b32.xlu0 %v605, 32
      %v1582 = vpop.permute.xlu0 %1581
      %1583 = vrot.lane.b32.xlu0 %v606, 32
      %v1584 = vpop.permute.xlu0 %1583
      %1585 = vrot.lane.b32.xlu0 %v607, 32
      %v1586 = vpop.permute.xlu0 %1585
      %1587 = vrot.lane.b32.xlu0 %v608, 32
      %v1588 = vpop.permute.xlu0 %1587
      %1589 = vrot.lane.b32.xlu0 %v609, 32
      %v1590 = vpop.permute.xlu0 %1589
      %1591 = vrot.lane.b32.xlu0 %v610, 32
      %v1592 = vpop.permute.xlu0 %1591
      %1593 = vrot.lane.b32.xlu0 %v611, 32
      %v1594 = vpop.permute.xlu0 %1593
      %1595 = vrot.lane.b32.xlu0 %v612, 32
      %v1596 = vpop.permute.xlu0 %1595
      %1597 = vrot.lane.b32.xlu0 %v613, 32
      %v1598 = vpop.permute.xlu0 %1597
      %1599 = vrot.lane.b32.xlu0 %v614, 32
      %v1600 = vpop.permute.xlu0 %1599
      %1601 = vrot.lane.b32.xlu0 %v615, 32
      %v1602 = vpop.permute.xlu0 %1601
      %1603 = vrot.lane.b32.xlu0 %v616, 32
      %v1604 = vpop.permute.xlu0 %1603
      %1605 = vrot.lane.b32.xlu0 %v617, 32
      %v1606 = vpop.permute.xlu0 %1605
      %1607 = vrot.lane.b32.xlu0 %v618, 32
      %v1608 = vpop.permute.xlu0 %1607
      %1609 = vrot.lane.b32.xlu0 %v619, 32
      %v1610 = vpop.permute.xlu0 %1609
      %1611 = vrot.lane.b32.xlu0 %v620, 32
      %v1612 = vpop.permute.xlu0 %1611
      %v1645 = vsel %vm258, %v332, %v654
      %v1646 = vsel %vm258, %v333, %v656
      %v1647 = vsel %vm258, %v334, %v658
      %v1648 = vsel %vm258, %v335, %v660
      %v1649 = vsel %vm258, %v336, %v662
      %v1650 = vsel %vm258, %v337, %v664
      %v1651 = vsel %vm258, %v338, %v666
      %v1652 = vsel %vm258, %v339, %v668
      %v1653 = vsel %vm258, %v340, %v670
      %v1654 = vsel %vm258, %v341, %v672
      %v1655 = vsel %vm258, %v342, %v674
      %v1656 = vsel %vm258, %v343, %v676
      %v1657 = vsel %vm258, %v344, %v678
      %v1658 = vsel %vm258, %v345, %v680
      %v1659 = vsel %vm258, %v346, %v682
      %v1660 = vsel %vm258, %v347, %v684
      %v1661 = vsel %vm258, %v348, %v686
      %v1662 = vsel %vm258, %v349, %v688
      %v1663 = vsel %vm258, %v350, %v690
      %v1664 = vsel %vm258, %v351, %v692
      %v1665 = vsel %vm258, %v352, %v694
      %v1666 = vsel %vm258, %v353, %v696
      %v1667 = vsel %vm258, %v354, %v698
      %v1668 = vsel %vm258, %v355, %v700
      %v1669 = vsel %vm258, %v356, %v702
      %v1670 = vsel %vm258, %v357, %v704
      %v1671 = vsel %vm258, %v358, %v706
      %v1672 = vsel %vm258, %v359, %v708
      %v1673 = vsel %vm258, %v360, %v710
      %v1674 = vsel %vm258, %v361, %v712
      %v1675 = vsel %vm258, %v362, %v714
      %v1676 = vsel %vm258, %v363, %v716
      %vm1677 = vcmask 64512
      %v1678 = vsel %vm1677, %v1645, %v782
      %v1679 = vsel %vm1677, %v1646, %v784
      %v1680 = vsel %vm1677, %v1647, %v786
      %v1681 = vsel %vm1677, %v1648, %v788
      %v1682 = vsel %vm1677, %v1649, %v790
      %v1683 = vsel %vm1677, %v1650, %v792
      %v1684 = vsel %vm1677, %v1651, %v794
      %v1685 = vsel %vm1677, %v1652, %v796
      %v1686 = vsel %vm1677, %v1653, %v798
      %v1687 = vsel %vm1677, %v1654, %v800
      %v1688 = vsel %vm1677, %v1655, %v802
      %v1689 = vsel %vm1677, %v1656, %v804
      %v1690 = vsel %vm1677, %v1657, %v806
      %v1691 = vsel %vm1677, %v1658, %v808
      %v1692 = vsel %vm1677, %v1659, %v810
      %v1693 = vsel %vm1677, %v1660, %v812
      %v1694 = vsel %vm1677, %v1661, %v814
      %v1695 = vsel %vm1677, %v1662, %v816
      %v1696 = vsel %vm1677, %v1663, %v818
      %v1697 = vsel %vm1677, %v1664, %v820
      %v1698 = vsel %vm1677, %v1665, %v822
      %v1699 = vsel %vm1677, %v1666, %v824
      %v1700 = vsel %vm1677, %v1667, %v826
      %v1701 = vsel %vm1677, %v1668, %v828
      %v1702 = vsel %vm1677, %v1669, %v830
      %v1703 = vsel %vm1677, %v1670, %v832
      %v1704 = vsel %vm1677, %v1671, %v834
      %v1705 = vsel %vm1677, %v1672, %v836
      %v1706 = vsel %vm1677, %v1673, %v838
      %v1707 = vsel %vm1677, %v1674, %v840
      %v1708 = vsel %vm1677, %v1675, %v842
      %v1709 = vsel %vm1677, %v1676, %v844
      %vm1710 = vcmask 97280
      %v1711 = vsel %vm1710, %v1678, %v910
      %v1712 = vsel %vm1710, %v1679, %v912
      %v1713 = vsel %vm1710, %v1680, %v914
      %v1714 = vsel %vm1710, %v1681, %v916
      %v1715 = vsel %vm1710, %v1682, %v918
      %v1716 = vsel %vm1710, %v1683, %v920
      %v1717 = vsel %vm1710, %v1684, %v922
      %v1718 = vsel %vm1710, %v1685, %v924
      %v1719 = vsel %vm1710, %v1686, %v926
      %v1720 = vsel %vm1710, %v1687, %v928
      %v1721 = vsel %vm1710, %v1688, %v930
      %v1722 = vsel %vm1710, %v1689, %v932
      %v1723 = vsel %vm1710, %v1690, %v934
      %v1724 = vsel %vm1710, %v1691, %v936
      %v1725 = vsel %vm1710, %v1692, %v938
      %v1726 = vsel %vm1710, %v1693, %v940
      %v1727 = vsel %vm1710, %v1694, %v942
      %v1728 = vsel %vm1710, %v1695, %v944
      %v1729 = vsel %vm1710, %v1696, %v946
      %v1730 = vsel %vm1710, %v1697, %v948
      %v1731 = vsel %vm1710, %v1698, %v950
      %v1732 = vsel %vm1710, %v1699, %v952
      %v1733 = vsel %vm1710, %v1700, %v954
      %v1734 = vsel %vm1710, %v1701, %v956
      %v1735 = vsel %vm1710, %v1702, %v958
      %v1736 = vsel %vm1710, %v1703, %v960
      %v1737 = vsel %vm1710, %v1704, %v962
      %v1738 = vsel %vm1710, %v1705, %v964
      %v1739 = vsel %vm1710, %v1706, %v966
      %v1740 = vsel %vm1710, %v1707, %v968
      %v1741 = vsel %vm1710, %v1708, %v970
      %v1742 = vsel %vm1710, %v1709, %v972
      %vm1743 = vcmask 130048
      %v1744 = vsel %vm1743, %v1711, %v1038
      %v1745 = vsel %vm1743, %v1712, %v1040
      %v1746 = vsel %vm1743, %v1713, %v1042
      %v1747 = vsel %vm1743, %v1714, %v1044
      %v1748 = vsel %vm1743, %v1715, %v1046
      %v1749 = vsel %vm1743, %v1716, %v1048
      %v1750 = vsel %vm1743, %v1717, %v1050
      %v1751 = vsel %vm1743, %v1718, %v1052
      %v1752 = vsel %vm1743, %v1719, %v1054
      %v1753 = vsel %vm1743, %v1720, %v1056
      %v1754 = vsel %vm1743, %v1721, %v1058
      %v1755 = vsel %vm1743, %v1722, %v1060
      %v1756 = vsel %vm1743, %v1723, %v1062
      %v1757 = vsel %vm1743, %v1724, %v1064
      %v1758 = vsel %vm1743, %v1725, %v1066
      %v1759 = vsel %vm1743, %v1726, %v1068
      %v1760 = vsel %vm1743, %v1727, %v1070
      %v1761 = vsel %vm1743, %v1728, %v1072
      %v1762 = vsel %vm1743, %v1729, %v1074
      %v1763 = vsel %vm1743, %v1730, %v1076
      %v1764 = vsel %vm1743, %v1731, %v1078
      %v1765 = vsel %vm1743, %v1732, %v1080
      %v1766 = vsel %vm1743, %v1733, %v1082
      %v1767 = vsel %vm1743, %v1734, %v1084
      %v1768 = vsel %vm1743, %v1735, %v1086
      %v1769 = vsel %vm1743, %v1736, %v1088
      %v1770 = vsel %vm1743, %v1737, %v1090
      %v1771 = vsel %vm1743, %v1738, %v1092
      %v1772 = vsel %vm1743, %v1739, %v1094
      %v1773 = vsel %vm1743, %v1740, %v1096
      %v1774 = vsel %vm1743, %v1741, %v1098
      %v1775 = vsel %vm1743, %v1742, %v1100
      %vm1776 = vcmask 162816
      %v1777 = vsel %vm1776, %v1744, %v1166
      %v1778 = vsel %vm1776, %v1745, %v1168
      %v1779 = vsel %vm1776, %v1746, %v1170
      %v1780 = vsel %vm1776, %v1747, %v1172
      %v1781 = vsel %vm1776, %v1748, %v1174
      %v1782 = vsel %vm1776, %v1749, %v1176
      %v1783 = vsel %vm1776, %v1750, %v1178
      %v1784 = vsel %vm1776, %v1751, %v1180
      %v1785 = vsel %vm1776, %v1752, %v1182
      %v1786 = vsel %vm1776, %v1753, %v1184
      %v1787 = vsel %vm1776, %v1754, %v1186
      %v1788 = vsel %vm1776, %v1755, %v1188
      %v1789 = vsel %vm1776, %v1756, %v1190
      %v1790 = vsel %vm1776, %v1757, %v1192
      %v1791 = vsel %vm1776, %v1758, %v1194
      %v1792 = vsel %vm1776, %v1759, %v1196
      %v1793 = vsel %vm1776, %v1760, %v1198
      %v1794 = vsel %vm1776, %v1761, %v1200
      %v1795 = vsel %vm1776, %v1762, %v1202
      %v1796 = vsel %vm1776, %v1763, %v1204
      %v1797 = vsel %vm1776, %v1764, %v1206
      %v1798 = vsel %vm1776, %v1765, %v1208
      %v1799 = vsel %vm1776, %v1766, %v1210
      %v1800 = vsel %vm1776, %v1767, %v1212
      %v1801 = vsel %vm1776, %v1768, %v1214
      %v1802 = vsel %vm1776, %v1769, %v1216
      %v1803 = vsel %vm1776, %v1770, %v1218
      %v1804 = vsel %vm1776, %v1771, %v1220
      %v1805 = vsel %vm1776, %v1772, %v1222
      %v1806 = vsel %vm1776, %v1773, %v1224
      %v1807 = vsel %vm1776, %v1774, %v1226
      %v1808 = vsel %vm1776, %v1775, %v1228
      %vm1809 = vcmask 195584
      %v1810 = vsel %vm1809, %v1777, %v1294
      %v1811 = vsel %vm1809, %v1778, %v1296
      %v1812 = vsel %vm1809, %v1779, %v1298
      %v1813 = vsel %vm1809, %v1780, %v1300
      %v1814 = vsel %vm1809, %v1781, %v1302
      %v1815 = vsel %vm1809, %v1782, %v1304
      %v1816 = vsel %vm1809, %v1783, %v1306
      %v1817 = vsel %vm1809, %v1784, %v1308
      %v1818 = vsel %vm1809, %v1785, %v1310
      %v1819 = vsel %vm1809, %v1786, %v1312
      %v1820 = vsel %vm1809, %v1787, %v1314
      %v1821 = vsel %vm1809, %v1788, %v1316
      %v1822 = vsel %vm1809, %v1789, %v1318
      %v1823 = vsel %vm1809, %v1790, %v1320
      %v1824 = vsel %vm1809, %v1791, %v1322
      %v1825 = vsel %vm1809, %v1792, %v1324
      %v1826 = vsel %vm1809, %v1793, %v1326
      %v1827 = vsel %vm1809, %v1794, %v1328
      %v1828 = vsel %vm1809, %v1795, %v1330
      %v1829 = vsel %vm1809, %v1796, %v1332
      %v1830 = vsel %vm1809, %v1797, %v1334
      %v1831 = vsel %vm1809, %v1798, %v1336
      %v1832 = vsel %vm1809, %v1799, %v1338
      %v1833 = vsel %vm1809, %v1800, %v1340
      %v1834 = vsel %vm1809, %v1801, %v1342
      %v1835 = vsel %vm1809, %v1802, %v1344
      %v1836 = vsel %vm1809, %v1803, %v1346
      %v1837 = vsel %vm1809, %v1804, %v1348
      %v1838 = vsel %vm1809, %v1805, %v1350
      %v1839 = vsel %vm1809, %v1806, %v1352
      %v1840 = vsel %vm1809, %v1807, %v1354
      %v1841 = vsel %vm1809, %v1808, %v1356
      %vm1842 = vcmask 228352
      %v1843 = vsel %vm1842, %v1810, %v1422
      %v1844 = vsel %vm1842, %v1811, %v1424
      %v1845 = vsel %vm1842, %v1812, %v1426
      %v1846 = vsel %vm1842, %v1813, %v1428
      %v1847 = vsel %vm1842, %v1814, %v1430
      %v1848 = vsel %vm1842, %v1815, %v1432
      %v1849 = vsel %vm1842, %v1816, %v1434
      %v1850 = vsel %vm1842, %v1817, %v1436
      %v1851 = vsel %vm1842, %v1818, %v1438
      %v1852 = vsel %vm1842, %v1819, %v1440
      %v1853 = vsel %vm1842, %v1820, %v1442
      %v1854 = vsel %vm1842, %v1821, %v1444
      %v1855 = vsel %vm1842, %v1822, %v1446
      %v1856 = vsel %vm1842, %v1823, %v1448
      %v1857 = vsel %vm1842, %v1824, %v1450
      %v1858 = vsel %vm1842, %v1825, %v1452
      %v1859 = vsel %vm1842, %v1826, %v1454
      %v1860 = vsel %vm1842, %v1827, %v1456
      %v1861 = vsel %vm1842, %v1828, %v1458
      %v1862 = vsel %vm1842, %v1829, %v1460
      %v1863 = vsel %vm1842, %v1830, %v1462
      %v1864 = vsel %vm1842, %v1831, %v1464
      %v1865 = vsel %vm1842, %v1832, %v1466
      %v1866 = vsel %vm1842, %v1833, %v1468
      %v1867 = vsel %vm1842, %v1834, %v1470
      %v1868 = vsel %vm1842, %v1835, %v1472
      %v1869 = vsel %vm1842, %v1836, %v1474
      %v1870 = vsel %vm1842, %v1837, %v1476
      %v1871 = vsel %vm1842, %v1838, %v1478
      %v1872 = vsel %vm1842, %v1839, %v1480
      %v1873 = vsel %vm1842, %v1840, %v1482
      %v1874 = vsel %vm1842, %v1841, %v1484
      %vm1875 = vcmask 261120
      %v1876 = vsel %vm1875, %v1843, %v1550
      %v1877 = vsel %vm1875, %v1844, %v1552
      %v1878 = vsel %vm1875, %v1845, %v1554
      %v1879 = vsel %vm1875, %v1846, %v1556
      %v1880 = vsel %vm1875, %v1847, %v1558
      %v1881 = vsel %vm1875, %v1848, %v1560
      %v1882 = vsel %vm1875, %v1849, %v1562
      %v1883 = vsel %vm1875, %v1850, %v1564
      %v1884 = vsel %vm1875, %v1851, %v1566
      %v1885 = vsel %vm1875, %v1852, %v1568
      %v1886 = vsel %vm1875, %v1853, %v1570
      %v1887 = vsel %vm1875, %v1854, %v1572
      %v1888 = vsel %vm1875, %v1855, %v1574
      %v1889 = vsel %vm1875, %v1856, %v1576
      %v1890 = vsel %vm1875, %v1857, %v1578
      %v1891 = vsel %vm1875, %v1858, %v1580
      %v1892 = vsel %vm1875, %v1859, %v1582
      %v1893 = vsel %vm1875, %v1860, %v1584
      %v1894 = vsel %vm1875, %v1861, %v1586
      %v1895 = vsel %vm1875, %v1862, %v1588
      %v1896 = vsel %vm1875, %v1863, %v1590
      %v1897 = vsel %vm1875, %v1864, %v1592
      %v1898 = vsel %vm1875, %v1865, %v1594
      %v1899 = vsel %vm1875, %v1866, %v1596
      %v1900 = vsel %vm1875, %v1867, %v1598
      %v1901 = vsel %vm1875, %v1868, %v1600
      %v1902 = vsel %vm1875, %v1869, %v1602
      %v1903 = vsel %vm1875, %v1870, %v1604
      %v1904 = vsel %vm1875, %v1871, %v1606
      %v1905 = vsel %vm1875, %v1872, %v1608
      %v1906 = vsel %vm1875, %v1873, %v1610
      %v1907 = vsel %vm1875, %v1874, %v1612
      %vm1908 = vcmask 293888
      %v1909 = vsel %vm1908, %v1876, 0.0
      %v1910 = vsel %vm1908, %v1877, 0.0
      %v1911 = vsel %vm1908, %v1878, 0.0
      %v1912 = vsel %vm1908, %v1879, 0.0
      %v1913 = vsel %vm1908, %v1880, 0.0
      %v1914 = vsel %vm1908, %v1881, 0.0
      %v1915 = vsel %vm1908, %v1882, 0.0
      %v1916 = vsel %vm1908, %v1883, 0.0
      %v1917 = vsel %vm1908, %v1884, 0.0
      %v1918 = vsel %vm1908, %v1885, 0.0
      %v1919 = vsel %vm1908, %v1886, 0.0
      %v1920 = vsel %vm1908, %v1887, 0.0
      %v1921 = vsel %vm1908, %v1888, 0.0
      %v1922 = vsel %vm1908, %v1889, 0.0
      %v1923 = vsel %vm1908, %v1890, 0.0
      %v1924 = vsel %vm1908, %v1891, 0.0
      %v1925 = vsel %vm1908, %v1892, 0.0
      %v1926 = vsel %vm1908, %v1893, 0.0
      %v1927 = vsel %vm1908, %v1894, 0.0
      %v1928 = vsel %vm1908, %v1895, 0.0
      %v1929 = vsel %vm1908, %v1896, 0.0
      %v1930 = vsel %vm1908, %v1897, 0.0
      %v1931 = vsel %vm1908, %v1898, 0.0
      %v1932 = vsel %vm1908, %v1899, 0.0
      %v1933 = vsel %vm1908, %v1900, 0.0
      %v1934 = vsel %vm1908, %v1901, 0.0
      %v1935 = vsel %vm1908, %v1902, 0.0
      %v1936 = vsel %vm1908, %v1903, 0.0
      %v1937 = vsel %vm1908, %v1904, 0.0
      %v1938 = vsel %vm1908, %v1905, 0.0
      %v1939 = vsel %vm1908, %v1906, 0.0
      %v1940 = vsel %vm1908, %v1907, 0.0
      %v1941 = vld [vmem:[%s1] sm:$0xff]
      %v1942 = vld [vmem:[%s1 + $0x8] sm:$0xff]
      %v1943 = vld [vmem:[%s1 + $0x10] sm:$0xff]
      %v1944 = vld [vmem:[%s1 + $0x18] sm:$0xff]
      %v1945 = vld [vmem:[%s1 + $0x20] sm:$0xff]
      %v1946 = vld [vmem:[%s1 + $0x28] sm:$0xff]
      %v1947 = vld [vmem:[%s1 + $0x30] sm:$0xff]
      %v1948 = vld [vmem:[%s1 + $0x38] sm:$0xff]
      %v1949 = vld [vmem:[%s1 + $0x40] sm:$0xff]
      %v1950 = vld [vmem:[%s1 + $0x48] sm:$0xff]
      %v1951 = vld [vmem:[%s1 + $0x50] sm:$0xff]
      %v1952 = vld [vmem:[%s1 + $0x58] sm:$0xff]
      %v1953 = vld [vmem:[%s1 + $0x60] sm:$0xff]
      %v1954 = vld [vmem:[%s1 + $0x68] sm:$0xff]
      %v1955 = vld [vmem:[%s1 + $0x70] sm:$0xff]
      %v1956 = vld [vmem:[%s1 + $0x78] sm:$0xff]
      %v1957 = vld [vmem:[%s2] sm:$0x1]
      %v1959 = vlaneseq
      %v1960 = vshrl.u32 %v1959, 7
      %v1961 = vsub.s32 0, %v1960
      %v1962 = vrot.slane %v1957, %v1961
      %1964 = vmatprep.subr.mxu0 0.0
      %1965 = vmatpush1.msra.mxu0 %v1956
      %1966 = vmatprep.subr.mxu0 0.0
      %1967 = vmatpush1.msra.mxu0 %v1955
      %1968 = vmatprep.subr.mxu0 0.0
      %1969 = vmatpush1.msra.mxu0 %v1954
      %1970 = vmatprep.subr.mxu0 0.0
      %1971 = vmatpush1.msra.mxu0 %v1953
      %1972 = vmatprep.subr.mxu0 0.0
      %1973 = vmatpush1.msra.mxu0 %v1952
      %1974 = vmatprep.subr.mxu0 0.0
      %1975 = vmatpush1.msra.mxu0 %v1951
      %1976 = vmatprep.subr.mxu0 0.0
      %1977 = vmatpush1.msra.mxu0 %v1950
      %1978 = vmatprep.subr.mxu0 0.0
      %1979 = vmatpush1.msra.mxu0 %v1949
      %1980 = vmatprep.subr.mxu0 0.0
      %1981 = vmatpush1.msra.mxu0 %v1948
      %1982 = vmatprep.subr.mxu0 0.0
      %1983 = vmatpush1.msra.mxu0 %v1947
      %1984 = vmatprep.subr.mxu0 0.0
      %1985 = vmatpush1.msra.mxu0 %v1946
      %1986 = vmatprep.subr.mxu0 0.0
      %1987 = vmatpush1.msra.mxu0 %v1945
      %1988 = vmatprep.subr.mxu0 0.0
      %1989 = vmatpush1.msra.mxu0 %v1944
      %1990 = vmatprep.subr.mxu0 0.0
      %1991 = vmatpush1.msra.mxu0 %v1943
      %1992 = vmatprep.subr.mxu0 0.0
      %1993 = vmatpush1.msra.mxu0 %v1942
      %1994 = vmatprep.subr.mxu0 0.0
      %1995 = vmatpush1.msra.mxu0 %v1941
      %1996 = vmatprep.subr.mxu0 0.0
      %1997 = vmatpush2.msra.mxu0 0.0
      %1998 = vmatprep.subr.mxu0 0.0
      %1999 = vmatpush2.msra.mxu0 0.0
      %2000 = vmatprep.subr.mxu0 0.0
      %2001 = vmatpush2.msra.mxu0 0.0
      %2002 = vmatprep.subr.mxu0 0.0
      %2003 = vmatpush2.msra.mxu0 0.0
      %2004 = vmatprep.subr.mxu0 0.0
      %2005 = vmatpush2.msra.mxu0 0.0
      %2006 = vmatprep.subr.mxu0 0.0
      %2007 = vmatpush2.msra.mxu0 0.0
      %2008 = vmatprep.subr.mxu0 0.0
      %2009 = vmatpush2.msra.mxu0 0.0
      %2010 = vmatprep.subr.mxu0 0.0
      %2011 = vmatpush2.msra.mxu0 0.0
      %2012 = vmatprep.subr.mxu0 0.0
      %2013 = vmatpush2.msra.mxu0 0.0
      %2014 = vmatprep.subr.mxu0 0.0
      %2015 = vmatpush2.msra.mxu0 0.0
      %2016 = vmatprep.subr.mxu0 0.0
      %2017 = vmatpush2.msra.mxu0 0.0
      %2018 = vmatprep.subr.mxu0 0.0
      %2019 = vmatpush2.msra.mxu0 0.0
      %2020 = vmatprep.subr.mxu0 0.0
      %2021 = vmatpush2.msra.mxu0 0.0
      %2022 = vmatprep.subr.mxu0 0.0
      %2023 = vmatpush2.msra.mxu0 0.0
      %2024 = vmatprep.subr.mxu0 0.0
      %2025 = vmatpush2.msra.mxu0 0.0
      %2026 = vmatprep.subr.mxu0 0.0
      %2027 = vmatpush2.msra.mxu0 0.0
      %2028 = vmatprep.mubr.f32.mxu0 0.0
      %2029 = vmatmul.mubr.f32.gmra.mxu0 %v1909
      %v2030 = vpop.f32.mrf.mxu0
      %v2031 = vadd.f32 %v1962, %v2030
      %v2032 = vpop.f32.mrf.mxu0
      %2033 = vmatprep.mubr.f32.mxu0 0.0
      %2034 = vmatmul.mubr.f32.gmra.mxu0 %v1910
      %v2035 = vpop.f32.mrf.mxu0
      %v2036 = vadd.f32 %v1962, %v2035
      %v2037 = vpop.f32.mrf.mxu0
      %2038 = vmatprep.mubr.f32.mxu0 0.0
      %2039 = vmatmul.mubr.f32.gmra.mxu0 %v1911
      %v2040 = vpop.f32.mrf.mxu0
      %v2041 = vadd.f32 %v1962, %v2040
      %v2042 = vpop.f32.mrf.mxu0
      %2043 = vmatprep.mubr.f32.mxu0 0.0
      %2044 = vmatmul.mubr.f32.gmra.mxu0 %v1912
      %v2045 = vpop.f32.mrf.mxu0
      %v2046 = vadd.f32 %v1962, %v2045
      %v2047 = vpop.f32.mrf.mxu0
      %2048 = vmatprep.mubr.f32.mxu0 0.0
      %2049 = vmatmul.mubr.f32.gmra.mxu0 %v1913
      %v2050 = vpop.f32.mrf.mxu0
      %v2051 = vadd.f32 %v1962, %v2050
      %v2052 = vpop.f32.mrf.mxu0
      %2053 = vmatprep.mubr.f32.mxu0 0.0
      %2054 = vmatmul.mubr.f32.gmra.mxu0 %v1914
      %v2055 = vpop.f32.mrf.mxu0
      %v2056 = vadd.f32 %v1962, %v2055
      %v2057 = vpop.f32.mrf.mxu0
      %2058 = vmatprep.mubr.f32.mxu0 0.0
      %2059 = vmatmul.mubr.f32.gmra.mxu0 %v1915
      %v2060 = vpop.f32.mrf.mxu0
      %v2061 = vadd.f32 %v1962, %v2060
      %v2062 = vpop.f32.mrf.mxu0
      %2063 = vmatprep.mubr.f32.mxu0 0.0
      %2064 = vmatmul.mubr.f32.gmra.mxu0 %v1916
      %v2065 = vpop.f32.mrf.mxu0
      %v2066 = vadd.f32 %v1962, %v2065
      %v2067 = vpop.f32.mrf.mxu0
      %2068 = vmatprep.mubr.f32.mxu0 0.0
      %2069 = vmatmul.mubr.f32.gmra.mxu0 %v1917
      %v2070 = vpop.f32.mrf.mxu0
      %v2071 = vadd.f32 %v1962, %v2070
      %v2072 = vpop.f32.mrf.mxu0
      %2073 = vmatprep.mubr.f32.mxu0 0.0
      %2074 = vmatmul.mubr.f32.gmra.mxu0 %v1918
      %v2075 = vpop.f32.mrf.mxu0
      %v2076 = vadd.f32 %v1962, %v2075
      %v2077 = vpop.f32.mrf.mxu0
      %2078 = vmatprep.mubr.f32.mxu0 0.0
      %2079 = vmatmul.mubr.f32.gmra.mxu0 %v1919
      %v2080 = vpop.f32.mrf.mxu0
      %v2081 = vadd.f32 %v1962, %v2080
      %v2082 = vpop.f32.mrf.mxu0
      %2083 = vmatprep.mubr.f32.mxu0 0.0
      %2084 = vmatmul.mubr.f32.gmra.mxu0 %v1920
      %v2085 = vpop.f32.mrf.mxu0
      %v2086 = vadd.f32 %v1962, %v2085
      %v2087 = vpop.f32.mrf.mxu0
      %2088 = vmatprep.mubr.f32.mxu0 0.0
      %2089 = vmatmul.mubr.f32.gmra.mxu0 %v1921
      %v2090 = vpop.f32.mrf.mxu0
      %v2091 = vadd.f32 %v1962, %v2090
      %v2092 = vpop.f32.mrf.mxu0
      %2093 = vmatprep.mubr.f32.mxu0 0.0
      %2094 = vmatmul.mubr.f32.gmra.mxu0 %v1922
      %v2095 = vpop.f32.mrf.mxu0
      %v2096 = vadd.f32 %v1962, %v2095
      %v2097 = vpop.f32.mrf.mxu0
      %2098 = vmatprep.mubr.f32.mxu0 0.0
      %2099 = vmatmul.mubr.f32.gmra.mxu0 %v1923
      %v2100 = vpop.f32.mrf.mxu0
      %v2101 = vadd.f32 %v1962, %v2100
      %v2102 = vpop.f32.mrf.mxu0
      %2103 = vmatprep.mubr.f32.mxu0 0.0
      %2104 = vmatmul.mubr.f32.gmra.mxu0 %v1924
      %v2105 = vpop.f32.mrf.mxu0
      %v2106 = vadd.f32 %v1962, %v2105
      %v2107 = vpop.f32.mrf.mxu0
      %2108 = vmatprep.mubr.f32.mxu0 0.0
      %2109 = vmatmul.mubr.f32.gmra.mxu0 %v1925
      %v2110 = vpop.f32.mrf.mxu0
      %v2111 = vadd.f32 %v1962, %v2110
      %v2112 = vpop.f32.mrf.mxu0
      %2113 = vmatprep.mubr.f32.mxu0 0.0
      %2114 = vmatmul.mubr.f32.gmra.mxu0 %v1926
      %v2115 = vpop.f32.mrf.mxu0
      %v2116 = vadd.f32 %v1962, %v2115
      %v2117 = vpop.f32.mrf.mxu0
      %2118 = vmatprep.mubr.f32.mxu0 0.0
      %2119 = vmatmul.mubr.f32.gmra.mxu0 %v1927
      %v2120 = vpop.f32.mrf.mxu0
      %v2121 = vadd.f32 %v1962, %v2120
      %v2122 = vpop.f32.mrf.mxu0
      %2123 = vmatprep.mubr.f32.mxu0 0.0
      %2124 = vmatmul.mubr.f32.gmra.mxu0 %v1928
      %v2125 = vpop.f32.mrf.mxu0
      %v2126 = vadd.f32 %v1962, %v2125
      %v2127 = vpop.f32.mrf.mxu0
      %2128 = vmatprep.mubr.f32.mxu0 0.0
      %2129 = vmatmul.mubr.f32.gmra.mxu0 %v1929
      %v2130 = vpop.f32.mrf.mxu0
      %v2131 = vadd.f32 %v1962, %v2130
      %v2132 = vpop.f32.mrf.mxu0
      %2133 = vmatprep.mubr.f32.mxu0 0.0
      %2134 = vmatmul.mubr.f32.gmra.mxu0 %v1930
      %v2135 = vpop.f32.mrf.mxu0
      %v2136 = vadd.f32 %v1962, %v2135
      %v2137 = vpop.f32.mrf.mxu0
      %2138 = vmatprep.mubr.f32.mxu0 0.0
      %2139 = vmatmul.mubr.f32.gmra.mxu0 %v1931
      %v2140 = vpop.f32.mrf.mxu0
      %v2141 = vadd.f32 %v1962, %v2140
      %v2142 = vpop.f32.mrf.mxu0
      %2143 = vmatprep.mubr.f32.mxu0 0.0
      %2144 = vmatmul.mubr.f32.gmra.mxu0 %v1932
      %v2145 = vpop.f32.mrf.mxu0
      %v2146 = vadd.f32 %v1962, %v2145
      %v2147 = vpop.f32.mrf.mxu0
      %2148 = vmatprep.mubr.f32.mxu0 0.0
      %2149 = vmatmul.mubr.f32.gmra.mxu0 %v1933
      %v2150 = vpop.f32.mrf.mxu0
      %v2151 = vadd.f32 %v1962, %v2150
      %v2152 = vpop.f32.mrf.mxu0
      %2153 = vmatprep.mubr.f32.mxu0 0.0
      %2154 = vmatmul.mubr.f32.gmra.mxu0 %v1934
      %v2155 = vpop.f32.mrf.mxu0
      %v2156 = vadd.f32 %v1962, %v2155
      %v2157 = vpop.f32.mrf.mxu0
      %2158 = vmatprep.mubr.f32.mxu0 0.0
      %2159 = vmatmul.mubr.f32.gmra.mxu0 %v1935
      %v2160 = vpop.f32.mrf.mxu0
      %v2161 = vadd.f32 %v1962, %v2160
      %v2162 = vpop.f32.mrf.mxu0
      %2163 = vmatprep.mubr.f32.mxu0 0.0
      %2164 = vmatmul.mubr.f32.gmra.mxu0 %v1936
      %v2165 = vpop.f32.mrf.mxu0
      %v2166 = vadd.f32 %v1962, %v2165
      %v2167 = vpop.f32.mrf.mxu0
      %2168 = vmatprep.mubr.f32.mxu0 0.0
      %2169 = vmatmul.mubr.f32.gmra.mxu0 %v1937
      %v2170 = vpop.f32.mrf.mxu0
      %v2171 = vadd.f32 %v1962, %v2170
      %v2172 = vpop.f32.mrf.mxu0
      %2173 = vmatprep.mubr.f32.mxu0 0.0
      %2174 = vmatmul.mubr.f32.gmra.mxu0 %v1938
      %v2175 = vpop.f32.mrf.mxu0
      %v2176 = vadd.f32 %v1962, %v2175
      %v2177 = vpop.f32.mrf.mxu0
      %2178 = vmatprep.mubr.f32.mxu0 0.0
      %2179 = vmatmul.mubr.f32.gmra.mxu0 %v1939
      %v2180 = vpop.f32.mrf.mxu0
      %v2181 = vadd.f32 %v1962, %v2180
      %v2182 = vpop.f32.mrf.mxu0
      %2183 = vmatprep.mubr.f32.mxu0 0.0
      %2184 = vmatmul.mubr.f32.gmra.mxu0 %v1940
      %v2185 = vpop.f32.mrf.mxu0
      %v2186 = vadd.f32 %v1962, %v2185
      %v2187 = vpop.f32.mrf.mxu0
      %2188 = vdwg.mxu0
      %v2189 = vmax.f32 %v2031, 0.0
      %v2190 = vmax.f32 %v2036, 0.0
      %v2191 = vmax.f32 %v2041, 0.0
      %v2192 = vmax.f32 %v2046, 0.0
      %v2193 = vmax.f32 %v2051, 0.0
      %v2194 = vmax.f32 %v2056, 0.0
      %v2195 = vmax.f32 %v2061, 0.0
      %v2196 = vmax.f32 %v2066, 0.0
      %v2197 = vmax.f32 %v2071, 0.0
      %v2198 = vmax.f32 %v2076, 0.0
      %v2199 = vmax.f32 %v2081, 0.0
      %v2200 = vmax.f32 %v2086, 0.0
      %v2201 = vmax.f32 %v2091, 0.0
      %v2202 = vmax.f32 %v2096, 0.0
      %v2203 = vmax.f32 %v2101, 0.0
      %v2204 = vmax.f32 %v2106, 0.0
      %v2205 = vmax.f32 %v2111, 0.0
      %v2206 = vmax.f32 %v2116, 0.0
      %v2207 = vmax.f32 %v2121, 0.0
      %v2208 = vmax.f32 %v2126, 0.0
      %v2209 = vmax.f32 %v2131, 0.0
      %v2210 = vmax.f32 %v2136, 0.0
      %v2211 = vmax.f32 %v2141, 0.0
      %v2212 = vmax.f32 %v2146, 0.0
      %v2213 = vmax.f32 %v2151, 0.0
      %v2214 = vmax.f32 %v2156, 0.0
      %v2215 = vmax.f32 %v2161, 0.0
      %v2216 = vmax.f32 %v2166, 0.0
      %v2217 = vmax.f32 %v2171, 0.0
      %v2218 = vmax.f32 %v2176, 0.0
      %v2219 = vmax.f32 %v2181, 0.0
      %v2220 = vmax.f32 %v2186, 0.0
      %s2221 = scalar_lea.vmem [#allocation3], 24
      %2222 = vst.msk [vmem:[%s2221 + $0x1] sm:$0xff] %vm1677, %v2189
      %2223 = vst.msk [vmem:[%s2221 + $0x9] sm:$0xff] %vm1677, %v2190
      %2224 = vst.msk [vmem:[%s2221 + $0x19] sm:$0xff] %vm1677, %v2191
      %2225 = vst.msk [vmem:[%s2221 + $0x21] sm:$0xff] %vm1677, %v2192
      %2226 = vst.msk [vmem:[%s2221 + $0x31] sm:$0xff] %vm1677, %v2193
      %2227 = vst.msk [vmem:[%s2221 + $0x39] sm:$0xff] %vm1677, %v2194
      %2228 = vst.msk [vmem:[%s2221 + $0x49] sm:$0xff] %vm1677, %v2195
      %2229 = vst.msk [vmem:[%s2221 + $0x51] sm:$0xff] %vm1677, %v2196
      %2230 = vst.msk [vmem:[%s2221 + $0x61] sm:$0xff] %vm1677, %v2197
      %2231 = vst.msk [vmem:[%s2221 + $0x69] sm:$0xff] %vm1677, %v2198
      %2232 = vst.msk [vmem:[%s2221 + $0x79] sm:$0xff] %vm1677, %v2199
      %2233 = vst.msk [vmem:[%s2221 + $0x81] sm:$0xff] %vm1677, %v2200
      %2234 = vst.msk [vmem:[%s2221 + $0x91] sm:$0xff] %vm1677, %v2201
      %2235 = vst.msk [vmem:[%s2221 + $0x99] sm:$0xff] %vm1677, %v2202
      %2236 = vst.msk [vmem:[%s2221 + $0xa9] sm:$0xff] %vm1677, %v2203
      %2237 = vst.msk [vmem:[%s2221 + $0xb1] sm:$0xff] %vm1677, %v2204
      %2238 = vst.msk [vmem:[%s2221 + $0xc1] sm:$0xff] %vm1677, %v2205
      %2239 = vst.msk [vmem:[%s2221 + $0xc9] sm:$0xff] %vm1677, %v2206
      %2240 = vst.msk [vmem:[%s2221 + $0xd9] sm:$0xff] %vm1677, %v2207
      %2241 = vst.msk [vmem:[%s2221 + $0xe1] sm:$0xff] %vm1677, %v2208
      %2242 = vst.msk [vmem:[%s2221 + $0xf1] sm:$0xff] %vm1677, %v2209
      %2243 = vst.msk [vmem:[%s2221 + $0xf9] sm:$0xff] %vm1677, %v2210
      %2244 = vst.msk [vmem:[%s2221 + $0x109] sm:$0xff] %vm1677, %v2211
      %2245 = vst.msk [vmem:[%s2221 + $0x111] sm:$0xff] %vm1677, %v2212
      %2246 = vst.msk [vmem:[%s2221 + $0x121] sm:$0xff] %vm1677, %v2213
      %2247 = vst.msk [vmem:[%s2221 + $0x129] sm:$0xff] %vm1677, %v2214
      %2248 = vst.msk [vmem:[%s2221 + $0x139] sm:$0xff] %vm1677, %v2215
      %2249 = vst.msk [vmem:[%s2221 + $0x141] sm:$0xff] %vm1677, %v2216
      %2250 = vst.msk [vmem:[%s2221 + $0x151] sm:$0xff] %vm1677, %v2217
      %2251 = vst.msk [vmem:[%s2221 + $0x159] sm:$0xff] %vm1677, %v2218
      %2252 = vst.msk [vmem:[%s2221 + $0x169] sm:$0xff] %vm1677, %v2219
      %2253 = vst.msk [vmem:[%s2221 + $0x171] sm:$0xff] %vm1677, %v2220
      %2254 = vst.msk [vmem:[#allocation3] sm:$0xff] %vm1677, 0.0
      %2255 = vst.msk [vmem:[#allocation3 + $0x8] sm:$0xff] %vm1677, 0.0
      %vm2256 = vcmask 58368
      %2257 = vst.msk [vmem:[#allocation3 + $0x10] sm:$0x3] %vm2256, 0.0
      %s2258 = scalar_lea.vmem [#allocation3], 408
      %2259 = vst.msk [vmem:[%s2258] sm:$0xff] %vm1677, 0.0
      %2260 = vst.msk [vmem:[%s2258 + $0x8] sm:$0xff] %vm1677, 0.0
      %2261 = vst.msk [vmem:[%s2258 + $0x10] sm:$0x3] %vm2256, 0.0
      %vm2262 = vcmask 57344
      %2263 = vst.msk [vmem:[%s2221] sm:$0x1] %vm2262, 0.0
      %2264 = vst.msk [vmem:[%s2221 + $0x18] sm:$0x1] %vm2262, 0.0
      %2265 = vst.msk [vmem:[%s2221 + $0x30] sm:$0x1] %vm2262, 0.0
      %2266 = vst.msk [vmem:[%s2221 + $0x48] sm:$0x1] %vm2262, 0.0
      %2267 = vst.msk [vmem:[%s2221 + $0x60] sm:$0x1] %vm2262, 0.0
      %2268 = vst.msk [vmem:[%s2221 + $0x78] sm:$0x1] %vm2262, 0.0
      %2269 = vst.msk [vmem:[%s2221 + $0x90] sm:$0x1] %vm2262, 0.0
      %2270 = vst.msk [vmem:[%s2221 + $0xa8] sm:$0x1] %vm2262, 0.0
      %2271 = vst.msk [vmem:[%s2221 + $0xc0] sm:$0x1] %vm2262, 0.0
      %2272 = vst.msk [vmem:[%s2221 + $0xd8] sm:$0x1] %vm2262, 0.0
      %2273 = vst.msk [vmem:[%s2221 + $0xf0] sm:$0x1] %vm2262, 0.0
      %2274 = vst.msk [vmem:[%s2221 + $0x108] sm:$0x1] %vm2262, 0.0
      %2275 = vst.msk [vmem:[%s2221 + $0x120] sm:$0x1] %vm2262, 0.0
      %2276 = vst.msk [vmem:[%s2221 + $0x138] sm:$0x1] %vm2262, 0.0
      %2277 = vst.msk [vmem:[%s2221 + $0x150] sm:$0x1] %vm2262, 0.0
      %2278 = vst.msk [vmem:[%s2221 + $0x168] sm:$0x1] %vm2262, 0.0
      %2279 = vst.msk [vmem:[%s2221 + $0x11] sm:$0x1] %vm2262, 0.0
      %2280 = vst.msk [vmem:[%s2221 + $0x29] sm:$0x1] %vm2262, 0.0
      %2281 = vst.msk [vmem:[%s2221 + $0x41] sm:$0x1] %vm2262, 0.0
      %2282 = vst.msk [vmem:[%s2221 + $0x59] sm:$0x1] %vm2262, 0.0
      %2283 = vst.msk [vmem:[%s2221 + $0x71] sm:$0x1] %vm2262, 0.0
      %2284 = vst.msk [vmem:[%s2221 + $0x89] sm:$0x1] %vm2262, 0.0
      %2285 = vst.msk [vmem:[%s2221 + $0xa1] sm:$0x1] %vm2262, 0.0
      %2286 = vst.msk [vmem:[%s2221 + $0xb9] sm:$0x1] %vm2262, 0.0
      %2287 = vst.msk [vmem:[%s2221 + $0xd1] sm:$0x1] %vm2262, 0.0
      %2288 = vst.msk [vmem:[%s2221 + $0xe9] sm:$0x1] %vm2262, 0.0
      %2289 = vst.msk [vmem:[%s2221 + $0x101] sm:$0x1] %vm2262, 0.0
      %2290 = vst.msk [vmem:[%s2221 + $0x119] sm:$0x1] %vm2262, 0.0
      %2291 = vst.msk [vmem:[%s2221 + $0x131] sm:$0x1] %vm2262, 0.0
      %2292 = vst.msk [vmem:[%s2221 + $0x149] sm:$0x1] %vm2262, 0.0
      %2293 = vst.msk [vmem:[%s2221 + $0x161] sm:$0x1] %vm2262, 0.0
      %2294 = vst.msk [vmem:[%s2221 + $0x179] sm:$0x1] %vm2262, 0.0
      %v2295 = vld [vmem:[#allocation3] sm:$0xff]
      %v2296 = vld [vmem:[#allocation3 + $0x8] sm:$0xff]
      %v2297 = vld [vmem:[#allocation3 + $0x18] sm:$0xff]
      %v2298 = vld [vmem:[#allocation3 + $0x20] sm:$0xff]
      %v2299 = vld [vmem:[#allocation3 + $0x30] sm:$0xff]
      %v2300 = vld [vmem:[#allocation3 + $0x38] sm:$0xff]
      %v2301 = vld [vmem:[#allocation3 + $0x48] sm:$0xff]
      %v2302 = vld [vmem:[#allocation3 + $0x50] sm:$0xff]
      %v2303 = vld [vmem:[#allocation3 + $0x60] sm:$0xff]
      %v2304 = vld [vmem:[#allocation3 + $0x68] sm:$0xff]
      %v2305 = vld [vmem:[#allocation3 + $0x78] sm:$0xff]
      %v2306 = vld [vmem:[#allocation3 + $0x80] sm:$0xff]
      %v2307 = vld [vmem:[#allocation3 + $0x90] sm:$0xff]
      %v2308 = vld [vmem:[#allocation3 + $0x98] sm:$0xff]
      %v2309 = vld [vmem:[#allocation3 + $0xa8] sm:$0xff]
      %v2310 = vld [vmem:[#allocation3 + $0xb0] sm:$0xff]
      %v2311 = vld [vmem:[#allocation3 + $0xc0] sm:$0xff]
      %v2312 = vld [vmem:[#allocation3 + $0xc8] sm:$0xff]
      %v2313 = vld [vmem:[#allocation3 + $0xd8] sm:$0xff]
      %v2314 = vld [vmem:[#allocation3 + $0xe0] sm:$0xff]
      %v2315 = vld [vmem:[#allocation3 + $0xf0] sm:$0xff]
      %v2316 = vld [vmem:[#allocation3 + $0xf8] sm:$0xff]
      %v2317 = vld [vmem:[#allocation3 + $0x108] sm:$0xff]
      %v2318 = vld [vmem:[#allocation3 + $0x110] sm:$0xff]
      %v2319 = vld [vmem:[#allocation3 + $0x120] sm:$0xff]
      %v2320 = vld [vmem:[#allocation3 + $0x128] sm:$0xff]
      %v2321 = vld [vmem:[#allocation3 + $0x138] sm:$0xff]
      %v2322 = vld [vmem:[#allocation3 + $0x140] sm:$0xff]
      %v2323 = vld [vmem:[#allocation3 + $0x150] sm:$0xff]
      %v2324 = vld [vmem:[#allocation3 + $0x158] sm:$0xff]
      %v2325 = vld [vmem:[#allocation3 + $0x168] sm:$0xff]
      %v2326 = vld [vmem:[#allocation3 + $0x170] sm:$0xff]
      %v2327 = vld [vmem:[#allocation3 + $0x1] sm:$0xff]
      %v2328 = vld [vmem:[#allocation3 + $0x9] sm:$0xff]
      %v2329 = vld [vmem:[#allocation3 + $0x19] sm:$0xff]
      %v2330 = vld [vmem:[#allocation3 + $0x21] sm:$0xff]
      %v2331 = vld [vmem:[#allocation3 + $0x31] sm:$0xff]
      %v2332 = vld [vmem:[#allocation3 + $0x39] sm:$0xff]
      %v2333 = vld [vmem:[#allocation3 + $0x49] sm:$0xff]
      %v2334 = vld [vmem:[#allocation3 + $0x51] sm:$0xff]
      %v2335 = vld [vmem:[#allocation3 + $0x61] sm:$0xff]
      %v2336 = vld [vmem:[#allocation3 + $0x69] sm:$0xff]
      %v2337 = vld [vmem:[#allocation3 + $0x79] sm:$0xff]
      %v2338 = vld [vmem:[#allocation3 + $0x81] sm:$0xff]
      %v2339 = vld [vmem:[#allocation3 + $0x91] sm:$0xff]
      %v2340 = vld [vmem:[#allocation3 + $0x99] sm:$0xff]
      %v2341 = vld [vmem:[#allocation3 + $0xa9] sm:$0xff]
      %v2342 = vld [vmem:[#allocation3 + $0xb1] sm:$0xff]
      %v2343 = vld [vmem:[#allocation3 + $0xc1] sm:$0xff]
      %v2344 = vld [vmem:[#allocation3 + $0xc9] sm:$0xff]
      %v2345 = vld [vmem:[#allocation3 + $0xd9] sm:$0xff]
      %v2346 = vld [vmem:[#allocation3 + $0xe1] sm:$0xff]
      %v2347 = vld [vmem:[#allocation3 + $0xf1] sm:$0xff]
      %v2348 = vld [vmem:[#allocation3 + $0xf9] sm:$0xff]
      %v2349 = vld [vmem:[#allocation3 + $0x109] sm:$0xff]
      %v2350 = vld [vmem:[#allocation3 + $0x111] sm:$0xff]
      %v2351 = vld [vmem:[#allocation3 + $0x121] sm:$0xff]
      %v2352 = vld [vmem:[#allocation3 + $0x129] sm:$0xff]
      %v2353 = vld [vmem:[#allocation3 + $0x139] sm:$0xff]
      %v2354 = vld [vmem:[#allocation3 + $0x141] sm:$0xff]
      %v2355 = vld [vmem:[#allocation3 + $0x151] sm:$0xff]
      %v2356 = vld [vmem:[#allocation3 + $0x159] sm:$0xff]
      %v2357 = vld [vmem:[#allocation3 + $0x169] sm:$0xff]
      %v2358 = vld [vmem:[#allocation3 + $0x171] sm:$0xff]
      %v2359 = vld [vmem:[#allocation3 + $0x2] sm:$0xff]
      %v2360 = vld [vmem:[#allocation3 + $0xa] sm:$0xff]
      %v2361 = vld [vmem:[#allocation3 + $0x1a] sm:$0xff]
      %v2362 = vld [vmem:[#allocation3 + $0x22] sm:$0xff]
      %v2363 = vld [vmem:[#allocation3 + $0x32] sm:$0xff]
      %v2364 = vld [vmem:[#allocation3 + $0x3a] sm:$0xff]
      %v2365 = vld [vmem:[#allocation3 + $0x4a] sm:$0xff]
      %v2366 = vld [vmem:[#allocation3 + $0x52] sm:$0xff]
      %v2367 = vld [vmem:[#allocation3 + $0x62] sm:$0xff]
      %v2368 = vld [vmem:[#allocation3 + $0x6a] sm:$0xff]
      %v2369 = vld [vmem:[#allocation3 + $0x7a] sm:$0xff]
      %v2370 = vld [vmem:[#allocation3 + $0x82] sm:$0xff]
      %v2371 = vld [vmem:[#allocation3 + $0x92] sm:$0xff]
      %v2372 = vld [vmem:[#allocation3 + $0x9a] sm:$0xff]
      %v2373 = vld [vmem:[#allocation3 + $0xaa] sm:$0xff]
      %v2374 = vld [vmem:[#allocation3 + $0xb2] sm:$0xff]
      %v2375 = vld [vmem:[#allocation3 + $0xc2] sm:$0xff]
      %v2376 = vld [vmem:[#allocation3 + $0xca] sm:$0xff]
      %v2377 = vld [vmem:[#allocation3 + $0xda] sm:$0xff]
      %v2378 = vld [vmem:[#allocation3 + $0xe2] sm:$0xff]
      %v2379 = vld [vmem:[#allocation3 + $0xf2] sm:$0xff]
      %v2380 = vld [vmem:[#allocation3 + $0xfa] sm:$0xff]
      %v2381 = vld [vmem:[#allocation3 + $0x10a] sm:$0xff]
      %v2382 = vld [vmem:[#allocation3 + $0x112] sm:$0xff]
      %v2383 = vld [vmem:[#allocation3 + $0x122] sm:$0xff]
      %v2384 = vld [vmem:[#allocation3 + $0x12a] sm:$0xff]
      %v2385 = vld [vmem:[#allocation3 + $0x13a] sm:$0xff]
      %v2386 = vld [vmem:[#allocation3 + $0x142] sm:$0xff]
      %v2387 = vld [vmem:[#allocation3 + $0x152] sm:$0xff]
      %v2388 = vld [vmem:[#allocation3 + $0x15a] sm:$0xff]
      %v2389 = vld [vmem:[#allocation3 + $0x16a] sm:$0xff]
      %v2390 = vld [vmem:[#allocation3 + $0x172] sm:$0xff]
      %v2391 = vld [vmem:[%s2221] sm:$0xff]
      %v2392 = vld [vmem:[%s2221 + $0x8] sm:$0xff]
      %v2393 = vld [vmem:[%s2221 + $0x18] sm:$0xff]
      %v2394 = vld [vmem:[%s2221 + $0x20] sm:$0xff]
      %v2395 = vld [vmem:[%s2221 + $0x30] sm:$0xff]
      %v2396 = vld [vmem:[%s2221 + $0x38] sm:$0xff]
      %v2397 = vld [vmem:[%s2221 + $0x48] sm:$0xff]
      %v2398 = vld [vmem:[%s2221 + $0x50] sm:$0xff]
      %v2399 = vld [vmem:[%s2221 + $0x60] sm:$0xff]
      %v2400 = vld [vmem:[%s2221 + $0x68] sm:$0xff]
      %v2401 = vld [vmem:[%s2221 + $0x78] sm:$0xff]
      %v2402 = vld [vmem:[%s2221 + $0x80] sm:$0xff]
      %v2403 = vld [vmem:[%s2221 + $0x90] sm:$0xff]
      %v2404 = vld [vmem:[%s2221 + $0x98] sm:$0xff]
      %v2405 = vld [vmem:[%s2221 + $0xa8] sm:$0xff]
      %v2406 = vld [vmem:[%s2221 + $0xb0] sm:$0xff]
      %v2407 = vld [vmem:[%s2221 + $0xc0] sm:$0xff]
      %v2408 = vld [vmem:[%s2221 + $0xc8] sm:$0xff]
      %v2409 = vld [vmem:[%s2221 + $0xd8] sm:$0xff]
      %v2410 = vld [vmem:[%s2221 + $0xe0] sm:$0xff]
      %v2411 = vld [vmem:[%s2221 + $0xf0] sm:$0xff]
      %v2412 = vld [vmem:[%s2221 + $0xf8] sm:$0xff]
      %v2413 = vld [vmem:[%s2221 + $0x108] sm:$0xff]
      %v2414 = vld [vmem:[%s2221 + $0x110] sm:$0xff]
      %v2415 = vld [vmem:[%s2221 + $0x120] sm:$0xff]
      %v2416 = vld [vmem:[%s2221 + $0x128] sm:$0xff]
      %v2417 = vld [vmem:[%s2221 + $0x138] sm:$0xff]
      %v2418 = vld [vmem:[%s2221 + $0x140] sm:$0xff]
      %v2419 = vld [vmem:[%s2221 + $0x150] sm:$0xff]
      %v2420 = vld [vmem:[%s2221 + $0x158] sm:$0xff]
      %v2421 = vld [vmem:[%s2221 + $0x168] sm:$0xff]
      %v2422 = vld [vmem:[%s2221 + $0x170] sm:$0xff]
      %v2423 = vld [vmem:[%s2221 + $0x1] sm:$0xff]
      %v2424 = vld [vmem:[%s2221 + $0x9] sm:$0xff]
      %v2425 = vld [vmem:[%s2221 + $0x19] sm:$0xff]
      %v2426 = vld [vmem:[%s2221 + $0x21] sm:$0xff]
      %v2427 = vld [vmem:[%s2221 + $0x31] sm:$0xff]
      %v2428 = vld [vmem:[%s2221 + $0x39] sm:$0xff]
      %v2429 = vld [vmem:[%s2221 + $0x49] sm:$0xff]
      %v2430 = vld [vmem:[%s2221 + $0x51] sm:$0xff]
      %v2431 = vld [vmem:[%s2221 + $0x61] sm:$0xff]
      %v2432 = vld [vmem:[%s2221 + $0x69] sm:$0xff]
      %v2433 = vld [vmem:[%s2221 + $0x79] sm:$0xff]
      %v2434 = vld [vmem:[%s2221 + $0x81] sm:$0xff]
      %v2435 = vld [vmem:[%s2221 + $0x91] sm:$0xff]
      %v2436 = vld [vmem:[%s2221 + $0x99] sm:$0xff]
      %v2437 = vld [vmem:[%s2221 + $0xa9] sm:$0xff]
      %v2438 = vld [vmem:[%s2221 + $0xb1] sm:$0xff]
      %v2439 = vld [vmem:[%s2221 + $0xc1] sm:$0xff]
      %v2440 = vld [vmem:[%s2221 + $0xc9] sm:$0xff]
      %v2441 = vld [vmem:[%s2221 + $0xd9] sm:$0xff]
      %v2442 = vld [vmem:[%s2221 + $0xe1] sm:$0xff]
      %v2443 = vld [vmem:[%s2221 + $0xf1] sm:$0xff]
      %v2444 = vld [vmem:[%s2221 + $0xf9] sm:$0xff]
      %v2445 = vld [vmem:[%s2221 + $0x109] sm:$0xff]
      %v2446 = vld [vmem:[%s2221 + $0x111] sm:$0xff]
      %v2447 = vld [vmem:[%s2221 + $0x121] sm:$0xff]
      %v2448 = vld [vmem:[%s2221 + $0x129] sm:$0xff]
      %v2449 = vld [vmem:[%s2221 + $0x139] sm:$0xff]
      %v2450 = vld [vmem:[%s2221 + $0x141] sm:$0xff]
      %v2451 = vld [vmem:[%s2221 + $0x151] sm:$0xff]
      %v2452 = vld [vmem:[%s2221 + $0x159] sm:$0xff]
      %v2453 = vld [vmem:[%s2221 + $0x169] sm:$0xff]
      %v2454 = vld [vmem:[%s2221 + $0x171] sm:$0xff]
      %v2455 = vld [vmem:[%s2221 + $0x2] sm:$0xff]
      %v2456 = vld [vmem:[%s2221 + $0xa] sm:$0xff]
      %v2457 = vld [vmem:[%s2221 + $0x1a] sm:$0xff]
      %v2458 = vld [vmem:[%s2221 + $0x22] sm:$0xff]
      %v2459 = vld [vmem:[%s2221 + $0x32] sm:$0xff]
      %v2460 = vld [vmem:[%s2221 + $0x3a] sm:$0xff]
      %v2461 = vld [vmem:[%s2221 + $0x4a] sm:$0xff]
      %v2462 = vld [vmem:[%s2221 + $0x52] sm:$0xff]
      %v2463 = vld [vmem:[%s2221 + $0x62] sm:$0xff]
      %v2464 = vld [vmem:[%s2221 + $0x6a] sm:$0xff]
      %v2465 = vld [vmem:[%s2221 + $0x7a] sm:$0xff]
      %v2466 = vld [vmem:[%s2221 + $0x82] sm:$0xff]
      %v2467 = vld [vmem:[%s2221 + $0x92] sm:$0xff]
      %v2468 = vld [vmem:[%s2221 + $0x9a] sm:$0xff]
      %v2469 = vld [vmem:[%s2221 + $0xaa] sm:$0xff]
      %v2470 = vld [vmem:[%s2221 + $0xb2] sm:$0xff]
      %v2471 = vld [vmem:[%s2221 + $0xc2] sm:$0xff]
      %v2472 = vld [vmem:[%s2221 + $0xca] sm:$0xff]
      %v2473 = vld [vmem:[%s2221 + $0xda] sm:$0xff]
      %v2474 = vld [vmem:[%s2221 + $0xe2] sm:$0xff]
      %v2475 = vld [vmem:[%s2221 + $0xf2] sm:$0xff]
      %v2476 = vld [vmem:[%s2221 + $0xfa] sm:$0xff]
      %v2477 = vld [vmem:[%s2221 + $0x10a] sm:$0xff]
      %v2478 = vld [vmem:[%s2221 + $0x112] sm:$0xff]
      %v2479 = vld [vmem:[%s2221 + $0x122] sm:$0xff]
      %v2480 = vld [vmem:[%s2221 + $0x12a] sm:$0xff]
      %v2481 = vld [vmem:[%s2221 + $0x13a] sm:$0xff]
      %v2482 = vld [vmem:[%s2221 + $0x142] sm:$0xff]
      %v2483 = vld [vmem:[%s2221 + $0x152] sm:$0xff]
      %v2484 = vld [vmem:[%s2221 + $0x15a] sm:$0xff]
      %v2485 = vld [vmem:[%s2221 + $0x16a] sm:$0xff]
      %v2486 = vld [vmem:[%s2221 + $0x172] sm:$0xff]
      %s2487 = scalar_lea.vmem [#allocation3], 48
      %v2488 = vld [vmem:[%s2487] sm:$0xff]
      %v2489 = vld [vmem:[%s2487 + $0x8] sm:$0xff]
      %v2490 = vld [vmem:[%s2487 + $0x18] sm:$0xff]
      %v2491 = vld [vmem:[%s2487 + $0x20] sm:$0xff]
      %v2492 = vld [vmem:[%s2487 + $0x30] sm:$0xff]
      %v2493 = vld [vmem:[%s2487 + $0x38] sm:$0xff]
      %v2494 = vld [vmem:[%s2487 + $0x48] sm:$0xff]
      %v2495 = vld [vmem:[%s2487 + $0x50] sm:$0xff]
      %v2496 = vld [vmem:[%s2487 + $0x60] sm:$0xff]
      %v2497 = vld [vmem:[%s2487 + $0x68] sm:$0xff]
      %v2498 = vld [vmem:[%s2487 + $0x78] sm:$0xff]
      %v2499 = vld [vmem:[%s2487 + $0x80] sm:$0xff]
      %v2500 = vld [vmem:[%s2487 + $0x90] sm:$0xff]
      %v2501 = vld [vmem:[%s2487 + $0x98] sm:$0xff]
      %v2502 = vld [vmem:[%s2487 + $0xa8] sm:$0xff]
      %v2503 = vld [vmem:[%s2487 + $0xb0] sm:$0xff]
      %v2504 = vld [vmem:[%s2487 + $0xc0] sm:$0xff]
      %v2505 = vld [vmem:[%s2487 + $0xc8] sm:$0xff]
      %v2506 = vld [vmem:[%s2487 + $0xd8] sm:$0xff]
      %v2507 = vld [vmem:[%s2487 + $0xe0] sm:$0xff]
      %v2508 = vld [vmem:[%s2487 + $0xf0] sm:$0xff]
      %v2509 = vld [vmem:[%s2487 + $0xf8] sm:$0xff]
      %v2510 = vld [vmem:[%s2487 + $0x108] sm:$0xff]
      %v2511 = vld [vmem:[%s2487 + $0x110] sm:$0xff]
      %v2512 = vld [vmem:[%s2487 + $0x120] sm:$0xff]
      %v2513 = vld [vmem:[%s2487 + $0x128] sm:$0xff]
      %v2514 = vld [vmem:[%s2487 + $0x138] sm:$0xff]
      %v2515 = vld [vmem:[%s2487 + $0x140] sm:$0xff]
      %v2516 = vld [vmem:[%s2487 + $0x150] sm:$0xff]
      %v2517 = vld [vmem:[%s2487 + $0x158] sm:$0xff]
      %v2518 = vld [vmem:[%s2487 + $0x168] sm:$0xff]
      %v2519 = vld [vmem:[%s2487 + $0x170] sm:$0xff]
      %v2520 = vld [vmem:[%s2487 + $0x1] sm:$0xff]
      %v2521 = vld [vmem:[%s2487 + $0x9] sm:$0xff]
      %v2522 = vld [vmem:[%s2487 + $0x19] sm:$0xff]
      %v2523 = vld [vmem:[%s2487 + $0x21] sm:$0xff]
      %v2524 = vld [vmem:[%s2487 + $0x31] sm:$0xff]
      %v2525 = vld [vmem:[%s2487 + $0x39] sm:$0xff]
      %v2526 = vld [vmem:[%s2487 + $0x49] sm:$0xff]
      %v2527 = vld [vmem:[%s2487 + $0x51] sm:$0xff]
      %v2528 = vld [vmem:[%s2487 + $0x61] sm:$0xff]
      %v2529 = vld [vmem:[%s2487 + $0x69] sm:$0xff]
      %v2530 = vld [vmem:[%s2487 + $0x79] sm:$0xff]
      %v2531 = vld [vmem:[%s2487 + $0x81] sm:$0xff]
      %v2532 = vld [vmem:[%s2487 + $0x91] sm:$0xff]
      %v2533 = vld [vmem:[%s2487 + $0x99] sm:$0xff]
      %v2534 = vld [vmem:[%s2487 + $0xa9] sm:$0xff]
      %v2535 = vld [vmem:[%s2487 + $0xb1] sm:$0xff]
      %v2536 = vld [vmem:[%s2487 + $0xc1] sm:$0xff]
      %v2537 = vld [vmem:[%s2487 + $0xc9] sm:$0xff]
      %v2538 = vld [vmem:[%s2487 + $0xd9] sm:$0xff]
      %v2539 = vld [vmem:[%s2487 + $0xe1] sm:$0xff]
      %v2540 = vld [vmem:[%s2487 + $0xf1] sm:$0xff]
      %v2541 = vld [vmem:[%s2487 + $0xf9] sm:$0xff]
      %v2542 = vld [vmem:[%s2487 + $0x109] sm:$0xff]
      %v2543 = vld [vmem:[%s2487 + $0x111] sm:$0xff]
      %v2544 = vld [vmem:[%s2487 + $0x121] sm:$0xff]
      %v2545 = vld [vmem:[%s2487 + $0x129] sm:$0xff]
      %v2546 = vld [vmem:[%s2487 + $0x139] sm:$0xff]
      %v2547 = vld [vmem:[%s2487 + $0x141] sm:$0xff]
      %v2548 = vld [vmem:[%s2487 + $0x151] sm:$0xff]
      %v2549 = vld [vmem:[%s2487 + $0x159] sm:$0xff]
      %v2550 = vld [vmem:[%s2487 + $0x169] sm:$0xff]
      %v2551 = vld [vmem:[%s2487 + $0x171] sm:$0xff]
      %v2552 = vld [vmem:[%s2487 + $0x2] sm:$0xff]
      %v2553 = vld [vmem:[%s2487 + $0xa] sm:$0xff]
      %v2554 = vld [vmem:[%s2487 + $0x1a] sm:$0xff]
      %v2555 = vld [vmem:[%s2487 + $0x22] sm:$0xff]
      %v2556 = vld [vmem:[%s2487 + $0x32] sm:$0xff]
      %v2557 = vld [vmem:[%s2487 + $0x3a] sm:$0xff]
      %v2558 = vld [vmem:[%s2487 + $0x4a] sm:$0xff]
      %v2559 = vld [vmem:[%s2487 + $0x52] sm:$0xff]
      %v2560 = vld [vmem:[%s2487 + $0x62] sm:$0xff]
      %v2561 = vld [vmem:[%s2487 + $0x6a] sm:$0xff]
      %v2562 = vld [vmem:[%s2487 + $0x7a] sm:$0xff]
      %v2563 = vld [vmem:[%s2487 + $0x82] sm:$0xff]
      %v2564 = vld [vmem:[%s2487 + $0x92] sm:$0xff]
      %v2565 = vld [vmem:[%s2487 + $0x9a] sm:$0xff]
      %v2566 = vld [vmem:[%s2487 + $0xaa] sm:$0xff]
      %v2567 = vld [vmem:[%s2487 + $0xb2] sm:$0xff]
      %v2568 = vld [vmem:[%s2487 + $0xc2] sm:$0xff]
      %v2569 = vld [vmem:[%s2487 + $0xca] sm:$0xff]
      %v2570 = vld [vmem:[%s2487 + $0xda] sm:$0xff]
      %v2571 = vld [vmem:[%s2487 + $0xe2] sm:$0xff]
      %v2572 = vld [vmem:[%s2487 + $0xf2] sm:$0xff]
      %v2573 = vld [vmem:[%s2487 + $0xfa] sm:$0xff]
      %v2574 = vld [vmem:[%s2487 + $0x10a] sm:$0xff]
      %v2575 = vld [vmem:[%s2487 + $0x112] sm:$0xff]
      %v2576 = vld [vmem:[%s2487 + $0x122] sm:$0xff]
      %v2577 = vld [vmem:[%s2487 + $0x12a] sm:$0xff]
      %v2578 = vld [vmem:[%s2487 + $0x13a] sm:$0xff]
      %v2579 = vld [vmem:[%s2487 + $0x142] sm:$0xff]
      %v2580 = vld [vmem:[%s2487 + $0x152] sm:$0xff]
      %v2581 = vld [vmem:[%s2487 + $0x15a] sm:$0xff]
      %v2582 = vld [vmem:[%s2487 + $0x16a] sm:$0xff]
      %v2583 = vld [vmem:[%s2487 + $0x172] sm:$0xff]
      %2616 = vrot.lane.b32.xlu0 %v2327, 8
      %v2617 = vpop.permute.xlu0 %2616
      %2618 = vrot.lane.b32.xlu0 %v2328, 8
      %v2619 = vpop.permute.xlu0 %2618
      %2620 = vrot.lane.b32.xlu0 %v2329, 8
      %v2621 = vpop.permute.xlu0 %2620
      %2622 = vrot.lane.b32.xlu0 %v2330, 8
      %v2623 = vpop.permute.xlu0 %2622
      %2624 = vrot.lane.b32.xlu0 %v2331, 8
      %v2625 = vpop.permute.xlu0 %2624
      %2626 = vrot.lane.b32.xlu0 %v2332, 8
      %v2627 = vpop.permute.xlu0 %2626
      %2628 = vrot.lane.b32.xlu0 %v2333, 8
      %v2629 = vpop.permute.xlu0 %2628
      %2630 = vrot.lane.b32.xlu0 %v2334, 8
      %v2631 = vpop.permute.xlu0 %2630
      %2632 = vrot.lane.b32.xlu0 %v2335, 8
      %v2633 = vpop.permute.xlu0 %2632
      %2634 = vrot.lane.b32.xlu0 %v2336, 8
      %v2635 = vpop.permute.xlu0 %2634
      %2636 = vrot.lane.b32.xlu0 %v2337, 8
      %v2637 = vpop.permute.xlu0 %2636
      %2638 = vrot.lane.b32.xlu0 %v2338, 8
      %v2639 = vpop.permute.xlu0 %2638
      %2640 = vrot.lane.b32.xlu0 %v2339, 8
      %v2641 = vpop.permute.xlu0 %2640
      %2642 = vrot.lane.b32.xlu0 %v2340, 8
      %v2643 = vpop.permute.xlu0 %2642
      %2644 = vrot.lane.b32.xlu0 %v2341, 8
      %v2645 = vpop.permute.xlu0 %2644
      %2646 = vrot.lane.b32.xlu0 %v2342, 8
      %v2647 = vpop.permute.xlu0 %2646
      %2648 = vrot.lane.b32.xlu0 %v2343, 8
      %v2649 = vpop.permute.xlu0 %2648
      %2650 = vrot.lane.b32.xlu0 %v2344, 8
      %v2651 = vpop.permute.xlu0 %2650
      %2652 = vrot.lane.b32.xlu0 %v2345, 8
      %v2653 = vpop.permute.xlu0 %2652
      %2654 = vrot.lane.b32.xlu0 %v2346, 8
      %v2655 = vpop.permute.xlu0 %2654
      %2656 = vrot.lane.b32.xlu0 %v2347, 8
      %v2657 = vpop.permute.xlu0 %2656
      %2658 = vrot.lane.b32.xlu0 %v2348, 8
      %v2659 = vpop.permute.xlu0 %2658
      %2660 = vrot.lane.b32.xlu0 %v2349, 8
      %v2661 = vpop.permute.xlu0 %2660
      %2662 = vrot.lane.b32.xlu0 %v2350, 8
      %v2663 = vpop.permute.xlu0 %2662
      %2664 = vrot.lane.b32.xlu0 %v2351, 8
      %v2665 = vpop.permute.xlu0 %2664
      %2666 = vrot.lane.b32.xlu0 %v2352, 8
      %v2667 = vpop.permute.xlu0 %2666
      %2668 = vrot.lane.b32.xlu0 %v2353, 8
      %v2669 = vpop.permute.xlu0 %2668
      %2670 = vrot.lane.b32.xlu0 %v2354, 8
      %v2671 = vpop.permute.xlu0 %2670
      %2672 = vrot.lane.b32.xlu0 %v2355, 8
      %v2673 = vpop.permute.xlu0 %2672
      %2674 = vrot.lane.b32.xlu0 %v2356, 8
      %v2675 = vpop.permute.xlu0 %2674
      %2676 = vrot.lane.b32.xlu0 %v2357, 8
      %v2677 = vpop.permute.xlu0 %2676
      %2678 = vrot.lane.b32.xlu0 %v2358, 8
      %v2679 = vpop.permute.xlu0 %2678
      %2744 = vrot.lane.b32.xlu0 %v2359, 16
      %v2745 = vpop.permute.xlu0 %2744
      %2746 = vrot.lane.b32.xlu0 %v2360, 16
      %v2747 = vpop.permute.xlu0 %2746
      %2748 = vrot.lane.b32.xlu0 %v2361, 16
      %v2749 = vpop.permute.xlu0 %2748
      %2750 = vrot.lane.b32.xlu0 %v2362, 16
      %v2751 = vpop.permute.xlu0 %2750
      %2752 = vrot.lane.b32.xlu0 %v2363, 16
      %v2753 = vpop.permute.xlu0 %2752
      %2754 = vrot.lane.b32.xlu0 %v2364, 16
      %v2755 = vpop.permute.xlu0 %2754
      %2756 = vrot.lane.b32.xlu0 %v2365, 16
      %v2757 = vpop.permute.xlu0 %2756
      %2758 = vrot.lane.b32.xlu0 %v2366, 16
      %v2759 = vpop.permute.xlu0 %2758
      %2760 = vrot.lane.b32.xlu0 %v2367, 16
      %v2761 = vpop.permute.xlu0 %2760
      %2762 = vrot.lane.b32.xlu0 %v2368, 16
      %v2763 = vpop.permute.xlu0 %2762
      %2764 = vrot.lane.b32.xlu0 %v2369, 16
      %v2765 = vpop.permute.xlu0 %2764
      %2766 = vrot.lane.b32.xlu0 %v2370, 16
      %v2767 = vpop.permute.xlu0 %2766
      %2768 = vrot.lane.b32.xlu0 %v2371, 16
      %v2769 = vpop.permute.xlu0 %2768
      %2770 = vrot.lane.b32.xlu0 %v2372, 16
      %v2771 = vpop.permute.xlu0 %2770
      %2772 = vrot.lane.b32.xlu0 %v2373, 16
      %v2773 = vpop.permute.xlu0 %2772
      %2774 = vrot.lane.b32.xlu0 %v2374, 16
      %v2775 = vpop.permute.xlu0 %2774
      %2776 = vrot.lane.b32.xlu0 %v2375, 16
      %v2777 = vpop.permute.xlu0 %2776
      %2778 = vrot.lane.b32.xlu0 %v2376, 16
      %v2779 = vpop.permute.xlu0 %2778
      %2780 = vrot.lane.b32.xlu0 %v2377, 16
      %v2781 = vpop.permute.xlu0 %2780
      %2782 = vrot.lane.b32.xlu0 %v2378, 16
      %v2783 = vpop.permute.xlu0 %2782
      %2784 = vrot.lane.b32.xlu0 %v2379, 16
      %v2785 = vpop.permute.xlu0 %2784
      %2786 = vrot.lane.b32.xlu0 %v2380, 16
      %v2787 = vpop.permute.xlu0 %2786
      %2788 = vrot.lane.b32.xlu0 %v2381, 16
      %v2789 = vpop.permute.xlu0 %2788
      %2790 = vrot.lane.b32.xlu0 %v2382, 16
      %v2791 = vpop.permute.xlu0 %2790
      %2792 = vrot.lane.b32.xlu0 %v2383, 16
      %v2793 = vpop.permute.xlu0 %2792
      %2794 = vrot.lane.b32.xlu0 %v2384, 16
      %v2795 = vpop.permute.xlu0 %2794
      %2796 = vrot.lane.b32.xlu0 %v2385, 16
      %v2797 = vpop.permute.xlu0 %2796
      %2798 = vrot.lane.b32.xlu0 %v2386, 16
      %v2799 = vpop.permute.xlu0 %2798
      %2800 = vrot.lane.b32.xlu0 %v2387, 16
      %v2801 = vpop.permute.xlu0 %2800
      %2802 = vrot.lane.b32.xlu0 %v2388, 16
      %v2803 = vpop.permute.xlu0 %2802
      %2804 = vrot.lane.b32.xlu0 %v2389, 16
      %v2805 = vpop.permute.xlu0 %2804
      %2806 = vrot.lane.b32.xlu0 %v2390, 16
      %v2807 = vpop.permute.xlu0 %2806
      %2872 = vrot.lane.b32.xlu0 %v2391, 24
      %v2873 = vpop.permute.xlu0 %2872
      %2874 = vrot.lane.b32.xlu0 %v2392, 24
      %v2875 = vpop.permute.xlu0 %2874
      %2876 = vrot.lane.b32.xlu0 %v2393, 24
      %v2877 = vpop.permute.xlu0 %2876
      %2878 = vrot.lane.b32.xlu0 %v2394, 24
      %v2879 = vpop.permute.xlu0 %2878
      %2880 = vrot.lane.b32.xlu0 %v2395, 24
      %v2881 = vpop.permute.xlu0 %2880
      %2882 = vrot.lane.b32.xlu0 %v2396, 24
      %v2883 = vpop.permute.xlu0 %2882
      %2884 = vrot.lane.b32.xlu0 %v2397, 24
      %v2885 = vpop.permute.xlu0 %2884
      %2886 = vrot.lane.b32.xlu0 %v2398, 24
      %v2887 = vpop.permute.xlu0 %2886
      %2888 = vrot.lane.b32.xlu0 %v2399, 24
      %v2889 = vpop.permute.xlu0 %2888
      %2890 = vrot.lane.b32.xlu0 %v2400, 24
      %v2891 = vpop.permute.xlu0 %2890
      %2892 = vrot.lane.b32.xlu0 %v2401, 24
      %v2893 = vpop.permute.xlu0 %2892
      %2894 = vrot.lane.b32.xlu0 %v2402, 24
      %v2895 = vpop.permute.xlu0 %2894
      %2896 = vrot.lane.b32.xlu0 %v2403, 24
      %v2897 = vpop.permute.xlu0 %2896
      %2898 = vrot.lane.b32.xlu0 %v2404, 24
      %v2899 = vpop.permute.xlu0 %2898
      %2900 = vrot.lane.b32.xlu0 %v2405, 24
      %v2901 = vpop.permute.xlu0 %2900
      %2902 = vrot.lane.b32.xlu0 %v2406, 24
      %v2903 = vpop.permute.xlu0 %2902
      %2904 = vrot.lane.b32.xlu0 %v2407, 24
      %v2905 = vpop.permute.xlu0 %2904
      %2906 = vrot.lane.b32.xlu0 %v2408, 24
      %v2907 = vpop.permute.xlu0 %2906
      %2908 = vrot.lane.b32.xlu0 %v2409, 24
      %v2909 = vpop.permute.xlu0 %2908
      %2910 = vrot.lane.b32.xlu0 %v2410, 24
      %v2911 = vpop.permute.xlu0 %2910
      %2912 = vrot.lane.b32.xlu0 %v2411, 24
      %v2913 = vpop.permute.xlu0 %2912
      %2914 = vrot.lane.b32.xlu0 %v2412, 24
      %v2915 = vpop.permute.xlu0 %2914
      %2916 = vrot.lane.b32.xlu0 %v2413, 24
      %v2917 = vpop.permute.xlu0 %2916
      %2918 = vrot.lane.b32.xlu0 %v2414, 24
      %v2919 = vpop.permute.xlu0 %2918
      %2920 = vrot.lane.b32.xlu0 %v2415, 24
      %v2921 = vpop.permute.xlu0 %2920
      %2922 = vrot.lane.b32.xlu0 %v2416, 24
      %v2923 = vpop.permute.xlu0 %2922
      %2924 = vrot.lane.b32.xlu0 %v2417, 24
      %v2925 = vpop.permute.xlu0 %2924
      %2926 = vrot.lane.b32.xlu0 %v2418, 24
      %v2927 = vpop.permute.xlu0 %2926
      %2928 = vrot.lane.b32.xlu0 %v2419, 24
      %v2929 = vpop.permute.xlu0 %2928
      %2930 = vrot.lane.b32.xlu0 %v2420, 24
      %v2931 = vpop.permute.xlu0 %2930
      %2932 = vrot.lane.b32.xlu0 %v2421, 24
      %v2933 = vpop.permute.xlu0 %2932
      %2934 = vrot.lane.b32.xlu0 %v2422, 24
      %v2935 = vpop.permute.xlu0 %2934
      %3000 = vrot.lane.b32.xlu0 %v2423, 32
      %v3001 = vpop.permute.xlu0 %3000
      %3002 = vrot.lane.b32.xlu0 %v2424, 32
      %v3003 = vpop.permute.xlu0 %3002
      %3004 = vrot.lane.b32.xlu0 %v2425, 32
      %v3005 = vpop.permute.xlu0 %3004
      %3006 = vrot.lane.b32.xlu0 %v2426, 32
      %v3007 = vpop.permute.xlu0 %3006
      %3008 = vrot.lane.b32.xlu0 %v2427, 32
      %v3009 = vpop.permute.xlu0 %3008
      %3010 = vrot.lane.b32.xlu0 %v2428, 32
      %v3011 = vpop.permute.xlu0 %3010
      %3012 = vrot.lane.b32.xlu0 %v2429, 32
      %v3013 = vpop.permute.xlu0 %3012
      %3014 = vrot.lane.b32.xlu0 %v2430, 32
      %v3015 = vpop.permute.xlu0 %3014
      %3016 = vrot.lane.b32.xlu0 %v2431, 32
      %v3017 = vpop.permute.xlu0 %3016
      %3018 = vrot.lane.b32.xlu0 %v2432, 32
      %v3019 = vpop.permute.xlu0 %3018
      %3020 = vrot.lane.b32.xlu0 %v2433, 32
      %v3021 = vpop.permute.xlu0 %3020
      %3022 = vrot.lane.b32.xlu0 %v2434, 32
      %v3023 = vpop.permute.xlu0 %3022
      %3024 = vrot.lane.b32.xlu0 %v2435, 32
      %v3025 = vpop.permute.xlu0 %3024
      %3026 = vrot.lane.b32.xlu0 %v2436, 32
      %v3027 = vpop.permute.xlu0 %3026
      %3028 = vrot.lane.b32.xlu0 %v2437, 32
      %v3029 = vpop.permute.xlu0 %3028
      %3030 = vrot.lane.b32.xlu0 %v2438, 32
      %v3031 = vpop.permute.xlu0 %3030
      %3032 = vrot.lane.b32.xlu0 %v2439, 32
      %v3033 = vpop.permute.xlu0 %3032
      %3034 = vrot.lane.b32.xlu0 %v2440, 32
      %v3035 = vpop.permute.xlu0 %3034
      %3036 = vrot.lane.b32.xlu0 %v2441, 32
      %v3037 = vpop.permute.xlu0 %3036
      %3038 = vrot.lane.b32.xlu0 %v2442, 32
      %v3039 = vpop.permute.xlu0 %3038
      %3040 = vrot.lane.b32.xlu0 %v2443, 32
      %v3041 = vpop.permute.xlu0 %3040
      %3042 = vrot.lane.b32.xlu0 %v2444, 32
      %v3043 = vpop.permute.xlu0 %3042
      %3044 = vrot.lane.b32.xlu0 %v2445, 32
      %v3045 = vpop.permute.xlu0 %3044
      %3046 = vrot.lane.b32.xlu0 %v2446, 32
      %v3047 = vpop.permute.xlu0 %3046
      %3048 = vrot.lane.b32.xlu0 %v2447, 32
      %v3049 = vpop.permute.xlu0 %3048
      %3050 = vrot.lane.b32.xlu0 %v2448, 32
      %v3051 = vpop.permute.xlu0 %3050
      %3052 = vrot.lane.b32.xlu0 %v2449, 32
      %v3053 = vpop.permute.xlu0 %3052
      %3054 = vrot.lane.b32.xlu0 %v2450, 32
      %v3055 = vpop.permute.xlu0 %3054
      %3056 = vrot.lane.b32.xlu0 %v2451, 32
      %v3057 = vpop.permute.xlu0 %3056
      %3058 = vrot.lane.b32.xlu0 %v2452, 32
      %v3059 = vpop.permute.xlu0 %3058
      %3060 = vrot.lane.b32.xlu0 %v2453, 32
      %v3061 = vpop.permute.xlu0 %3060
      %3062 = vrot.lane.b32.xlu0 %v2454, 32
      %v3063 = vpop.permute.xlu0 %3062
      %3128 = vrot.lane.b32.xlu0 %v2455, 40
      %v3129 = vpop.permute.xlu0 %3128
      %3130 = vrot.lane.b32.xlu0 %v2456, 40
      %v3131 = vpop.permute.xlu0 %3130
      %3132 = vrot.lane.b32.xlu0 %v2457, 40
      %v3133 = vpop.permute.xlu0 %3132
      %3134 = vrot.lane.b32.xlu0 %v2458, 40
      %v3135 = vpop.permute.xlu0 %3134
      %3136 = vrot.lane.b32.xlu0 %v2459, 40
      %v3137 = vpop.permute.xlu0 %3136
      %3138 = vrot.lane.b32.xlu0 %v2460, 40
      %v3139 = vpop.permute.xlu0 %3138
      %3140 = vrot.lane.b32.xlu0 %v2461, 40
      %v3141 = vpop.permute.xlu0 %3140
      %3142 = vrot.lane.b32.xlu0 %v2462, 40
      %v3143 = vpop.permute.xlu0 %3142
      %3144 = vrot.lane.b32.xlu0 %v2463, 40
      %v3145 = vpop.permute.xlu0 %3144
      %3146 = vrot.lane.b32.xlu0 %v2464, 40
      %v3147 = vpop.permute.xlu0 %3146
      %3148 = vrot.lane.b32.xlu0 %v2465, 40
      %v3149 = vpop.permute.xlu0 %3148
      %3150 = vrot.lane.b32.xlu0 %v2466, 40
      %v3151 = vpop.permute.xlu0 %3150
      %3152 = vrot.lane.b32.xlu0 %v2467, 40
      %v3153 = vpop.permute.xlu0 %3152
      %3154 = vrot.lane.b32.xlu0 %v2468, 40
      %v3155 = vpop.permute.xlu0 %3154
      %3156 = vrot.lane.b32.xlu0 %v2469, 40
      %v3157 = vpop.permute.xlu0 %3156
      %3158 = vrot.lane.b32.xlu0 %v2470, 40
      %v3159 = vpop.permute.xlu0 %3158
      %3160 = vrot.lane.b32.xlu0 %v2471, 40
      %v3161 = vpop.permute.xlu0 %3160
      %3162 = vrot.lane.b32.xlu0 %v2472, 40
      %v3163 = vpop.permute.xlu0 %3162
      %3164 = vrot.lane.b32.xlu0 %v2473, 40
      %v3165 = vpop.permute.xlu0 %3164
      %3166 = vrot.lane.b32.xlu0 %v2474, 40
      %v3167 = vpop.permute.xlu0 %3166
      %3168 = vrot.lane.b32.xlu0 %v2475, 40
      %v3169 = vpop.permute.xlu0 %3168
      %3170 = vrot.lane.b32.xlu0 %v2476, 40
      %v3171 = vpop.permute.xlu0 %3170
      %3172 = vrot.lane.b32.xlu0 %v2477, 40
      %v3173 = vpop.permute.xlu0 %3172
      %3174 = vrot.lane.b32.xlu0 %v2478, 40
      %v3175 = vpop.permute.xlu0 %3174
      %3176 = vrot.lane.b32.xlu0 %v2479, 40
      %v3177 = vpop.permute.xlu0 %3176
      %3178 = vrot.lane.b32.xlu0 %v2480, 40
      %v3179 = vpop.permute.xlu0 %3178
      %3180 = vrot.lane.b32.xlu0 %v2481, 40
      %v3181 = vpop.permute.xlu0 %3180
      %3182 = vrot.lane.b32.xlu0 %v2482, 40
      %v3183 = vpop.permute.xlu0 %3182
      %3184 = vrot.lane.b32.xlu0 %v2483, 40
      %v3185 = vpop.permute.xlu0 %3184
      %3186 = vrot.lane.b32.xlu0 %v2484, 40
      %v3187 = vpop.permute.xlu0 %3186
      %3188 = vrot.lane.b32.xlu0 %v2485, 40
      %v3189 = vpop.permute.xlu0 %3188
      %3190 = vrot.lane.b32.xlu0 %v2486, 40
      %v3191 = vpop.permute.xlu0 %3190
      %3256 = vrot.lane.b32.xlu0 %v2488, 48
      %v3257 = vpop.permute.xlu0 %3256
      %3258 = vrot.lane.b32.xlu0 %v2489, 48
      %v3259 = vpop.permute.xlu0 %3258
      %3260 = vrot.lane.b32.xlu0 %v2490, 48
      %v3261 = vpop.permute.xlu0 %3260
      %3262 = vrot.lane.b32.xlu0 %v2491, 48
      %v3263 = vpop.permute.xlu0 %3262
      %3264 = vrot.lane.b32.xlu0 %v2492, 48
      %v3265 = vpop.permute.xlu0 %3264
      %3266 = vrot.lane.b32.xlu0 %v2493, 48
      %v3267 = vpop.permute.xlu0 %3266
      %3268 = vrot.lane.b32.xlu0 %v2494, 48
      %v3269 = vpop.permute.xlu0 %3268
      %3270 = vrot.lane.b32.xlu0 %v2495, 48
      %v3271 = vpop.permute.xlu0 %3270
      %3272 = vrot.lane.b32.xlu0 %v2496, 48
      %v3273 = vpop.permute.xlu0 %3272
      %3274 = vrot.lane.b32.xlu0 %v2497, 48
      %v3275 = vpop.permute.xlu0 %3274
      %3276 = vrot.lane.b32.xlu0 %v2498, 48
      %v3277 = vpop.permute.xlu0 %3276
      %3278 = vrot.lane.b32.xlu0 %v2499, 48
      %v3279 = vpop.permute.xlu0 %3278
      %3280 = vrot.lane.b32.xlu0 %v2500, 48
      %v3281 = vpop.permute.xlu0 %3280
      %3282 = vrot.lane.b32.xlu0 %v2501, 48
      %v3283 = vpop.permute.xlu0 %3282
      %3284 = vrot.lane.b32.xlu0 %v2502, 48
      %v3285 = vpop.permute.xlu0 %3284
      %3286 = vrot.lane.b32.xlu0 %v2503, 48
      %v3287 = vpop.permute.xlu0 %3286
      %3288 = vrot.lane.b32.xlu0 %v2504, 48
      %v3289 = vpop.permute.xlu0 %3288
      %3290 = vrot.lane.b32.xlu0 %v2505, 48
      %v3291 = vpop.permute.xlu0 %3290
      %3292 = vrot.lane.b32.xlu0 %v2506, 48
      %v3293 = vpop.permute.xlu0 %3292
      %3294 = vrot.lane.b32.xlu0 %v2507, 48
      %v3295 = vpop.permute.xlu0 %3294
      %3296 = vrot.lane.b32.xlu0 %v2508, 48
      %v3297 = vpop.permute.xlu0 %3296
      %3298 = vrot.lane.b32.xlu0 %v2509, 48
      %v3299 = vpop.permute.xlu0 %3298
      %3300 = vrot.lane.b32.xlu0 %v2510, 48
      %v3301 = vpop.permute.xlu0 %3300
      %3302 = vrot.lane.b32.xlu0 %v2511, 48
      %v3303 = vpop.permute.xlu0 %3302
      %3304 = vrot.lane.b32.xlu0 %v2512, 48
      %v3305 = vpop.permute.xlu0 %3304
      %3306 = vrot.lane.b32.xlu0 %v2513, 48
      %v3307 = vpop.permute.xlu0 %3306
      %3308 = vrot.lane.b32.xlu0 %v2514, 48
      %v3309 = vpop.permute.xlu0 %3308
      %3310 = vrot.lane.b32.xlu0 %v2515, 48
      %v3311 = vpop.permute.xlu0 %3310
      %3312 = vrot.lane.b32.xlu0 %v2516, 48
      %v3313 = vpop.permute.xlu0 %3312
      %3314 = vrot.lane.b32.xlu0 %v2517, 48
      %v3315 = vpop.permute.xlu0 %3314
      %3316 = vrot.lane.b32.xlu0 %v2518, 48
      %v3317 = vpop.permute.xlu0 %3316
      %3318 = vrot.lane.b32.xlu0 %v2519, 48
      %v3319 = vpop.permute.xlu0 %3318
      %3384 = vrot.lane.b32.xlu0 %v2520, 56
      %v3385 = vpop.permute.xlu0 %3384
      %3386 = vrot.lane.b32.xlu0 %v2521, 56
      %v3387 = vpop.permute.xlu0 %3386
      %3388 = vrot.lane.b32.xlu0 %v2522, 56
      %v3389 = vpop.permute.xlu0 %3388
      %3390 = vrot.lane.b32.xlu0 %v2523, 56
      %v3391 = vpop.permute.xlu0 %3390
      %3392 = vrot.lane.b32.xlu0 %v2524, 56
      %v3393 = vpop.permute.xlu0 %3392
      %3394 = vrot.lane.b32.xlu0 %v2525, 56
      %v3395 = vpop.permute.xlu0 %3394
      %3396 = vrot.lane.b32.xlu0 %v2526, 56
      %v3397 = vpop.permute.xlu0 %3396
      %3398 = vrot.lane.b32.xlu0 %v2527, 56
      %v3399 = vpop.permute.xlu0 %3398
      %3400 = vrot.lane.b32.xlu0 %v2528, 56
      %v3401 = vpop.permute.xlu0 %3400
      %3402 = vrot.lane.b32.xlu0 %v2529, 56
      %v3403 = vpop.permute.xlu0 %3402
      %3404 = vrot.lane.b32.xlu0 %v2530, 56
      %v3405 = vpop.permute.xlu0 %3404
      %3406 = vrot.lane.b32.xlu0 %v2531, 56
      %v3407 = vpop.permute.xlu0 %3406
      %3408 = vrot.lane.b32.xlu0 %v2532, 56
      %v3409 = vpop.permute.xlu0 %3408
      %3410 = vrot.lane.b32.xlu0 %v2533, 56
      %v3411 = vpop.permute.xlu0 %3410
      %3412 = vrot.lane.b32.xlu0 %v2534, 56
      %v3413 = vpop.permute.xlu0 %3412
      %3414 = vrot.lane.b32.xlu0 %v2535, 56
      %v3415 = vpop.permute.xlu0 %3414
      %3416 = vrot.lane.b32.xlu0 %v2536, 56
      %v3417 = vpop.permute.xlu0 %3416
      %3418 = vrot.lane.b32.xlu0 %v2537, 56
      %v3419 = vpop.permute.xlu0 %3418
      %3420 = vrot.lane.b32.xlu0 %v2538, 56
      %v3421 = vpop.permute.xlu0 %3420
      %3422 = vrot.lane.b32.xlu0 %v2539, 56
      %v3423 = vpop.permute.xlu0 %3422
      %3424 = vrot.lane.b32.xlu0 %v2540, 56
      %v3425 = vpop.permute.xlu0 %3424
      %3426 = vrot.lane.b32.xlu0 %v2541, 56
      %v3427 = vpop.permute.xlu0 %3426
      %3428 = vrot.lane.b32.xlu0 %v2542, 56
      %v3429 = vpop.permute.xlu0 %3428
      %3430 = vrot.lane.b32.xlu0 %v2543, 56
      %v3431 = vpop.permute.xlu0 %3430
      %3432 = vrot.lane.b32.xlu0 %v2544, 56
      %v3433 = vpop.permute.xlu0 %3432
      %3434 = vrot.lane.b32.xlu0 %v2545, 56
      %v3435 = vpop.permute.xlu0 %3434
      %3436 = vrot.lane.b32.xlu0 %v2546, 56
      %v3437 = vpop.permute.xlu0 %3436
      %3438 = vrot.lane.b32.xlu0 %v2547, 56
      %v3439 = vpop.permute.xlu0 %3438
      %3440 = vrot.lane.b32.xlu0 %v2548, 56
      %v3441 = vpop.permute.xlu0 %3440
      %3442 = vrot.lane.b32.xlu0 %v2549, 56
      %v3443 = vpop.permute.xlu0 %3442
      %3444 = vrot.lane.b32.xlu0 %v2550, 56
      %v3445 = vpop.permute.xlu0 %3444
      %3446 = vrot.lane.b32.xlu0 %v2551, 56
      %v3447 = vpop.permute.xlu0 %3446
      %3512 = vrot.lane.b32.xlu0 %v2552, 64
      %v3513 = vpop.permute.xlu0 %3512
      %3514 = vrot.lane.b32.xlu0 %v2553, 64
      %v3515 = vpop.permute.xlu0 %3514
      %3516 = vrot.lane.b32.xlu0 %v2554, 64
      %v3517 = vpop.permute.xlu0 %3516
      %3518 = vrot.lane.b32.xlu0 %v2555, 64
      %v3519 = vpop.permute.xlu0 %3518
      %3520 = vrot.lane.b32.xlu0 %v2556, 64
      %v3521 = vpop.permute.xlu0 %3520
      %3522 = vrot.lane.b32.xlu0 %v2557, 64
      %v3523 = vpop.permute.xlu0 %3522
      %3524 = vrot.lane.b32.xlu0 %v2558, 64
      %v3525 = vpop.permute.xlu0 %3524
      %3526 = vrot.lane.b32.xlu0 %v2559, 64
      %v3527 = vpop.permute.xlu0 %3526
      %3528 = vrot.lane.b32.xlu0 %v2560, 64
      %v3529 = vpop.permute.xlu0 %3528
      %3530 = vrot.lane.b32.xlu0 %v2561, 64
      %v3531 = vpop.permute.xlu0 %3530
      %3532 = vrot.lane.b32.xlu0 %v2562, 64
      %v3533 = vpop.permute.xlu0 %3532
      %3534 = vrot.lane.b32.xlu0 %v2563, 64
      %v3535 = vpop.permute.xlu0 %3534
      %3536 = vrot.lane.b32.xlu0 %v2564, 64
      %v3537 = vpop.permute.xlu0 %3536
      %3538 = vrot.lane.b32.xlu0 %v2565, 64
      %v3539 = vpop.permute.xlu0 %3538
      %3540 = vrot.lane.b32.xlu0 %v2566, 64
      %v3541 = vpop.permute.xlu0 %3540
      %3542 = vrot.lane.b32.xlu0 %v2567, 64
      %v3543 = vpop.permute.xlu0 %3542
      %3544 = vrot.lane.b32.xlu0 %v2568, 64
      %v3545 = vpop.permute.xlu0 %3544
      %3546 = vrot.lane.b32.xlu0 %v2569, 64
      %v3547 = vpop.permute.xlu0 %3546
      %3548 = vrot.lane.b32.xlu0 %v2570, 64
      %v3549 = vpop.permute.xlu0 %3548
      %3550 = vrot.lane.b32.xlu0 %v2571, 64
      %v3551 = vpop.permute.xlu0 %3550
      %3552 = vrot.lane.b32.xlu0 %v2572, 64
      %v3553 = vpop.permute.xlu0 %3552
      %3554 = vrot.lane.b32.xlu0 %v2573, 64
      %v3555 = vpop.permute.xlu0 %3554
      %3556 = vrot.lane.b32.xlu0 %v2574, 64
      %v3557 = vpop.permute.xlu0 %3556
      %3558 = vrot.lane.b32.xlu0 %v2575, 64
      %v3559 = vpop.permute.xlu0 %3558
      %3560 = vrot.lane.b32.xlu0 %v2576, 64
      %v3561 = vpop.permute.xlu0 %3560
      %3562 = vrot.lane.b32.xlu0 %v2577, 64
      %v3563 = vpop.permute.xlu0 %3562
      %3564 = vrot.lane.b32.xlu0 %v2578, 64
      %v3565 = vpop.permute.xlu0 %3564
      %3566 = vrot.lane.b32.xlu0 %v2579, 64
      %v3567 = vpop.permute.xlu0 %3566
      %3568 = vrot.lane.b32.xlu0 %v2580, 64
      %v3569 = vpop.permute.xlu0 %3568
      %3570 = vrot.lane.b32.xlu0 %v2581, 64
      %v3571 = vpop.permute.xlu0 %3570
      %3572 = vrot.lane.b32.xlu0 %v2582, 64
      %v3573 = vpop.permute.xlu0 %3572
      %3574 = vrot.lane.b32.xlu0 %v2583, 64
      %v3575 = vpop.permute.xlu0 %3574
      %v3608 = vsel %vm1677, %v2295, %v2617
      %v3609 = vsel %vm1677, %v2296, %v2619
      %v3610 = vsel %vm1677, %v2297, %v2621
      %v3611 = vsel %vm1677, %v2298, %v2623
      %v3612 = vsel %vm1677, %v2299, %v2625
      %v3613 = vsel %vm1677, %v2300, %v2627
      %v3614 = vsel %vm1677, %v2301, %v2629
      %v3615 = vsel %vm1677, %v2302, %v2631
      %v3616 = vsel %vm1677, %v2303, %v2633
      %v3617 = vsel %vm1677, %v2304, %v2635
      %v3618 = vsel %vm1677, %v2305, %v2637
      %v3619 = vsel %vm1677, %v2306, %v2639
      %v3620 = vsel %vm1677, %v2307, %v2641
      %v3621 = vsel %vm1677, %v2308, %v2643
      %v3622 = vsel %vm1677, %v2309, %v2645
      %v3623 = vsel %vm1677, %v2310, %v2647
      %v3624 = vsel %vm1677, %v2311, %v2649
      %v3625 = vsel %vm1677, %v2312, %v2651
      %v3626 = vsel %vm1677, %v2313, %v2653
      %v3627 = vsel %vm1677, %v2314, %v2655
      %v3628 = vsel %vm1677, %v2315, %v2657
      %v3629 = vsel %vm1677, %v2316, %v2659
      %v3630 = vsel %vm1677, %v2317, %v2661
      %v3631 = vsel %vm1677, %v2318, %v2663
      %v3632 = vsel %vm1677, %v2319, %v2665
      %v3633 = vsel %vm1677, %v2320, %v2667
      %v3634 = vsel %vm1677, %v2321, %v2669
      %v3635 = vsel %vm1677, %v2322, %v2671
      %v3636 = vsel %vm1677, %v2323, %v2673
      %v3637 = vsel %vm1677, %v2324, %v2675
      %v3638 = vsel %vm1677, %v2325, %v2677
      %v3639 = vsel %vm1677, %v2326, %v2679
      %v3640 = vsel %vm1743, %v3608, %v2745
      %v3641 = vsel %vm1743, %v3609, %v2747
      %v3642 = vsel %vm1743, %v3610, %v2749
      %v3643 = vsel %vm1743, %v3611, %v2751
      %v3644 = vsel %vm1743, %v3612, %v2753
      %v3645 = vsel %vm1743, %v3613, %v2755
      %v3646 = vsel %vm1743, %v3614, %v2757
      %v3647 = vsel %vm1743, %v3615, %v2759
      %v3648 = vsel %vm1743, %v3616, %v2761
      %v3649 = vsel %vm1743, %v3617, %v2763
      %v3650 = vsel %vm1743, %v3618, %v2765
      %v3651 = vsel %vm1743, %v3619, %v2767
      %v3652 = vsel %vm1743, %v3620, %v2769
      %v3653 = vsel %vm1743, %v3621, %v2771
      %v3654 = vsel %vm1743, %v3622, %v2773
      %v3655 = vsel %vm1743, %v3623, %v2775
      %v3656 = vsel %vm1743, %v3624, %v2777
      %v3657 = vsel %vm1743, %v3625, %v2779
      %v3658 = vsel %vm1743, %v3626, %v2781
      %v3659 = vsel %vm1743, %v3627, %v2783
      %v3660 = vsel %vm1743, %v3628, %v2785
      %v3661 = vsel %vm1743, %v3629, %v2787
      %v3662 = vsel %vm1743, %v3630, %v2789
      %v3663 = vsel %vm1743, %v3631, %v2791
      %v3664 = vsel %vm1743, %v3632, %v2793
      %v3665 = vsel %vm1743, %v3633, %v2795
      %v3666 = vsel %vm1743, %v3634, %v2797
      %v3667 = vsel %vm1743, %v3635, %v2799
      %v3668 = vsel %vm1743, %v3636, %v2801
      %v3669 = vsel %vm1743, %v3637, %v2803
      %v3670 = vsel %vm1743, %v3638, %v2805
      %v3671 = vsel %vm1743, %v3639, %v2807
      %v3672 = vsel %vm1809, %v3640, %v2873
      %v3673 = vsel %vm1809, %v3641, %v2875
      %v3674 = vsel %vm1809, %v3642, %v2877
      %v3675 = vsel %vm1809, %v3643, %v2879
      %v3676 = vsel %vm1809, %v3644, %v2881
      %v3677 = vsel %vm1809, %v3645, %v2883
      %v3678 = vsel %vm1809, %v3646, %v2885
      %v3679 = vsel %vm1809, %v3647, %v2887
      %v3680 = vsel %vm1809, %v3648, %v2889
      %v3681 = vsel %vm1809, %v3649, %v2891
      %v3682 = vsel %vm1809, %v3650, %v2893
      %v3683 = vsel %vm1809, %v3651, %v2895
      %v3684 = vsel %vm1809, %v3652, %v2897
      %v3685 = vsel %vm1809, %v3653, %v2899
      %v3686 = vsel %vm1809, %v3654, %v2901
      %v3687 = vsel %vm1809, %v3655, %v2903
      %v3688 = vsel %vm1809, %v3656, %v2905
      %v3689 = vsel %vm1809, %v3657, %v2907
      %v3690 = vsel %vm1809, %v3658, %v2909
      %v3691 = vsel %vm1809, %v3659, %v2911
      %v3692 = vsel %vm1809, %v3660, %v2913
      %v3693 = vsel %vm1809, %v3661, %v2915
      %v3694 = vsel %vm1809, %v3662, %v2917
      %v3695 = vsel %vm1809, %v3663, %v2919
      %v3696 = vsel %vm1809, %v3664, %v2921
      %v3697 = vsel %vm1809, %v3665, %v2923
      %v3698 = vsel %vm1809, %v3666, %v2925
      %v3699 = vsel %vm1809, %v3667, %v2927
      %v3700 = vsel %vm1809, %v3668, %v2929
      %v3701 = vsel %vm1809, %v3669, %v2931
      %v3702 = vsel %vm1809, %v3670, %v2933
      %v3703 = vsel %vm1809, %v3671, %v2935
      %v3704 = vsel %vm1875, %v3672, %v3001
      %v3705 = vsel %vm1875, %v3673, %v3003
      %v3706 = vsel %vm1875, %v3674, %v3005
      %v3707 = vsel %vm1875, %v3675, %v3007
      %v3708 = vsel %vm1875, %v3676, %v3009
      %v3709 = vsel %vm1875, %v3677, %v3011
      %v3710 = vsel %vm1875, %v3678, %v3013
      %v3711 = vsel %vm1875, %v3679, %v3015
      %v3712 = vsel %vm1875, %v3680, %v3017
      %v3713 = vsel %vm1875, %v3681, %v3019
      %v3714 = vsel %vm1875, %v3682, %v3021
      %v3715 = vsel %vm1875, %v3683, %v3023
      %v3716 = vsel %vm1875, %v3684, %v3025
      %v3717 = vsel %vm1875, %v3685, %v3027
      %v3718 = vsel %vm1875, %v3686, %v3029
      %v3719 = vsel %vm1875, %v3687, %v3031
      %v3720 = vsel %vm1875, %v3688, %v3033
      %v3721 = vsel %vm1875, %v3689, %v3035
      %v3722 = vsel %vm1875, %v3690, %v3037
      %v3723 = vsel %vm1875, %v3691, %v3039
      %v3724 = vsel %vm1875, %v3692, %v3041
      %v3725 = vsel %vm1875, %v3693, %v3043
      %v3726 = vsel %vm1875, %v3694, %v3045
      %v3727 = vsel %vm1875, %v3695, %v3047
      %v3728 = vsel %vm1875, %v3696, %v3049
      %v3729 = vsel %vm1875, %v3697, %v3051
      %v3730 = vsel %vm1875, %v3698, %v3053
      %v3731 = vsel %vm1875, %v3699, %v3055
      %v3732 = vsel %vm1875, %v3700, %v3057
      %v3733 = vsel %vm1875, %v3701, %v3059
      %v3734 = vsel %vm1875, %v3702, %v3061
      %v3735 = vsel %vm1875, %v3703, %v3063
      %vm3736 = vcmask 326656
      %v3737 = vsel %vm3736, %v3704, %v3129
      %v3738 = vsel %vm3736, %v3705, %v3131
      %v3739 = vsel %vm3736, %v3706, %v3133
      %v3740 = vsel %vm3736, %v3707, %v3135
      %v3741 = vsel %vm3736, %v3708, %v3137
      %v3742 = vsel %vm3736, %v3709, %v3139
      %v3743 = vsel %vm3736, %v3710, %v3141
      %v3744 = vsel %vm3736, %v3711, %v3143
      %v3745 = vsel %vm3736, %v3712, %v3145
      %v3746 = vsel %vm3736, %v3713, %v3147
      %v3747 = vsel %vm3736, %v3714, %v3149
      %v3748 = vsel %vm3736, %v3715, %v3151
      %v3749 = vsel %vm3736, %v3716, %v3153
      %v3750 = vsel %vm3736, %v3717, %v3155
      %v3751 = vsel %vm3736, %v3718, %v3157
      %v3752 = vsel %vm3736, %v3719, %v3159
      %v3753 = vsel %vm3736, %v3720, %v3161
      %v3754 = vsel %vm3736, %v3721, %v3163
      %v3755 = vsel %vm3736, %v3722, %v3165
      %v3756 = vsel %vm3736, %v3723, %v3167
      %v3757 = vsel %vm3736, %v3724, %v3169
      %v3758 = vsel %vm3736, %v3725, %v3171
      %v3759 = vsel %vm3736, %v3726, %v3173
      %v3760 = vsel %vm3736, %v3727, %v3175
      %v3761 = vsel %vm3736, %v3728, %v3177
      %v3762 = vsel %vm3736, %v3729, %v3179
      %v3763 = vsel %vm3736, %v3730, %v3181
      %v3764 = vsel %vm3736, %v3731, %v3183
      %v3765 = vsel %vm3736, %v3732, %v3185
      %v3766 = vsel %vm3736, %v3733, %v3187
      %v3767 = vsel %vm3736, %v3734, %v3189
      %v3768 = vsel %vm3736, %v3735, %v3191
      %vm3769 = vcmask 392192
      %v3770 = vsel %vm3769, %v3737, %v3257
      %v3771 = vsel %vm3769, %v3738, %v3259
      %v3772 = vsel %vm3769, %v3739, %v3261
      %v3773 = vsel %vm3769, %v3740, %v3263
      %v3774 = vsel %vm3769, %v3741, %v3265
      %v3775 = vsel %vm3769, %v3742, %v3267
      %v3776 = vsel %vm3769, %v3743, %v3269
      %v3777 = vsel %vm3769, %v3744, %v3271
      %v3778 = vsel %vm3769, %v3745, %v3273
      %v3779 = vsel %vm3769, %v3746, %v3275
      %v3780 = vsel %vm3769, %v3747, %v3277
      %v3781 = vsel %vm3769, %v3748, %v3279
      %v3782 = vsel %vm3769, %v3749, %v3281
      %v3783 = vsel %vm3769, %v3750, %v3283
      %v3784 = vsel %vm3769, %v3751, %v3285
      %v3785 = vsel %vm3769, %v3752, %v3287
      %v3786 = vsel %vm3769, %v3753, %v3289
      %v3787 = vsel %vm3769, %v3754, %v3291
      %v3788 = vsel %vm3769, %v3755, %v3293
      %v3789 = vsel %vm3769, %v3756, %v3295
      %v3790 = vsel %vm3769, %v3757, %v3297
      %v3791 = vsel %vm3769, %v3758, %v3299
      %v3792 = vsel %vm3769, %v3759, %v3301
      %v3793 = vsel %vm3769, %v3760, %v3303
      %v3794 = vsel %vm3769, %v3761, %v3305
      %v3795 = vsel %vm3769, %v3762, %v3307
      %v3796 = vsel %vm3769, %v3763, %v3309
      %v3797 = vsel %vm3769, %v3764, %v3311
      %v3798 = vsel %vm3769, %v3765, %v3313
      %v3799 = vsel %vm3769, %v3766, %v3315
      %v3800 = vsel %vm3769, %v3767, %v3317
      %v3801 = vsel %vm3769, %v3768, %v3319
      %vm3802 = vcmask 457728
      %v3803 = vsel %vm3802, %v3770, %v3385
      %v3804 = vsel %vm3802, %v3771, %v3387
      %v3805 = vsel %vm3802, %v3772, %v3389
      %v3806 = vsel %vm3802, %v3773, %v3391
      %v3807 = vsel %vm3802, %v3774, %v3393
      %v3808 = vsel %vm3802, %v3775, %v3395
      %v3809 = vsel %vm3802, %v3776, %v3397
      %v3810 = vsel %vm3802, %v3777, %v3399
      %v3811 = vsel %vm3802, %v3778, %v3401
      %v3812 = vsel %vm3802, %v3779, %v3403
      %v3813 = vsel %vm3802, %v3780, %v3405
      %v3814 = vsel %vm3802, %v3781, %v3407
      %v3815 = vsel %vm3802, %v3782, %v3409
      %v3816 = vsel %vm3802, %v3783, %v3411
      %v3817 = vsel %vm3802, %v3784, %v3413
      %v3818 = vsel %vm3802, %v3785, %v3415
      %v3819 = vsel %vm3802, %v3786, %v3417
      %v3820 = vsel %vm3802, %v3787, %v3419
      %v3821 = vsel %vm3802, %v3788, %v3421
      %v3822 = vsel %vm3802, %v3789, %v3423
      %v3823 = vsel %vm3802, %v3790, %v3425
      %v3824 = vsel %vm3802, %v3791, %v3427
      %v3825 = vsel %vm3802, %v3792, %v3429
      %v3826 = vsel %vm3802, %v3793, %v3431
      %v3827 = vsel %vm3802, %v3794, %v3433
      %v3828 = vsel %vm3802, %v3795, %v3435
      %v3829 = vsel %vm3802, %v3796, %v3437
      %v3830 = vsel %vm3802, %v3797, %v3439
      %v3831 = vsel %vm3802, %v3798, %v3441
      %v3832 = vsel %vm3802, %v3799, %v3443
      %v3833 = vsel %vm3802, %v3800, %v3445
      %v3834 = vsel %vm3802, %v3801, %v3447
      %vm3835 = vcmask 523264
      %v3836 = vsel %vm3835, %v3803, %v3513
      %v3837 = vsel %vm3835, %v3804, %v3515
      %v3838 = vsel %vm3835, %v3805, %v3517
      %v3839 = vsel %vm3835, %v3806, %v3519
      %v3840 = vsel %vm3835, %v3807, %v3521
      %v3841 = vsel %vm3835, %v3808, %v3523
      %v3842 = vsel %vm3835, %v3809, %v3525
      %v3843 = vsel %vm3835, %v3810, %v3527
      %v3844 = vsel %vm3835, %v3811, %v3529
      %v3845 = vsel %vm3835, %v3812, %v3531
      %v3846 = vsel %vm3835, %v3813, %v3533
      %v3847 = vsel %vm3835, %v3814, %v3535
      %v3848 = vsel %vm3835, %v3815, %v3537
      %v3849 = vsel %vm3835, %v3816, %v3539
      %v3850 = vsel %vm3835, %v3817, %v3541
      %v3851 = vsel %vm3835, %v3818, %v3543
      %v3852 = vsel %vm3835, %v3819, %v3545
      %v3853 = vsel %vm3835, %v3820, %v3547
      %v3854 = vsel %vm3835, %v3821, %v3549
      %v3855 = vsel %vm3835, %v3822, %v3551
      %v3856 = vsel %vm3835, %v3823, %v3553
      %v3857 = vsel %vm3835, %v3824, %v3555
      %v3858 = vsel %vm3835, %v3825, %v3557
      %v3859 = vsel %vm3835, %v3826, %v3559
      %v3860 = vsel %vm3835, %v3827, %v3561
      %v3861 = vsel %vm3835, %v3828, %v3563
      %v3862 = vsel %vm3835, %v3829, %v3565
      %v3863 = vsel %vm3835, %v3830, %v3567
      %v3864 = vsel %vm3835, %v3831, %v3569
      %v3865 = vsel %vm3835, %v3832, %v3571
      %v3866 = vsel %vm3835, %v3833, %v3573
      %v3867 = vsel %vm3835, %v3834, %v3575
      %vm3868 = vcmask 588800
      %v3869 = vsel %vm3868, %v3836, 0.0
      %v3870 = vsel %vm3868, %v3837, 0.0
      %v3871 = vsel %vm3868, %v3838, 0.0
      %v3872 = vsel %vm3868, %v3839, 0.0
      %v3873 = vsel %vm3868, %v3840, 0.0
      %v3874 = vsel %vm3868, %v3841, 0.0
      %v3875 = vsel %vm3868, %v3842, 0.0
      %v3876 = vsel %vm3868, %v3843, 0.0
      %v3877 = vsel %vm3868, %v3844, 0.0
      %v3878 = vsel %vm3868, %v3845, 0.0
      %v3879 = vsel %vm3868, %v3846, 0.0
      %v3880 = vsel %vm3868, %v3847, 0.0
      %v3881 = vsel %vm3868, %v3848, 0.0
      %v3882 = vsel %vm3868, %v3849, 0.0
      %v3883 = vsel %vm3868, %v3850, 0.0
      %v3884 = vsel %vm3868, %v3851, 0.0
      %v3885 = vsel %vm3868, %v3852, 0.0
      %v3886 = vsel %vm3868, %v3853, 0.0
      %v3887 = vsel %vm3868, %v3854, 0.0
      %v3888 = vsel %vm3868, %v3855, 0.0
      %v3889 = vsel %vm3868, %v3856, 0.0
      %v3890 = vsel %vm3868, %v3857, 0.0
      %v3891 = vsel %vm3868, %v3858, 0.0
      %v3892 = vsel %vm3868, %v3859, 0.0
      %v3893 = vsel %vm3868, %v3860, 0.0
      %v3894 = vsel %vm3868, %v3861, 0.0
      %v3895 = vsel %vm3868, %v3862, 0.0
      %v3896 = vsel %vm3868, %v3863, 0.0
      %v3897 = vsel %vm3868, %v3864, 0.0
      %v3898 = vsel %vm3868, %v3865, 0.0
      %v3899 = vsel %vm3868, %v3866, 0.0
      %v3900 = vsel %vm3868, %v3867, 0.0
      %v3901 = vld [vmem:[%s3] sm:$0xff]
      %v3902 = vld [vmem:[%s3 + $0x8] sm:$0xff]
      %v3903 = vld [vmem:[%s3 + $0x10] sm:$0xff]
      %v3904 = vld [vmem:[%s3 + $0x18] sm:$0xff]
      %v3905 = vld [vmem:[%s3 + $0x20] sm:$0xff]
      %v3906 = vld [vmem:[%s3 + $0x28] sm:$0xff]
      %v3907 = vld [vmem:[%s3 + $0x30] sm:$0xff]
      %v3908 = vld [vmem:[%s3 + $0x38] sm:$0xff]
      %v3909 = vld [vmem:[%s3 + $0x40] sm:$0xff]
      %v3910 = vld [vmem:[%s3 + $0x48] sm:$0xff]
      %v3911 = vld [vmem:[%s3 + $0x50] sm:$0xff]
      %v3912 = vld [vmem:[%s3 + $0x58] sm:$0xff]
      %v3913 = vld [vmem:[%s3 + $0x60] sm:$0xff]
      %v3914 = vld [vmem:[%s3 + $0x68] sm:$0xff]
      %v3915 = vld [vmem:[%s3 + $0x70] sm:$0xff]
      %v3916 = vld [vmem:[%s3 + $0x78] sm:$0xff]
      %v3917 = vld [vmem:[%s4] sm:$0x1]
      %v3919 = vlaneseq
      %v3920 = vshrl.u32 %v3919, 7
      %v3921 = vsub.s32 0, %v3920
      %v3922 = vrot.slane %v3917, %v3921
      %3924 = vmatprep.subr.mxu0 0.0
      %3925 = vmatpush1.msra.mxu0 %v3916
      %3926 = vmatprep.subr.mxu0 0.0
      %3927 = vmatpush1.msra.mxu0 %v3915
      %3928 = vmatprep.subr.mxu0 0.0
      %3929 = vmatpush1.msra.mxu0 %v3914
      %3930 = vmatprep.subr.mxu0 0.0
      %3931 = vmatpush1.msra.mxu0 %v3913
      %3932 = vmatprep.subr.mxu0 0.0
      %3933 = vmatpush1.msra.mxu0 %v3912
      %3934 = vmatprep.subr.mxu0 0.0
      %3935 = vmatpush1.msra.mxu0 %v3911
      %3936 = vmatprep.subr.mxu0 0.0
      %3937 = vmatpush1.msra.mxu0 %v3910
      %3938 = vmatprep.subr.mxu0 0.0
      %3939 = vmatpush1.msra.mxu0 %v3909
      %3940 = vmatprep.subr.mxu0 0.0
      %3941 = vmatpush1.msra.mxu0 %v3908
      %3942 = vmatprep.subr.mxu0 0.0
      %3943 = vmatpush1.msra.mxu0 %v3907
      %3944 = vmatprep.subr.mxu0 0.0
      %3945 = vmatpush1.msra.mxu0 %v3906
      %3946 = vmatprep.subr.mxu0 0.0
      %3947 = vmatpush1.msra.mxu0 %v3905
      %3948 = vmatprep.subr.mxu0 0.0
      %3949 = vmatpush1.msra.mxu0 %v3904
      %3950 = vmatprep.subr.mxu0 0.0
      %3951 = vmatpush1.msra.mxu0 %v3903
      %3952 = vmatprep.subr.mxu0 0.0
      %3953 = vmatpush1.msra.mxu0 %v3902
      %3954 = vmatprep.subr.mxu0 0.0
      %3955 = vmatpush1.msra.mxu0 %v3901
      %3956 = vmatprep.subr.mxu0 0.0
      %3957 = vmatpush2.msra.mxu0 0.0
      %3958 = vmatprep.subr.mxu0 0.0
      %3959 = vmatpush2.msra.mxu0 0.0
      %3960 = vmatprep.subr.mxu0 0.0
      %3961 = vmatpush2.msra.mxu0 0.0
      %3962 = vmatprep.subr.mxu0 0.0
      %3963 = vmatpush2.msra.mxu0 0.0
      %3964 = vmatprep.subr.mxu0 0.0
      %3965 = vmatpush2.msra.mxu0 0.0
      %3966 = vmatprep.subr.mxu0 0.0
      %3967 = vmatpush2.msra.mxu0 0.0
      %3968 = vmatprep.subr.mxu0 0.0
      %3969 = vmatpush2.msra.mxu0 0.0
      %3970 = vmatprep.subr.mxu0 0.0
      %3971 = vmatpush2.msra.mxu0 0.0
      %3972 = vmatprep.subr.mxu0 0.0
      %3973 = vmatpush2.msra.mxu0 0.0
      %3974 = vmatprep.subr.mxu0 0.0
      %3975 = vmatpush2.msra.mxu0 0.0
      %3976 = vmatprep.subr.mxu0 0.0
      %3977 = vmatpush2.msra.mxu0 0.0
      %3978 = vmatprep.subr.mxu0 0.0
      %3979 = vmatpush2.msra.mxu0 0.0
      %3980 = vmatprep.subr.mxu0 0.0
      %3981 = vmatpush2.msra.mxu0 0.0
      %3982 = vmatprep.subr.mxu0 0.0
      %3983 = vmatpush2.msra.mxu0 0.0
      %3984 = vmatprep.subr.mxu0 0.0
      %3985 = vmatpush2.msra.mxu0 0.0
      %3986 = vmatprep.subr.mxu0 0.0
      %3987 = vmatpush2.msra.mxu0 0.0
      %3988 = vmatprep.mubr.f32.mxu0 0.0
      %3989 = vmatmul.mubr.f32.gmra.mxu0 %v3869
      %v3990 = vpop.f32.mrf.mxu0
      %v3991 = vadd.f32 %v3922, %v3990
      %v3992 = vpop.f32.mrf.mxu0
      %3993 = vmatprep.mubr.f32.mxu0 0.0
      %3994 = vmatmul.mubr.f32.gmra.mxu0 %v3870
      %v3995 = vpop.f32.mrf.mxu0
      %v3996 = vadd.f32 %v3922, %v3995
      %v3997 = vpop.f32.mrf.mxu0
      %3998 = vmatprep.mubr.f32.mxu0 0.0
      %3999 = vmatmul.mubr.f32.gmra.mxu0 %v3871
      %v4000 = vpop.f32.mrf.mxu0
      %v4001 = vadd.f32 %v3922, %v4000
      %v4002 = vpop.f32.mrf.mxu0
      %4003 = vmatprep.mubr.f32.mxu0 0.0
      %4004 = vmatmul.mubr.f32.gmra.mxu0 %v3872
      %v4005 = vpop.f32.mrf.mxu0
      %v4006 = vadd.f32 %v3922, %v4005
      %v4007 = vpop.f32.mrf.mxu0
      %4008 = vmatprep.mubr.f32.mxu0 0.0
      %4009 = vmatmul.mubr.f32.gmra.mxu0 %v3873
      %v4010 = vpop.f32.mrf.mxu0
      %v4011 = vadd.f32 %v3922, %v4010
      %v4012 = vpop.f32.mrf.mxu0
      %4013 = vmatprep.mubr.f32.mxu0 0.0
      %4014 = vmatmul.mubr.f32.gmra.mxu0 %v3874
      %v4015 = vpop.f32.mrf.mxu0
      %v4016 = vadd.f32 %v3922, %v4015
      %v4017 = vpop.f32.mrf.mxu0
      %4018 = vmatprep.mubr.f32.mxu0 0.0
      %4019 = vmatmul.mubr.f32.gmra.mxu0 %v3875
      %v4020 = vpop.f32.mrf.mxu0
      %v4021 = vadd.f32 %v3922, %v4020
      %v4022 = vpop.f32.mrf.mxu0
      %4023 = vmatprep.mubr.f32.mxu0 0.0
      %4024 = vmatmul.mubr.f32.gmra.mxu0 %v3876
      %v4025 = vpop.f32.mrf.mxu0
      %v4026 = vadd.f32 %v3922, %v4025
      %v4027 = vpop.f32.mrf.mxu0
      %4028 = vmatprep.mubr.f32.mxu0 0.0
      %4029 = vmatmul.mubr.f32.gmra.mxu0 %v3877
      %v4030 = vpop.f32.mrf.mxu0
      %v4031 = vadd.f32 %v3922, %v4030
      %v4032 = vpop.f32.mrf.mxu0
      %4033 = vmatprep.mubr.f32.mxu0 0.0
      %4034 = vmatmul.mubr.f32.gmra.mxu0 %v3878
      %v4035 = vpop.f32.mrf.mxu0
      %v4036 = vadd.f32 %v3922, %v4035
      %v4037 = vpop.f32.mrf.mxu0
      %4038 = vmatprep.mubr.f32.mxu0 0.0
      %4039 = vmatmul.mubr.f32.gmra.mxu0 %v3879
      %v4040 = vpop.f32.mrf.mxu0
      %v4041 = vadd.f32 %v3922, %v4040
      %v4042 = vpop.f32.mrf.mxu0
      %4043 = vmatprep.mubr.f32.mxu0 0.0
      %4044 = vmatmul.mubr.f32.gmra.mxu0 %v3880
      %v4045 = vpop.f32.mrf.mxu0
      %v4046 = vadd.f32 %v3922, %v4045
      %v4047 = vpop.f32.mrf.mxu0
      %4048 = vmatprep.mubr.f32.mxu0 0.0
      %4049 = vmatmul.mubr.f32.gmra.mxu0 %v3881
      %v4050 = vpop.f32.mrf.mxu0
      %v4051 = vadd.f32 %v3922, %v4050
      %v4052 = vpop.f32.mrf.mxu0
      %4053 = vmatprep.mubr.f32.mxu0 0.0
      %4054 = vmatmul.mubr.f32.gmra.mxu0 %v3882
      %v4055 = vpop.f32.mrf.mxu0
      %v4056 = vadd.f32 %v3922, %v4055
      %v4057 = vpop.f32.mrf.mxu0
      %4058 = vmatprep.mubr.f32.mxu0 0.0
      %4059 = vmatmul.mubr.f32.gmra.mxu0 %v3883
      %v4060 = vpop.f32.mrf.mxu0
      %v4061 = vadd.f32 %v3922, %v4060
      %v4062 = vpop.f32.mrf.mxu0
      %4063 = vmatprep.mubr.f32.mxu0 0.0
      %4064 = vmatmul.mubr.f32.gmra.mxu0 %v3884
      %v4065 = vpop.f32.mrf.mxu0
      %v4066 = vadd.f32 %v3922, %v4065
      %v4067 = vpop.f32.mrf.mxu0
      %4068 = vmatprep.mubr.f32.mxu0 0.0
      %4069 = vmatmul.mubr.f32.gmra.mxu0 %v3885
      %v4070 = vpop.f32.mrf.mxu0
      %v4071 = vadd.f32 %v3922, %v4070
      %v4072 = vpop.f32.mrf.mxu0
      %4073 = vmatprep.mubr.f32.mxu0 0.0
      %4074 = vmatmul.mubr.f32.gmra.mxu0 %v3886
      %v4075 = vpop.f32.mrf.mxu0
      %v4076 = vadd.f32 %v3922, %v4075
      %v4077 = vpop.f32.mrf.mxu0
      %4078 = vmatprep.mubr.f32.mxu0 0.0
      %4079 = vmatmul.mubr.f32.gmra.mxu0 %v3887
      %v4080 = vpop.f32.mrf.mxu0
      %v4081 = vadd.f32 %v3922, %v4080
      %v4082 = vpop.f32.mrf.mxu0
      %4083 = vmatprep.mubr.f32.mxu0 0.0
      %4084 = vmatmul.mubr.f32.gmra.mxu0 %v3888
      %v4085 = vpop.f32.mrf.mxu0
      %v4086 = vadd.f32 %v3922, %v4085
      %v4087 = vpop.f32.mrf.mxu0
      %4088 = vmatprep.mubr.f32.mxu0 0.0
      %4089 = vmatmul.mubr.f32.gmra.mxu0 %v3889
      %v4090 = vpop.f32.mrf.mxu0
      %v4091 = vadd.f32 %v3922, %v4090
      %v4092 = vpop.f32.mrf.mxu0
      %4093 = vmatprep.mubr.f32.mxu0 0.0
      %4094 = vmatmul.mubr.f32.gmra.mxu0 %v3890
      %v4095 = vpop.f32.mrf.mxu0
      %v4096 = vadd.f32 %v3922, %v4095
      %v4097 = vpop.f32.mrf.mxu0
      %4098 = vmatprep.mubr.f32.mxu0 0.0
      %4099 = vmatmul.mubr.f32.gmra.mxu0 %v3891
      %v4100 = vpop.f32.mrf.mxu0
      %v4101 = vadd.f32 %v3922, %v4100
      %v4102 = vpop.f32.mrf.mxu0
      %4103 = vmatprep.mubr.f32.mxu0 0.0
      %4104 = vmatmul.mubr.f32.gmra.mxu0 %v3892
      %v4105 = vpop.f32.mrf.mxu0
      %v4106 = vadd.f32 %v3922, %v4105
      %v4107 = vpop.f32.mrf.mxu0
      %4108 = vmatprep.mubr.f32.mxu0 0.0
      %4109 = vmatmul.mubr.f32.gmra.mxu0 %v3893
      %v4110 = vpop.f32.mrf.mxu0
      %v4111 = vadd.f32 %v3922, %v4110
      %v4112 = vpop.f32.mrf.mxu0
      %4113 = vmatprep.mubr.f32.mxu0 0.0
      %4114 = vmatmul.mubr.f32.gmra.mxu0 %v3894
      %v4115 = vpop.f32.mrf.mxu0
      %v4116 = vadd.f32 %v3922, %v4115
      %v4117 = vpop.f32.mrf.mxu0
      %4118 = vmatprep.mubr.f32.mxu0 0.0
      %4119 = vmatmul.mubr.f32.gmra.mxu0 %v3895
      %v4120 = vpop.f32.mrf.mxu0
      %v4121 = vadd.f32 %v3922, %v4120
      %v4122 = vpop.f32.mrf.mxu0
      %4123 = vmatprep.mubr.f32.mxu0 0.0
      %4124 = vmatmul.mubr.f32.gmra.mxu0 %v3896
      %v4125 = vpop.f32.mrf.mxu0
      %v4126 = vadd.f32 %v3922, %v4125
      %v4127 = vpop.f32.mrf.mxu0
      %4128 = vmatprep.mubr.f32.mxu0 0.0
      %4129 = vmatmul.mubr.f32.gmra.mxu0 %v3897
      %v4130 = vpop.f32.mrf.mxu0
      %v4131 = vadd.f32 %v3922, %v4130
      %v4132 = vpop.f32.mrf.mxu0
      %4133 = vmatprep.mubr.f32.mxu0 0.0
      %4134 = vmatmul.mubr.f32.gmra.mxu0 %v3898
      %v4135 = vpop.f32.mrf.mxu0
      %v4136 = vadd.f32 %v3922, %v4135
      %v4137 = vpop.f32.mrf.mxu0
      %4138 = vmatprep.mubr.f32.mxu0 0.0
      %4139 = vmatmul.mubr.f32.gmra.mxu0 %v3899
      %v4140 = vpop.f32.mrf.mxu0
      %v4141 = vadd.f32 %v3922, %v4140
      %v4142 = vpop.f32.mrf.mxu0
      %4143 = vmatprep.mubr.f32.mxu0 0.0
      %4144 = vmatmul.mubr.f32.gmra.mxu0 %v3900
      %v4145 = vpop.f32.mrf.mxu0
      %v4146 = vadd.f32 %v3922, %v4145
      %v4147 = vpop.f32.mrf.mxu0
      %4148 = vdwg.mxu0
      %v4149 = vmax.f32 %v3991, 0.0
      %v4150 = vmax.f32 %v3996, 0.0
      %v4151 = vmax.f32 %v4001, 0.0
      %v4152 = vmax.f32 %v4006, 0.0
      %v4153 = vmax.f32 %v4011, 0.0
      %v4154 = vmax.f32 %v4016, 0.0
      %v4155 = vmax.f32 %v4021, 0.0
      %v4156 = vmax.f32 %v4026, 0.0
      %v4157 = vmax.f32 %v4031, 0.0
      %v4158 = vmax.f32 %v4036, 0.0
      %v4159 = vmax.f32 %v4041, 0.0
      %v4160 = vmax.f32 %v4046, 0.0
      %v4161 = vmax.f32 %v4051, 0.0
      %v4162 = vmax.f32 %v4056, 0.0
      %v4163 = vmax.f32 %v4061, 0.0
      %v4164 = vmax.f32 %v4066, 0.0
      %v4165 = vmax.f32 %v4071, 0.0
      %v4166 = vmax.f32 %v4076, 0.0
      %v4167 = vmax.f32 %v4081, 0.0
      %v4168 = vmax.f32 %v4086, 0.0
      %v4169 = vmax.f32 %v4091, 0.0
      %v4170 = vmax.f32 %v4096, 0.0
      %v4171 = vmax.f32 %v4101, 0.0
      %v4172 = vmax.f32 %v4106, 0.0
      %v4173 = vmax.f32 %v4111, 0.0
      %v4174 = vmax.f32 %v4116, 0.0
      %v4175 = vmax.f32 %v4121, 0.0
      %v4176 = vmax.f32 %v4126, 0.0
      %v4177 = vmax.f32 %v4131, 0.0
      %v4178 = vmax.f32 %v4136, 0.0
      %v4179 = vmax.f32 %v4141, 0.0
      %v4180 = vmax.f32 %v4146, 0.0
      %4181 = vst.msk [vmem:[%s224] sm:$0xff] %vm1677, %v4149
      %4182 = vst.msk [vmem:[%s224 + $0x8] sm:$0xff] %vm1677, %v4150
      %4183 = vst.msk [vmem:[%s224 + $0x10] sm:$0xff] %vm1677, %v4151
      %4184 = vst.msk [vmem:[%s224 + $0x18] sm:$0xff] %vm1677, %v4152
      %4185 = vst.msk [vmem:[%s224 + $0x20] sm:$0xff] %vm1677, %v4153
      %4186 = vst.msk [vmem:[%s224 + $0x28] sm:$0xff] %vm1677, %v4154
      %4187 = vst.msk [vmem:[%s224 + $0x30] sm:$0xff] %vm1677, %v4155
      %4188 = vst.msk [vmem:[%s224 + $0x38] sm:$0xff] %vm1677, %v4156
      %4189 = vst.msk [vmem:[%s224 + $0x40] sm:$0xff] %vm1677, %v4157
      %4190 = vst.msk [vmem:[%s224 + $0x48] sm:$0xff] %vm1677, %v4158
      %4191 = vst.msk [vmem:[%s224 + $0x50] sm:$0xff] %vm1677, %v4159
      %4192 = vst.msk [vmem:[%s224 + $0x58] sm:$0xff] %vm1677, %v4160
      %4193 = vst.msk [vmem:[%s224 + $0x60] sm:$0xff] %vm1677, %v4161
      %4194 = vst.msk [vmem:[%s224 + $0x68] sm:$0xff] %vm1677, %v4162
      %4195 = vst.msk [vmem:[%s224 + $0x70] sm:$0xff] %vm1677, %v4163
      %4196 = vst.msk [vmem:[%s224 + $0x78] sm:$0xff] %vm1677, %v4164
      %4197 = vst.msk [vmem:[%s224 + $0x80] sm:$0xff] %vm1677, %v4165
      %4198 = vst.msk [vmem:[%s224 + $0x88] sm:$0xff] %vm1677, %v4166
      %4199 = vst.msk [vmem:[%s224 + $0x90] sm:$0xff] %vm1677, %v4167
      %4200 = vst.msk [vmem:[%s224 + $0x98] sm:$0xff] %vm1677, %v4168
      %4201 = vst.msk [vmem:[%s224 + $0xa0] sm:$0xff] %vm1677, %v4169
      %4202 = vst.msk [vmem:[%s224 + $0xa8] sm:$0xff] %vm1677, %v4170
      %4203 = vst.msk [vmem:[%s224 + $0xb0] sm:$0xff] %vm1677, %v4171
      %4204 = vst.msk [vmem:[%s224 + $0xb8] sm:$0xff] %vm1677, %v4172
      %4205 = vst.msk [vmem:[%s224 + $0xc0] sm:$0xff] %vm1677, %v4173
      %4206 = vst.msk [vmem:[%s224 + $0xc8] sm:$0xff] %vm1677, %v4174
      %4207 = vst.msk [vmem:[%s224 + $0xd0] sm:$0xff] %vm1677, %v4175
      %4208 = vst.msk [vmem:[%s224 + $0xd8] sm:$0xff] %vm1677, %v4176
      %4209 = vst.msk [vmem:[%s224 + $0xe0] sm:$0xff] %vm1677, %v4177
      %4210 = vst.msk [vmem:[%s224 + $0xe8] sm:$0xff] %vm1677, %v4178
      %4211 = vst.msk [vmem:[%s224 + $0xf0] sm:$0xff] %vm1677, %v4179
      %4212 = vst.msk [vmem:[%s224 + $0xf8] sm:$0xff] %vm1677, %v4180
      %p4213 = scmp.lt.s32.totalorder %s16, 1
      %s4214 = scalar_select %p4213, %s16, 1
      %s4215 = smul.addr %s4214, 32
      %s4216 = smul.addr %s4215, 8
      %s4217 = scalar_lea.vmem %s5, %s4216
      // Predicated region
      $region41: #{tpu_custom_call.1} parent=39 // pred_check
        %p4218 = pneg %p144
      $region42: #{tpu_custom_call.1} parent=39 // pred_check_branch
        %4220 = sbr.rel (%p4218) target = $region44
      $region43: #{tpu_custom_call.1} parent=39 // pred_region
        _
      $region44: #{tpu_custom_call.1} parent=39 // pred_fallthru
        _
    $region40: #{tpu_custom_call.1} parent=5 // pred_fallthru
      _
    %p4221 = scmp.le.s32.totalorder 2, %s11
    // Predicated region
    $region45: #{tpu_custom_call.1} parent=5 // pred_check
      %p4222 = pneg %p4221
    $region46: #{tpu_custom_call.1} parent=5 // pred_check_branch
      %4224 = sbr.rel (%p4222) target = $region48
    $region47: #{tpu_custom_call.1} parent=5 // pred_region
      %s4225 = ssub.s32 %s11, 2
      // Predicated region
      $region49: #{tpu_custom_call.1} parent=47 // pred_check
        %p4226 = pneg %p150
      $region50: #{tpu_custom_call.1} parent=47 // pred_check_branch
        %4228 = sbr.rel (%p4226) target = $region52
      $region51: #{tpu_custom_call.1} parent=47 // pred_region
        %p4229 = scmp.lt.s32.totalorder %s17, 1
        %s4230 = scalar_select %p4229, %s17, 1
        %s4231 = smul.addr %s4230, 32
        %s4232 = smul.addr %s4231, 8
        %s4233 = scalar_lea.vmem %s5, %s4232
      $region52: #{tpu_custom_call.1} parent=47 // pred_fallthru
        _
    $region48: #{tpu_custom_call.1} parent=5 // pred_fallthru
      _
  $region6: #{tpu_custom_call.1} parent=0 // loop_footer
    %s15 = sadd.s32 1, %s11
  $region7: #{tpu_custom_call.1} parent=0 // loop_footer_branch
    %10 = sbr.rel target = $region3
  $region8: #{tpu_custom_call.1} parent=0 // loop_exit
    _

</llo_original>
